<compile_context>
chip_gen: v5e
topology: v5e:2x2
jax: 0.10.0
libtpu: 0.0.40
codegen_flags: <defaults>
</compile_context>

<pallas_src>
import functools

import jax
import jax.numpy as jnp
from jax.experimental import pallas as pl
from jax.experimental.pallas import tpu as pltpu

BN_EPS = 1e-5  # PyTorch BatchNorm2d default eps

# 3x3 taps in PyTorch weight order (kh-major, kw-minor); dh = kh - 1, dw = kw - 1.
_TAPS = tuple((dh, dw) for dh in (-1, 0, 1) for dw in (-1, 0, 1))


# ---------------------------------------------------------------------------
# Fused whole-network kernel
# ---------------------------------------------------------------------------
def _make_net_kernel(n_layers, batch, height, width, n_scales):
    """Build the fused kernel.

    refs (inputs then output):
      nalpha_ref   : (L*S,)          SMEM  softmax(alpha) per layer, flattened
      x_ref        : (Cin0, N)       VMEM  input, channel-major lane-dense
      w_refs[l]    : (Cout_l,9Cin_l) VMEM  conv weights (transposed im2col layout)
      mask_refs[r] : (9, N_r)        VMEM  conv-tap boundary masks per scale
      pool_refs[r] : (N_r, N_{r+1})  VMEM  one-hot 2x2-maxpool selection matrices
      up_ref       : (sum N_1.., N)  VMEM  stacked one-hot nearest-upsample matrix
      gap_ref      : (N, B)          VMEM  per-image averaging matrix
      o_ref        : (ncat, B)       VMEM  pooled class scores (transposed)
    """
    dims = [(height >> r, width >> r) for r in range(n_scales)]
    seg_n = [batch * h * w for (h, w) in dims]

    def kernel(*refs):
        nalpha_ref = refs[0]
        x_ref = refs[1]
        w_refs = refs[2:2 + n_layers]
        mask_refs = refs[2 + n_layers:2 + n_layers + n_scales]
        pool_refs = refs[2 + n_layers + n_scales:2 + n_layers + 2 * n_scales - 1]
        up_ref = refs[2 + n_layers + 2 * n_scales - 1]
        gap_ref = refs[2 + n_layers + 2 * n_scales]
        o_ref = refs[-1]

        x = x_ref[...]                                       # (Cin_l, N) f32
        for l in range(n_layers):
            w = w_refs[l][...]                               # (Cout, 9*Cin)

            # ---- multi-resolution pyramid: in-kernel 2x2 maxpool cascade ----
            pyr = [x]
            for r in range(1, n_scales):
                w_src = dims[r - 1][1]
                prev = pyr[-1]
                hmax = jnp.maximum(prev, jnp.roll(prev, -1, axis=-1))
                vmax = jnp.maximum(hmax, jnp.roll(hmax, -w_src, axis=-1))
                # one-hot selection of the top-left lane of every 2x2 block
                pyr.append(jnp.dot(vmax, pool_refs[r - 1][...],
                                   preferred_element_type=jnp.float32))

            # ---- in-kernel 3x3 / pad 1 im2col: lane rolls + boundary masks --
            scale_patches = []
            for r in range(n_scales):
                w_r = dims[r][1]
                mask = mask_refs[r][...]                     # (9, N_r)
                taps = []
                for t, (dh, dw) in enumerate(_TAPS):
                    shift = dh * w_r + dw
                    src = jnp.roll(pyr[r], -shift, axis=-1) if shift else pyr[r]
                    taps.append(src * mask[t:t + 1, :])
                scale_patches.append(jnp.concatenate(taps, axis=0))  # (9Cin, N_r)
            patches = jnp.concatenate(scale_patches, axis=-1)        # (9Cin, sumN)

            # ---- shared-weight conv over ALL scales: ONE MXU matmul + ReLU --
            y = jnp.dot(w, patches, preferred_element_type=jnp.float32)
            y = jnp.maximum(y, 0.0)

            # ---- per-scale BatchNorm (train stats, affine=False), one-pass,
            #      softmax(alpha)[r] folded into the BN scale ------------------
            segs = []
            off = 0
            for r in range(n_scales):
                n_r = seg_n[r]
                y_r = y[:, off:off + n_r]                    # true N_r elements
                mean = jnp.mean(y_r, axis=1, keepdims=True)
                var = jnp.mean(y_r * y_r, axis=1, keepdims=True) - mean * mean
                scale = nalpha_ref[l * n_scales + r] * jax.lax.rsqrt(var + BN_EPS)
                segs.append(y_r * scale - mean * scale)
                off += n_r

            # ---- nearest-upsample + alpha-sum: ONE matmul against the stacked
            #      one-hot upsample matrix, added to the full-res segment ------
            coarse = jnp.concatenate(segs[1:], axis=-1)      # (Cout, N_1+..+N_{S-1})
            x = segs[0] + jnp.dot(coarse, up_ref[...],
                                  preferred_element_type=jnp.float32)

        # ---- global average pool epilogue: (ncat, N) @ (N, B) -> (ncat, B) ----
        o_ref[...] = jnp.dot(x, gap_ref[...], preferred_element_type=jnp.float32)

    return kernel


# ---------------------------------------------------------------------------
# Shape-only constant matrices (constant-folded under jit; < 1 MiB total)
# ---------------------------------------------------------------------------
def _tap_masks(b, h, w):
    """(9, b*h*w) {0,1}: 1 where the (dh,dw) conv tap source is inside the image."""
    ii = jnp.arange(h * w) // w
    jj = jnp.arange(h * w) % w
    rows = []
    for dh, dw in _TAPS:
        ok = (ii + dh >= 0) & (ii + dh < h) & (jj + dw >= 0) & (jj + dw < w)
        rows.append(jnp.tile(ok, (b,)))
    return jnp.stack(rows, axis=0).astype(jnp.float32)


def _pool_select_matrix(b, h, w):
    """One-hot (b*h*w, b*(h//2)*(w//2)): column (b,i,j) picks row (b,2i,2j)."""
    hr, wr = h // 2, w // 2
    q = jnp.arange(b * hr * wr)
    bq, rq = q // (hr * wr), q % (hr * wr)
    src = bq * (h * w) + (rq // wr) * 2 * w + (rq % wr) * 2
    return (jnp.arange(b * h * w)[:, None] == src[None, :]).astype(jnp.float32)


def _nearest_upsample_matrix(b, h, w, r):
    """One-hot (b*Hr*Wr, b*h*w): y_full = y_coarse @ U (nearest, factor 2**r)."""
    f = 2 ** r
    hr, wr = h // f, w // f
    p = jnp.arange(b * h * w)
    bp, rp = p // (h * w), p % (h * w)
    src = bp * (hr * wr) + (rp // w // f) * wr + (rp % w) // f
    return (jnp.arange(b * hr * wr)[:, None] == src[None, :]).astype(jnp.float32)


def _gap_matrix(b, h, w):
    """(b*h*w, b) per-image averaging matrix (global average pool as a matmul)."""
    p = jnp.arange(b * h * w)
    sel = (p[:, None] // (h * w) == jnp.arange(b)[None, :]).astype(jnp.float32)
    return sel / float(h * w)


# ---------------------------------------------------------------------------
# Host wrapper
# ---------------------------------------------------------------------------
def multires_forward(x_nchw, params, max_scales):
    """multires_model.forward: (B, 3, H, W) -> (B, ncat), one fused Pallas kernel."""
    x = x_nchw.astype(jnp.float32)
    b, cin0, h, w = x.shape
    n = b * h * w
    n_layers = len(params)

    # channel-major lane-dense layout: N = B*H*W (multiple of 128) on lanes
    x_t = jnp.transpose(x, (1, 0, 2, 3)).reshape(cin0, n)

    # weights -> (Cout, 9*Cin) in im2col order; softmax(alpha) flattened for SMEM
    w2t, nalpha = [], []
    for wgt, alpha in params:
        kh, kw, ci, co = wgt.shape
        w2t.append(wgt.reshape(kh * kw * ci, co).T)
        nalpha.append(jax.nn.softmax(alpha))
    nalpha = jnp.concatenate(nalpha)                         # (L*S,)
    ncat = w2t[-1].shape[0]

    dims = [(h >> r, w >> r) for r in range(max_scales)]
    tap_masks = [_tap_masks(b, hh, ww) for hh, ww in dims]
    pool_mats = [_pool_select_matrix(b, hh, ww) for hh, ww in dims[:-1]]
    up_comb = jnp.concatenate(
        [_nearest_upsample_matrix(b, h, w, r) for r in range(1, max_scales)], axis=0)
    gap_mat = _gap_matrix(b, h, w)

    n_vmem_in = 1 + n_layers + max_scales + (max_scales - 1) + 2
    pooled = pl.pallas_call(
        _make_net_kernel(n_layers, b, h, w, max_scales),
        out_shape=jax.ShapeDtypeStruct((ncat, b), jnp.float32),
        in_specs=[pl.BlockSpec(memory_space=pltpu.MemorySpace.SMEM)]
        + [pl.BlockSpec(memory_space=pltpu.MemorySpace.VMEM)] * n_vmem_in,
        out_specs=pl.BlockSpec(memory_space=pltpu.MemorySpace.VMEM),
    )(nalpha, x_t, *w2t, *tap_masks, *pool_mats, up_comb, gap_mat)
    return pooled.T                                          # (B, ncat)


def init_params(key, channels, ncat, leng, max_scales):
    """Synthetic init: conv weights (3,3,Cin,Cout) HWIO (no bias), alpha = ones."""
    dims = [3] + channels + [ncat]
    assert len(dims) == leng + 1
    params = []
    for i in range(leng):
        key, sub = jax.random.split(key)
        cin, cout = dims[i], dims[i + 1]
        scale = 1.0 / jnp.sqrt(jnp.float32(9 * cin))
        wgt = scale * jax.random.normal(sub, (3, 3, cin, cout), dtype=jnp.float32)
        alpha = jnp.ones((max_scales,), dtype=jnp.float32)
        params.append((wgt, alpha))
    return params


if __name__ == "__main__":
    # multires_model(ncat=10, channels="8,8", leng=3, max_scales=4) on (2,3,16,16)
    ncat, leng, max_scales = 10, 3, 4
    channels = [8, 8]                      # string_to_list("8,8")
    batch, height, width = 2, 16, 16

    key = jax.random.PRNGKey(0)
    key, kx = jax.random.split(key)
    x = jax.random.normal(kx, (batch, 3, height, width), dtype=jnp.float32)
    params = init_params(key, channels, ncat, leng, max_scales)

    fwd = jax.jit(functools.partial(multires_forward, max_scales=max_scales))
    out = jax.block_until_ready(fwd(x, params))

    assert out.shape == (batch, ncat), out.shape
    assert bool(jnp.all(jnp.isfinite(out)))
    print("KERNEL_OK")
</pallas_src>

<mosaic_0001>
module attributes {stable_mosaic.version = 11 : i64} {
  func.func @kernel(%arg0: memref<12xf32, #tpu.memory_space<smem>>, %arg1: memref<3x512xf32, #tpu.memory_space<vmem>>, %arg2: memref<8x27xf32, #tpu.memory_space<vmem>>, %arg3: memref<8x72xf32, #tpu.memory_space<vmem>>, %arg4: memref<10x72xf32, #tpu.memory_space<vmem>>, %arg5: memref<9x512xf32, #tpu.memory_space<vmem>>, %arg6: memref<9x128xf32, #tpu.memory_space<vmem>>, %arg7: memref<9x32xf32, #tpu.memory_space<vmem>>, %arg8: memref<9x8xf32, #tpu.memory_space<vmem>>, %arg9: memref<512x128xf32, #tpu.memory_space<vmem>>, %arg10: memref<128x32xf32, #tpu.memory_space<vmem>>, %arg11: memref<32x8xf32, #tpu.memory_space<vmem>>, %arg12: memref<168x512xf32, #tpu.memory_space<vmem>>, %arg13: memref<512x2xf32, #tpu.memory_space<vmem>>, %arg14: memref<10x2xf32, #tpu.memory_space<vmem>>) attributes {dimension_semantics = [], scalar_prefetch = 0 : i64, scratch_operands = 0 : i64, tpu.core_type = #tpu.core_type<tc>} {
    %c0 = arith.constant 0 : index
    %c0_0 = arith.constant 0 : index
    %0 = vector.load %arg1[%c0, %c0_0] : memref<3x512xf32, #tpu.memory_space<vmem>>, vector<3x512xf32>
    %c0_1 = arith.constant 0 : index
    %c0_2 = arith.constant 0 : index
    %1 = vector.load %arg2[%c0_1, %c0_2] : memref<8x27xf32, #tpu.memory_space<vmem>>, vector<8x27xf32>
    %2 = vector.extract_strided_slice %0 {offsets = [0, 1], sizes = [3, 511], strides = [1, 1]} : vector<3x512xf32> to vector<3x511xf32>
    %3 = vector.extract_strided_slice %0 {offsets = [0, 0], sizes = [3, 1], strides = [1, 1]} : vector<3x512xf32> to vector<3x1xf32>
    %4 = tpu.concatenate %2, %3 in 1 : vector<3x511xf32>, vector<3x1xf32> -> vector<3x512xf32>
    %5 = arith.maximumf %0, %4 : vector<3x512xf32>
    %6 = vector.extract_strided_slice %5 {offsets = [0, 16], sizes = [3, 496], strides = [1, 1]} : vector<3x512xf32> to vector<3x496xf32>
    %7 = vector.extract_strided_slice %5 {offsets = [0, 0], sizes = [3, 16], strides = [1, 1]} : vector<3x512xf32> to vector<3x16xf32>
    %8 = tpu.concatenate %6, %7 in 1 : vector<3x496xf32>, vector<3x16xf32> -> vector<3x512xf32>
    %9 = arith.maximumf %5, %8 : vector<3x512xf32>
    %c0_3 = arith.constant 0 : index
    %c0_4 = arith.constant 0 : index
    %10 = vector.load %arg9[%c0_3, %c0_4] : memref<512x128xf32, #tpu.memory_space<vmem>>, vector<512x128xf32>
    %cst = arith.constant dense<0.000000e+00> : vector<3x128xf32>
    %11 = tpu.matmul %9, %10, %cst {dimension_numbers = #tpu.dot_dimension_numbers<[1], [0], [0], [1], [0, 0, 1, 1], [], []>} : vector<3x512xf32>, vector<512x128xf32>, vector<3x128xf32> -> vector<3x128xf32>
    %12 = vector.extract_strided_slice %11 {offsets = [0, 1], sizes = [3, 127], strides = [1, 1]} : vector<3x128xf32> to vector<3x127xf32>
    %13 = vector.extract_strided_slice %11 {offsets = [0, 0], sizes = [3, 1], strides = [1, 1]} : vector<3x128xf32> to vector<3x1xf32>
    %14 = tpu.concatenate %12, %13 in 1 : vector<3x127xf32>, vector<3x1xf32> -> vector<3x128xf32>
    %15 = arith.maximumf %11, %14 : vector<3x128xf32>
    %16 = vector.extract_strided_slice %15 {offsets = [0, 8], sizes = [3, 120], strides = [1, 1]} : vector<3x128xf32> to vector<3x120xf32>
    %17 = vector.extract_strided_slice %15 {offsets = [0, 0], sizes = [3, 8], strides = [1, 1]} : vector<3x128xf32> to vector<3x8xf32>
    %18 = tpu.concatenate %16, %17 in 1 : vector<3x120xf32>, vector<3x8xf32> -> vector<3x128xf32>
    %19 = arith.maximumf %15, %18 : vector<3x128xf32>
    %c0_5 = arith.constant 0 : index
    %c0_6 = arith.constant 0 : index
    %20 = vector.load %arg10[%c0_5, %c0_6] : memref<128x32xf32, #tpu.memory_space<vmem>>, vector<128x32xf32>
    %cst_7 = arith.constant dense<0.000000e+00> : vector<3x32xf32>
    %21 = tpu.matmul %19, %20, %cst_7 {dimension_numbers = #tpu.dot_dimension_numbers<[1], [0], [0], [1], [0, 0, 1, 1], [], []>} : vector<3x128xf32>, vector<128x32xf32>, vector<3x32xf32> -> vector<3x32xf32>
    %22 = vector.extract_strided_slice %21 {offsets = [0, 1], sizes = [3, 31], strides = [1, 1]} : vector<3x32xf32> to vector<3x31xf32>
    %23 = vector.extract_strided_slice %21 {offsets = [0, 0], sizes = [3, 1], strides = [1, 1]} : vector<3x32xf32> to vector<3x1xf32>
    %24 = tpu.concatenate %22, %23 in 1 : vector<3x31xf32>, vector<3x1xf32> -> vector<3x32xf32>
    %25 = arith.maximumf %21, %24 : vector<3x32xf32>
    %26 = vector.extract_strided_slice %25 {offsets = [0, 4], sizes = [3, 28], strides = [1, 1]} : vector<3x32xf32> to vector<3x28xf32>
    %27 = vector.extract_strided_slice %25 {offsets = [0, 0], sizes = [3, 4], strides = [1, 1]} : vector<3x32xf32> to vector<3x4xf32>
    %28 = tpu.concatenate %26, %27 in 1 : vector<3x28xf32>, vector<3x4xf32> -> vector<3x32xf32>
    %29 = arith.maximumf %25, %28 : vector<3x32xf32>
    %c0_8 = arith.constant 0 : index
    %c0_9 = arith.constant 0 : index
    %30 = vector.load %arg11[%c0_8, %c0_9] : memref<32x8xf32, #tpu.memory_space<vmem>>, vector<32x8xf32>
    %cst_10 = arith.constant dense<0.000000e+00> : vector<3x8xf32>
    %31 = tpu.matmul %29, %30, %cst_10 {dimension_numbers = #tpu.dot_dimension_numbers<[1], [0], [0], [1], [0, 0, 1, 1], [], []>} : vector<3x32xf32>, vector<32x8xf32>, vector<3x8xf32> -> vector<3x8xf32>
    %c0_11 = arith.constant 0 : index
    %c0_12 = arith.constant 0 : index
    %32 = vector.load %arg5[%c0_11, %c0_12] : memref<9x512xf32, #tpu.memory_space<vmem>>, vector<9x512xf32>
    %33 = vector.extract_strided_slice %0 {offsets = [0, 495], sizes = [3, 17], strides = [1, 1]} : vector<3x512xf32> to vector<3x17xf32>
    %34 = vector.extract_strided_slice %0 {offsets = [0, 0], sizes = [3, 495], strides = [1, 1]} : vector<3x512xf32> to vector<3x495xf32>
    %35 = tpu.concatenate %33, %34 in 1 : vector<3x17xf32>, vector<3x495xf32> -> vector<3x512xf32>
    %36 = vector.extract_strided_slice %32 {offsets = [0, 0], sizes = [1, 512], strides = [1, 1]} : vector<9x512xf32> to vector<1x512xf32>
    %37 = vector.broadcast %36 : vector<1x512xf32> to vector<3x512xf32>
    %38 = arith.mulf %35, %37 : vector<3x512xf32>
    %39 = vector.extract_strided_slice %0 {offsets = [0, 496], sizes = [3, 16], strides = [1, 1]} : vector<3x512xf32> to vector<3x16xf32>
    %40 = vector.extract_strided_slice %0 {offsets = [0, 0], sizes = [3, 496], strides = [1, 1]} : vector<3x512xf32> to vector<3x496xf32>
    %41 = tpu.concatenate %39, %40 in 1 : vector<3x16xf32>, vector<3x496xf32> -> vector<3x512xf32>
    %42 = vector.extract_strided_slice %32 {offsets = [1, 0], sizes = [1, 512], strides = [1, 1]} : vector<9x512xf32> to vector<1x512xf32>
    %43 = vector.broadcast %42 : vector<1x512xf32> to vector<3x512xf32>
    %44 = arith.mulf %41, %43 : vector<3x512xf32>
    %45 = vector.extract_strided_slice %0 {offsets = [0, 497], sizes = [3, 15], strides = [1, 1]} : vector<3x512xf32> to vector<3x15xf32>
    %46 = vector.extract_strided_slice %0 {offsets = [0, 0], sizes = [3, 497], strides = [1, 1]} : vector<3x512xf32> to vector<3x497xf32>
    %47 = tpu.concatenate %45, %46 in 1 : vector<3x15xf32>, vector<3x497xf32> -> vector<3x512xf32>
    %48 = vector.extract_strided_slice %32 {offsets = [2, 0], sizes = [1, 512], strides = [1, 1]} : vector<9x512xf32> to vector<1x512xf32>
    %49 = vector.broadcast %48 : vector<1x512xf32> to vector<3x512xf32>
    %50 = arith.mulf %47, %49 : vector<3x512xf32>
    %51 = vector.extract_strided_slice %0 {offsets = [0, 511], sizes = [3, 1], strides = [1, 1]} : vector<3x512xf32> to vector<3x1xf32>
    %52 = vector.extract_strided_slice %0 {offsets = [0, 0], sizes = [3, 511], strides = [1, 1]} : vector<3x512xf32> to vector<3x511xf32>
    %53 = tpu.concatenate %51, %52 in 1 : vector<3x1xf32>, vector<3x511xf32> -> vector<3x512xf32>
    %54 = vector.extract_strided_slice %32 {offsets = [3, 0], sizes = [1, 512], strides = [1, 1]} : vector<9x512xf32> to vector<1x512xf32>
    %55 = vector.broadcast %54 : vector<1x512xf32> to vector<3x512xf32>
    %56 = arith.mulf %53, %55 : vector<3x512xf32>
    %57 = vector.extract_strided_slice %32 {offsets = [4, 0], sizes = [1, 512], strides = [1, 1]} : vector<9x512xf32> to vector<1x512xf32>
    %58 = vector.broadcast %57 : vector<1x512xf32> to vector<3x512xf32>
    %59 = arith.mulf %0, %58 : vector<3x512xf32>
    %60 = vector.extract_strided_slice %0 {offsets = [0, 1], sizes = [3, 511], strides = [1, 1]} : vector<3x512xf32> to vector<3x511xf32>
    %61 = vector.extract_strided_slice %0 {offsets = [0, 0], sizes = [3, 1], strides = [1, 1]} : vector<3x512xf32> to vector<3x1xf32>
    %62 = tpu.concatenate %60, %61 in 1 : vector<3x511xf32>, vector<3x1xf32> -> vector<3x512xf32>
    %63 = vector.extract_strided_slice %32 {offsets = [5, 0], sizes = [1, 512], strides = [1, 1]} : vector<9x512xf32> to vector<1x512xf32>
    %64 = vector.broadcast %63 : vector<1x512xf32> to vector<3x512xf32>
    %65 = arith.mulf %62, %64 : vector<3x512xf32>
    %66 = vector.extract_strided_slice %0 {offsets = [0, 15], sizes = [3, 497], strides = [1, 1]} : vector<3x512xf32> to vector<3x497xf32>
    %67 = vector.extract_strided_slice %0 {offsets = [0, 0], sizes = [3, 15], strides = [1, 1]} : vector<3x512xf32> to vector<3x15xf32>
    %68 = tpu.concatenate %66, %67 in 1 : vector<3x497xf32>, vector<3x15xf32> -> vector<3x512xf32>
    %69 = vector.extract_strided_slice %32 {offsets = [6, 0], sizes = [1, 512], strides = [1, 1]} : vector<9x512xf32> to vector<1x512xf32>
    %70 = vector.broadcast %69 : vector<1x512xf32> to vector<3x512xf32>
    %71 = arith.mulf %68, %70 : vector<3x512xf32>
    %72 = vector.extract_strided_slice %0 {offsets = [0, 16], sizes = [3, 496], strides = [1, 1]} : vector<3x512xf32> to vector<3x496xf32>
    %73 = vector.extract_strided_slice %0 {offsets = [0, 0], sizes = [3, 16], strides = [1, 1]} : vector<3x512xf32> to vector<3x16xf32>
    %74 = tpu.concatenate %72, %73 in 1 : vector<3x496xf32>, vector<3x16xf32> -> vector<3x512xf32>
    %75 = vector.extract_strided_slice %32 {offsets = [7, 0], sizes = [1, 512], strides = [1, 1]} : vector<9x512xf32> to vector<1x512xf32>
    %76 = vector.broadcast %75 : vector<1x512xf32> to vector<3x512xf32>
    %77 = arith.mulf %74, %76 : vector<3x512xf32>
    %78 = vector.extract_strided_slice %0 {offsets = [0, 17], sizes = [3, 495], strides = [1, 1]} : vector<3x512xf32> to vector<3x495xf32>
    %79 = vector.extract_strided_slice %0 {offsets = [0, 0], sizes = [3, 17], strides = [1, 1]} : vector<3x512xf32> to vector<3x17xf32>
    %80 = tpu.concatenate %78, %79 in 1 : vector<3x495xf32>, vector<3x17xf32> -> vector<3x512xf32>
    %81 = vector.extract_strided_slice %32 {offsets = [8, 0], sizes = [1, 512], strides = [1, 1]} : vector<9x512xf32> to vector<1x512xf32>
    %82 = vector.broadcast %81 : vector<1x512xf32> to vector<3x512xf32>
    %83 = arith.mulf %80, %82 : vector<3x512xf32>
    %84 = tpu.concatenate %38, %44, %50, %56, %59, %65, %71, %77, %83 in 0 : vector<3x512xf32>, vector<3x512xf32>, vector<3x512xf32>, vector<3x512xf32>, vector<3x512xf32>, vector<3x512xf32>, vector<3x512xf32>, vector<3x512xf32>, vector<3x512xf32> -> vector<27x512xf32>
    %c0_13 = arith.constant 0 : index
    %c0_14 = arith.constant 0 : index
    %85 = vector.load %arg6[%c0_13, %c0_14] : memref<9x128xf32, #tpu.memory_space<vmem>>, vector<9x128xf32>
    %86 = vector.extract_strided_slice %11 {offsets = [0, 119], sizes = [3, 9], strides = [1, 1]} : vector<3x128xf32> to vector<3x9xf32>
    %87 = vector.extract_strided_slice %11 {offsets = [0, 0], sizes = [3, 119], strides = [1, 1]} : vector<3x128xf32> to vector<3x119xf32>
    %88 = tpu.concatenate %86, %87 in 1 : vector<3x9xf32>, vector<3x119xf32> -> vector<3x128xf32>
    %89 = vector.extract_strided_slice %85 {offsets = [0, 0], sizes = [1, 128], strides = [1, 1]} : vector<9x128xf32> to vector<1x128xf32>
    %90 = vector.broadcast %89 : vector<1x128xf32> to vector<3x128xf32>
    %91 = arith.mulf %88, %90 : vector<3x128xf32>
    %92 = vector.extract_strided_slice %11 {offsets = [0, 120], sizes = [3, 8], strides = [1, 1]} : vector<3x128xf32> to vector<3x8xf32>
    %93 = vector.extract_strided_slice %11 {offsets = [0, 0], sizes = [3, 120], strides = [1, 1]} : vector<3x128xf32> to vector<3x120xf32>
    %94 = tpu.concatenate %92, %93 in 1 : vector<3x8xf32>, vector<3x120xf32> -> vector<3x128xf32>
    %95 = vector.extract_strided_slice %85 {offsets = [1, 0], sizes = [1, 128], strides = [1, 1]} : vector<9x128xf32> to vector<1x128xf32>
    %96 = vector.broadcast %95 : vector<1x128xf32> to vector<3x128xf32>
    %97 = arith.mulf %94, %96 : vector<3x128xf32>
    %98 = vector.extract_strided_slice %11 {offsets = [0, 121], sizes = [3, 7], strides = [1, 1]} : vector<3x128xf32> to vector<3x7xf32>
    %99 = vector.extract_strided_slice %11 {offsets = [0, 0], sizes = [3, 121], strides = [1, 1]} : vector<3x128xf32> to vector<3x121xf32>
    %100 = tpu.concatenate %98, %99 in 1 : vector<3x7xf32>, vector<3x121xf32> -> vector<3x128xf32>
    %101 = vector.extract_strided_slice %85 {offsets = [2, 0], sizes = [1, 128], strides = [1, 1]} : vector<9x128xf32> to vector<1x128xf32>
    %102 = vector.broadcast %101 : vector<1x128xf32> to vector<3x128xf32>
    %103 = arith.mulf %100, %102 : vector<3x128xf32>
    %104 = vector.extract_strided_slice %11 {offsets = [0, 127], sizes = [3, 1], strides = [1, 1]} : vector<3x128xf32> to vector<3x1xf32>
    %105 = vector.extract_strided_slice %11 {offsets = [0, 0], sizes = [3, 127], strides = [1, 1]} : vector<3x128xf32> to vector<3x127xf32>
    %106 = tpu.concatenate %104, %105 in 1 : vector<3x1xf32>, vector<3x127xf32> -> vector<3x128xf32>
    %107 = vector.extract_strided_slice %85 {offsets = [3, 0], sizes = [1, 128], strides = [1, 1]} : vector<9x128xf32> to vector<1x128xf32>
    %108 = vector.broadcast %107 : vector<1x128xf32> to vector<3x128xf32>
    %109 = arith.mulf %106, %108 : vector<3x128xf32>
    %110 = vector.extract_strided_slice %85 {offsets = [4, 0], sizes = [1, 128], strides = [1, 1]} : vector<9x128xf32> to vector<1x128xf32>
    %111 = vector.broadcast %110 : vector<1x128xf32> to vector<3x128xf32>
    %112 = arith.mulf %11, %111 : vector<3x128xf32>
    %113 = vector.extract_strided_slice %11 {offsets = [0, 1], sizes = [3, 127], strides = [1, 1]} : vector<3x128xf32> to vector<3x127xf32>
    %114 = vector.extract_strided_slice %11 {offsets = [0, 0], sizes = [3, 1], strides = [1, 1]} : vector<3x128xf32> to vector<3x1xf32>
    %115 = tpu.concatenate %113, %114 in 1 : vector<3x127xf32>, vector<3x1xf32> -> vector<3x128xf32>
    %116 = vector.extract_strided_slice %85 {offsets = [5, 0], sizes = [1, 128], strides = [1, 1]} : vector<9x128xf32> to vector<1x128xf32>
    %117 = vector.broadcast %116 : vector<1x128xf32> to vector<3x128xf32>
    %118 = arith.mulf %115, %117 : vector<3x128xf32>
    %119 = vector.extract_strided_slice %11 {offsets = [0, 7], sizes = [3, 121], strides = [1, 1]} : vector<3x128xf32> to vector<3x121xf32>
    %120 = vector.extract_strided_slice %11 {offsets = [0, 0], sizes = [3, 7], strides = [1, 1]} : vector<3x128xf32> to vector<3x7xf32>
    %121 = tpu.concatenate %119, %120 in 1 : vector<3x121xf32>, vector<3x7xf32> -> vector<3x128xf32>
    %122 = vector.extract_strided_slice %85 {offsets = [6, 0], sizes = [1, 128], strides = [1, 1]} : vector<9x128xf32> to vector<1x128xf32>
    %123 = vector.broadcast %122 : vector<1x128xf32> to vector<3x128xf32>
    %124 = arith.mulf %121, %123 : vector<3x128xf32>
    %125 = vector.extract_strided_slice %11 {offsets = [0, 8], sizes = [3, 120], strides = [1, 1]} : vector<3x128xf32> to vector<3x120xf32>
    %126 = vector.extract_strided_slice %11 {offsets = [0, 0], sizes = [3, 8], strides = [1, 1]} : vector<3x128xf32> to vector<3x8xf32>
    %127 = tpu.concatenate %125, %126 in 1 : vector<3x120xf32>, vector<3x8xf32> -> vector<3x128xf32>
    %128 = vector.extract_strided_slice %85 {offsets = [7, 0], sizes = [1, 128], strides = [1, 1]} : vector<9x128xf32> to vector<1x128xf32>
    %129 = vector.broadcast %128 : vector<1x128xf32> to vector<3x128xf32>
    %130 = arith.mulf %127, %129 : vector<3x128xf32>
    %131 = vector.extract_strided_slice %11 {offsets = [0, 9], sizes = [3, 119], strides = [1, 1]} : vector<3x128xf32> to vector<3x119xf32>
    %132 = vector.extract_strided_slice %11 {offsets = [0, 0], sizes = [3, 9], strides = [1, 1]} : vector<3x128xf32> to vector<3x9xf32>
    %133 = tpu.concatenate %131, %132 in 1 : vector<3x119xf32>, vector<3x9xf32> -> vector<3x128xf32>
    %134 = vector.extract_strided_slice %85 {offsets = [8, 0], sizes = [1, 128], strides = [1, 1]} : vector<9x128xf32> to vector<1x128xf32>
    %135 = vector.broadcast %134 : vector<1x128xf32> to vector<3x128xf32>
    %136 = arith.mulf %133, %135 : vector<3x128xf32>
    %137 = tpu.concatenate %91, %97, %103, %109, %112, %118, %124, %130, %136 in 0 : vector<3x128xf32>, vector<3x128xf32>, vector<3x128xf32>, vector<3x128xf32>, vector<3x128xf32>, vector<3x128xf32>, vector<3x128xf32>, vector<3x128xf32>, vector<3x128xf32> -> vector<27x128xf32>
    %c0_15 = arith.constant 0 : index
    %c0_16 = arith.constant 0 : index
    %138 = vector.load %arg7[%c0_15, %c0_16] : memref<9x32xf32, #tpu.memory_space<vmem>>, vector<9x32xf32>
    %139 = vector.extract_strided_slice %21 {offsets = [0, 27], sizes = [3, 5], strides = [1, 1]} : vector<3x32xf32> to vector<3x5xf32>
    %140 = vector.extract_strided_slice %21 {offsets = [0, 0], sizes = [3, 27], strides = [1, 1]} : vector<3x32xf32> to vector<3x27xf32>
    %141 = tpu.concatenate %139, %140 in 1 : vector<3x5xf32>, vector<3x27xf32> -> vector<3x32xf32>
    %142 = vector.extract_strided_slice %138 {offsets = [0, 0], sizes = [1, 32], strides = [1, 1]} : vector<9x32xf32> to vector<1x32xf32>
    %143 = vector.broadcast %142 : vector<1x32xf32> to vector<3x32xf32>
    %144 = arith.mulf %141, %143 : vector<3x32xf32>
    %145 = vector.extract_strided_slice %21 {offsets = [0, 28], sizes = [3, 4], strides = [1, 1]} : vector<3x32xf32> to vector<3x4xf32>
    %146 = vector.extract_strided_slice %21 {offsets = [0, 0], sizes = [3, 28], strides = [1, 1]} : vector<3x32xf32> to vector<3x28xf32>
    %147 = tpu.concatenate %145, %146 in 1 : vector<3x4xf32>, vector<3x28xf32> -> vector<3x32xf32>
    %148 = vector.extract_strided_slice %138 {offsets = [1, 0], sizes = [1, 32], strides = [1, 1]} : vector<9x32xf32> to vector<1x32xf32>
    %149 = vector.broadcast %148 : vector<1x32xf32> to vector<3x32xf32>
    %150 = arith.mulf %147, %149 : vector<3x32xf32>
    %151 = vector.extract_strided_slice %21 {offsets = [0, 29], sizes = [3, 3], strides = [1, 1]} : vector<3x32xf32> to vector<3x3xf32>
    %152 = vector.extract_strided_slice %21 {offsets = [0, 0], sizes = [3, 29], strides = [1, 1]} : vector<3x32xf32> to vector<3x29xf32>
    %153 = tpu.concatenate %151, %152 in 1 : vector<3x3xf32>, vector<3x29xf32> -> vector<3x32xf32>
    %154 = vector.extract_strided_slice %138 {offsets = [2, 0], sizes = [1, 32], strides = [1, 1]} : vector<9x32xf32> to vector<1x32xf32>
    %155 = vector.broadcast %154 : vector<1x32xf32> to vector<3x32xf32>
    %156 = arith.mulf %153, %155 : vector<3x32xf32>
    %157 = vector.extract_strided_slice %21 {offsets = [0, 31], sizes = [3, 1], strides = [1, 1]} : vector<3x32xf32> to vector<3x1xf32>
    %158 = vector.extract_strided_slice %21 {offsets = [0, 0], sizes = [3, 31], strides = [1, 1]} : vector<3x32xf32> to vector<3x31xf32>
    %159 = tpu.concatenate %157, %158 in 1 : vector<3x1xf32>, vector<3x31xf32> -> vector<3x32xf32>
    %160 = vector.extract_strided_slice %138 {offsets = [3, 0], sizes = [1, 32], strides = [1, 1]} : vector<9x32xf32> to vector<1x32xf32>
    %161 = vector.broadcast %160 : vector<1x32xf32> to vector<3x32xf32>
    %162 = arith.mulf %159, %161 : vector<3x32xf32>
    %163 = vector.extract_strided_slice %138 {offsets = [4, 0], sizes = [1, 32], strides = [1, 1]} : vector<9x32xf32> to vector<1x32xf32>
    %164 = vector.broadcast %163 : vector<1x32xf32> to vector<3x32xf32>
    %165 = arith.mulf %21, %164 : vector<3x32xf32>
    %166 = vector.extract_strided_slice %21 {offsets = [0, 1], sizes = [3, 31], strides = [1, 1]} : vector<3x32xf32> to vector<3x31xf32>
    %167 = vector.extract_strided_slice %21 {offsets = [0, 0], sizes = [3, 1], strides = [1, 1]} : vector<3x32xf32> to vector<3x1xf32>
    %168 = tpu.concatenate %166, %167 in 1 : vector<3x31xf32>, vector<3x1xf32> -> vector<3x32xf32>
    %169 = vector.extract_strided_slice %138 {offsets = [5, 0], sizes = [1, 32], strides = [1, 1]} : vector<9x32xf32> to vector<1x32xf32>
    %170 = vector.broadcast %169 : vector<1x32xf32> to vector<3x32xf32>
    %171 = arith.mulf %168, %170 : vector<3x32xf32>
    %172 = vector.extract_strided_slice %21 {offsets = [0, 3], sizes = [3, 29], strides = [1, 1]} : vector<3x32xf32> to vector<3x29xf32>
    %173 = vector.extract_strided_slice %21 {offsets = [0, 0], sizes = [3, 3], strides = [1, 1]} : vector<3x32xf32> to vector<3x3xf32>
    %174 = tpu.concatenate %172, %173 in 1 : vector<3x29xf32>, vector<3x3xf32> -> vector<3x32xf32>
    %175 = vector.extract_strided_slice %138 {offsets = [6, 0], sizes = [1, 32], strides = [1, 1]} : vector<9x32xf32> to vector<1x32xf32>
    %176 = vector.broadcast %175 : vector<1x32xf32> to vector<3x32xf32>
    %177 = arith.mulf %174, %176 : vector<3x32xf32>
    %178 = vector.extract_strided_slice %21 {offsets = [0, 4], sizes = [3, 28], strides = [1, 1]} : vector<3x32xf32> to vector<3x28xf32>
    %179 = vector.extract_strided_slice %21 {offsets = [0, 0], sizes = [3, 4], strides = [1, 1]} : vector<3x32xf32> to vector<3x4xf32>
    %180 = tpu.concatenate %178, %179 in 1 : vector<3x28xf32>, vector<3x4xf32> -> vector<3x32xf32>
    %181 = vector.extract_strided_slice %138 {offsets = [7, 0], sizes = [1, 32], strides = [1, 1]} : vector<9x32xf32> to vector<1x32xf32>
    %182 = vector.broadcast %181 : vector<1x32xf32> to vector<3x32xf32>
    %183 = arith.mulf %180, %182 : vector<3x32xf32>
    %184 = vector.extract_strided_slice %21 {offsets = [0, 5], sizes = [3, 27], strides = [1, 1]} : vector<3x32xf32> to vector<3x27xf32>
    %185 = vector.extract_strided_slice %21 {offsets = [0, 0], sizes = [3, 5], strides = [1, 1]} : vector<3x32xf32> to vector<3x5xf32>
    %186 = tpu.concatenate %184, %185 in 1 : vector<3x27xf32>, vector<3x5xf32> -> vector<3x32xf32>
    %187 = vector.extract_strided_slice %138 {offsets = [8, 0], sizes = [1, 32], strides = [1, 1]} : vector<9x32xf32> to vector<1x32xf32>
    %188 = vector.broadcast %187 : vector<1x32xf32> to vector<3x32xf32>
    %189 = arith.mulf %186, %188 : vector<3x32xf32>
    %190 = tpu.concatenate %144, %150, %156, %162, %165, %171, %177, %183, %189 in 0 : vector<3x32xf32>, vector<3x32xf32>, vector<3x32xf32>, vector<3x32xf32>, vector<3x32xf32>, vector<3x32xf32>, vector<3x32xf32>, vector<3x32xf32>, vector<3x32xf32> -> vector<27x32xf32>
    %c0_17 = arith.constant 0 : index
    %c0_18 = arith.constant 0 : index
    %191 = vector.load %arg8[%c0_17, %c0_18] : memref<9x8xf32, #tpu.memory_space<vmem>>, vector<9x8xf32>
    %192 = vector.extract_strided_slice %31 {offsets = [0, 5], sizes = [3, 3], strides = [1, 1]} : vector<3x8xf32> to vector<3x3xf32>
    %193 = vector.extract_strided_slice %31 {offsets = [0, 0], sizes = [3, 5], strides = [1, 1]} : vector<3x8xf32> to vector<3x5xf32>
    %194 = tpu.concatenate %192, %193 in 1 : vector<3x3xf32>, vector<3x5xf32> -> vector<3x8xf32>
    %195 = vector.extract_strided_slice %191 {offsets = [0, 0], sizes = [1, 8], strides = [1, 1]} : vector<9x8xf32> to vector<1x8xf32>
    %196 = vector.broadcast %195 : vector<1x8xf32> to vector<3x8xf32>
    %197 = arith.mulf %194, %196 : vector<3x8xf32>
    %198 = vector.extract_strided_slice %31 {offsets = [0, 6], sizes = [3, 2], strides = [1, 1]} : vector<3x8xf32> to vector<3x2xf32>
    %199 = vector.extract_strided_slice %31 {offsets = [0, 0], sizes = [3, 6], strides = [1, 1]} : vector<3x8xf32> to vector<3x6xf32>
    %200 = tpu.concatenate %198, %199 in 1 : vector<3x2xf32>, vector<3x6xf32> -> vector<3x8xf32>
    %201 = vector.extract_strided_slice %191 {offsets = [1, 0], sizes = [1, 8], strides = [1, 1]} : vector<9x8xf32> to vector<1x8xf32>
    %202 = vector.broadcast %201 : vector<1x8xf32> to vector<3x8xf32>
    %203 = arith.mulf %200, %202 : vector<3x8xf32>
    %204 = vector.extract_strided_slice %31 {offsets = [0, 7], sizes = [3, 1], strides = [1, 1]} : vector<3x8xf32> to vector<3x1xf32>
    %205 = vector.extract_strided_slice %31 {offsets = [0, 0], sizes = [3, 7], strides = [1, 1]} : vector<3x8xf32> to vector<3x7xf32>
    %206 = tpu.concatenate %204, %205 in 1 : vector<3x1xf32>, vector<3x7xf32> -> vector<3x8xf32>
    %207 = vector.extract_strided_slice %191 {offsets = [2, 0], sizes = [1, 8], strides = [1, 1]} : vector<9x8xf32> to vector<1x8xf32>
    %208 = vector.broadcast %207 : vector<1x8xf32> to vector<3x8xf32>
    %209 = arith.mulf %206, %208 : vector<3x8xf32>
    %210 = vector.extract_strided_slice %31 {offsets = [0, 7], sizes = [3, 1], strides = [1, 1]} : vector<3x8xf32> to vector<3x1xf32>
    %211 = vector.extract_strided_slice %31 {offsets = [0, 0], sizes = [3, 7], strides = [1, 1]} : vector<3x8xf32> to vector<3x7xf32>
    %212 = tpu.concatenate %210, %211 in 1 : vector<3x1xf32>, vector<3x7xf32> -> vector<3x8xf32>
    %213 = vector.extract_strided_slice %191 {offsets = [3, 0], sizes = [1, 8], strides = [1, 1]} : vector<9x8xf32> to vector<1x8xf32>
    %214 = vector.broadcast %213 : vector<1x8xf32> to vector<3x8xf32>
    %215 = arith.mulf %212, %214 : vector<3x8xf32>
    %216 = vector.extract_strided_slice %191 {offsets = [4, 0], sizes = [1, 8], strides = [1, 1]} : vector<9x8xf32> to vector<1x8xf32>
    %217 = vector.broadcast %216 : vector<1x8xf32> to vector<3x8xf32>
    %218 = arith.mulf %31, %217 : vector<3x8xf32>
    %219 = vector.extract_strided_slice %31 {offsets = [0, 1], sizes = [3, 7], strides = [1, 1]} : vector<3x8xf32> to vector<3x7xf32>
    %220 = vector.extract_strided_slice %31 {offsets = [0, 0], sizes = [3, 1], strides = [1, 1]} : vector<3x8xf32> to vector<3x1xf32>
    %221 = tpu.concatenate %219, %220 in 1 : vector<3x7xf32>, vector<3x1xf32> -> vector<3x8xf32>
    %222 = vector.extract_strided_slice %191 {offsets = [5, 0], sizes = [1, 8], strides = [1, 1]} : vector<9x8xf32> to vector<1x8xf32>
    %223 = vector.broadcast %222 : vector<1x8xf32> to vector<3x8xf32>
    %224 = arith.mulf %221, %223 : vector<3x8xf32>
    %225 = vector.extract_strided_slice %31 {offsets = [0, 1], sizes = [3, 7], strides = [1, 1]} : vector<3x8xf32> to vector<3x7xf32>
    %226 = vector.extract_strided_slice %31 {offsets = [0, 0], sizes = [3, 1], strides = [1, 1]} : vector<3x8xf32> to vector<3x1xf32>
    %227 = tpu.concatenate %225, %226 in 1 : vector<3x7xf32>, vector<3x1xf32> -> vector<3x8xf32>
    %228 = vector.extract_strided_slice %191 {offsets = [6, 0], sizes = [1, 8], strides = [1, 1]} : vector<9x8xf32> to vector<1x8xf32>
    %229 = vector.broadcast %228 : vector<1x8xf32> to vector<3x8xf32>
    %230 = arith.mulf %227, %229 : vector<3x8xf32>
    %231 = vector.extract_strided_slice %31 {offsets = [0, 2], sizes = [3, 6], strides = [1, 1]} : vector<3x8xf32> to vector<3x6xf32>
    %232 = vector.extract_strided_slice %31 {offsets = [0, 0], sizes = [3, 2], strides = [1, 1]} : vector<3x8xf32> to vector<3x2xf32>
    %233 = tpu.concatenate %231, %232 in 1 : vector<3x6xf32>, vector<3x2xf32> -> vector<3x8xf32>
    %234 = vector.extract_strided_slice %191 {offsets = [7, 0], sizes = [1, 8], strides = [1, 1]} : vector<9x8xf32> to vector<1x8xf32>
    %235 = vector.broadcast %234 : vector<1x8xf32> to vector<3x8xf32>
    %236 = arith.mulf %233, %235 : vector<3x8xf32>
    %237 = vector.extract_strided_slice %31 {offsets = [0, 3], sizes = [3, 5], strides = [1, 1]} : vector<3x8xf32> to vector<3x5xf32>
    %238 = vector.extract_strided_slice %31 {offsets = [0, 0], sizes = [3, 3], strides = [1, 1]} : vector<3x8xf32> to vector<3x3xf32>
    %239 = tpu.concatenate %237, %238 in 1 : vector<3x5xf32>, vector<3x3xf32> -> vector<3x8xf32>
    %240 = vector.extract_strided_slice %191 {offsets = [8, 0], sizes = [1, 8], strides = [1, 1]} : vector<9x8xf32> to vector<1x8xf32>
    %241 = vector.broadcast %240 : vector<1x8xf32> to vector<3x8xf32>
    %242 = arith.mulf %239, %241 : vector<3x8xf32>
    %243 = tpu.concatenate %197, %203, %209, %215, %218, %224, %230, %236, %242 in 0 : vector<3x8xf32>, vector<3x8xf32>, vector<3x8xf32>, vector<3x8xf32>, vector<3x8xf32>, vector<3x8xf32>, vector<3x8xf32>, vector<3x8xf32>, vector<3x8xf32> -> vector<27x8xf32>
    %244 = tpu.concatenate %84, %137, %190, %243 in 1 : vector<27x512xf32>, vector<27x128xf32>, vector<27x32xf32>, vector<27x8xf32> -> vector<27x680xf32>
    %cst_19 = arith.constant dense<0.000000e+00> : vector<8x680xf32>
    %245 = tpu.matmul %1, %244, %cst_19 {dimension_numbers = #tpu.dot_dimension_numbers<[1], [0], [0], [1], [0, 0, 1, 1], [], []>} : vector<8x27xf32>, vector<27x680xf32>, vector<8x680xf32> -> vector<8x680xf32>
    %cst_20 = arith.constant 0.000000e+00 : f32
    %246 = vector.broadcast %cst_20 : f32 to vector<8x680xf32>
    %247 = arith.maximumf %245, %246 : vector<8x680xf32>
    %248 = vector.extract_strided_slice %247 {offsets = [0, 0], sizes = [8, 512], strides = [1, 1]} : vector<8x680xf32> to vector<8x512xf32>
    %cst_21 = arith.constant dense<0.000000e+00> : vector<8xf32>
    %249 = vector.multi_reduction <add>, %248, %cst_21 [1] : vector<8x512xf32> to vector<8xf32>
    %250 = vector.shape_cast %249 : vector<8xf32> to vector<8x1xf32>
    %cst_22 = arith.constant 5.120000e+02 : f32
    %251 = vector.broadcast %cst_22 : f32 to vector<8x1xf32>
    %252 = arith.divf %250, %251 : vector<8x1xf32>
    %253 = arith.mulf %248, %248 : vector<8x512xf32>
    %cst_23 = arith.constant dense<0.000000e+00> : vector<8xf32>
    %254 = vector.multi_reduction <add>, %253, %cst_23 [1] : vector<8x512xf32> to vector<8xf32>
    %255 = vector.shape_cast %254 : vector<8xf32> to vector<8x1xf32>
    %cst_24 = arith.constant 5.120000e+02 : f32
    %256 = vector.broadcast %cst_24 : f32 to vector<8x1xf32>
    %257 = arith.divf %255, %256 : vector<8x1xf32>
    %258 = arith.mulf %252, %252 : vector<8x1xf32>
    %259 = arith.subf %257, %258 : vector<8x1xf32>
    %c0_25 = arith.constant 0 : index
    %260 = memref.load %arg0[%c0_25] : memref<12xf32, #tpu.memory_space<smem>>
    %cst_26 = arith.constant 9.99999974E-6 : f32
    %261 = vector.broadcast %cst_26 : f32 to vector<8x1xf32>
    %262 = arith.addf %259, %261 : vector<8x1xf32>
    %263 = math.rsqrt %262 : vector<8x1xf32>
    %264 = vector.broadcast %260 : f32 to vector<8x1xf32>
    %265 = arith.mulf %264, %263 : vector<8x1xf32>
    %266 = vector.broadcast %265 : vector<8x1xf32> to vector<8x512xf32>
    %267 = arith.mulf %248, %266 : vector<8x512xf32>
    %268 = arith.mulf %252, %265 : vector<8x1xf32>
    %269 = vector.broadcast %268 : vector<8x1xf32> to vector<8x512xf32>
    %270 = arith.subf %267, %269 : vector<8x512xf32>
    %271 = vector.extract_strided_slice %247 {offsets = [0, 512], sizes = [8, 128], strides = [1, 1]} : vector<8x680xf32> to vector<8x128xf32>
    %cst_27 = arith.constant dense<0.000000e+00> : vector<8xf32>
    %272 = vector.multi_reduction <add>, %271, %cst_27 [1] : vector<8x128xf32> to vector<8xf32>
    %273 = vector.shape_cast %272 : vector<8xf32> to vector<8x1xf32>
    %cst_28 = arith.constant 1.280000e+02 : f32
    %274 = vector.broadcast %cst_28 : f32 to vector<8x1xf32>
    %275 = arith.divf %273, %274 : vector<8x1xf32>
    %276 = arith.mulf %271, %271 : vector<8x128xf32>
    %cst_29 = arith.constant dense<0.000000e+00> : vector<8xf32>
    %277 = vector.multi_reduction <add>, %276, %cst_29 [1] : vector<8x128xf32> to vector<8xf32>
    %278 = vector.shape_cast %277 : vector<8xf32> to vector<8x1xf32>
    %cst_30 = arith.constant 1.280000e+02 : f32
    %279 = vector.broadcast %cst_30 : f32 to vector<8x1xf32>
    %280 = arith.divf %278, %279 : vector<8x1xf32>
    %281 = arith.mulf %275, %275 : vector<8x1xf32>
    %282 = arith.subf %280, %281 : vector<8x1xf32>
    %c1 = arith.constant 1 : index
    %283 = memref.load %arg0[%c1] : memref<12xf32, #tpu.memory_space<smem>>
    %cst_31 = arith.constant 9.99999974E-6 : f32
    %284 = vector.broadcast %cst_31 : f32 to vector<8x1xf32>
    %285 = arith.addf %282, %284 : vector<8x1xf32>
    %286 = math.rsqrt %285 : vector<8x1xf32>
    %287 = vector.broadcast %283 : f32 to vector<8x1xf32>
    %288 = arith.mulf %287, %286 : vector<8x1xf32>
    %289 = vector.broadcast %288 : vector<8x1xf32> to vector<8x128xf32>
    %290 = arith.mulf %271, %289 : vector<8x128xf32>
    %291 = arith.mulf %275, %288 : vector<8x1xf32>
    %292 = vector.broadcast %291 : vector<8x1xf32> to vector<8x128xf32>
    %293 = arith.subf %290, %292 : vector<8x128xf32>
    %294 = vector.extract_strided_slice %247 {offsets = [0, 640], sizes = [8, 32], strides = [1, 1]} : vector<8x680xf32> to vector<8x32xf32>
    %cst_32 = arith.constant dense<0.000000e+00> : vector<8xf32>
    %295 = vector.multi_reduction <add>, %294, %cst_32 [1] : vector<8x32xf32> to vector<8xf32>
    %296 = vector.shape_cast %295 : vector<8xf32> to vector<8x1xf32>
    %cst_33 = arith.constant 3.200000e+01 : f32
    %297 = vector.broadcast %cst_33 : f32 to vector<8x1xf32>
    %298 = arith.divf %296, %297 : vector<8x1xf32>
    %299 = arith.mulf %294, %294 : vector<8x32xf32>
    %cst_34 = arith.constant dense<0.000000e+00> : vector<8xf32>
    %300 = vector.multi_reduction <add>, %299, %cst_34 [1] : vector<8x32xf32> to vector<8xf32>
    %301 = vector.shape_cast %300 : vector<8xf32> to vector<8x1xf32>
    %cst_35 = arith.constant 3.200000e+01 : f32
    %302 = vector.broadcast %cst_35 : f32 to vector<8x1xf32>
    %303 = arith.divf %301, %302 : vector<8x1xf32>
    %304 = arith.mulf %298, %298 : vector<8x1xf32>
    %305 = arith.subf %303, %304 : vector<8x1xf32>
    %c2 = arith.constant 2 : index
    %306 = memref.load %arg0[%c2] : memref<12xf32, #tpu.memory_space<smem>>
    %cst_36 = arith.constant 9.99999974E-6 : f32
    %307 = vector.broadcast %cst_36 : f32 to vector<8x1xf32>
    %308 = arith.addf %305, %307 : vector<8x1xf32>
    %309 = math.rsqrt %308 : vector<8x1xf32>
    %310 = vector.broadcast %306 : f32 to vector<8x1xf32>
    %311 = arith.mulf %310, %309 : vector<8x1xf32>
    %312 = vector.broadcast %311 : vector<8x1xf32> to vector<8x32xf32>
    %313 = arith.mulf %294, %312 : vector<8x32xf32>
    %314 = arith.mulf %298, %311 : vector<8x1xf32>
    %315 = vector.broadcast %314 : vector<8x1xf32> to vector<8x32xf32>
    %316 = arith.subf %313, %315 : vector<8x32xf32>
    %317 = vector.extract_strided_slice %247 {offsets = [0, 672], sizes = [8, 8], strides = [1, 1]} : vector<8x680xf32> to vector<8x8xf32>
    %cst_37 = arith.constant dense<0.000000e+00> : vector<8xf32>
    %318 = vector.multi_reduction <add>, %317, %cst_37 [1] : vector<8x8xf32> to vector<8xf32>
    %319 = vector.shape_cast %318 : vector<8xf32> to vector<8x1xf32>
    %cst_38 = arith.constant 8.000000e+00 : f32
    %320 = vector.broadcast %cst_38 : f32 to vector<8x1xf32>
    %321 = arith.divf %319, %320 : vector<8x1xf32>
    %322 = arith.mulf %317, %317 : vector<8x8xf32>
    %cst_39 = arith.constant dense<0.000000e+00> : vector<8xf32>
    %323 = vector.multi_reduction <add>, %322, %cst_39 [1] : vector<8x8xf32> to vector<8xf32>
    %324 = vector.shape_cast %323 : vector<8xf32> to vector<8x1xf32>
    %cst_40 = arith.constant 8.000000e+00 : f32
    %325 = vector.broadcast %cst_40 : f32 to vector<8x1xf32>
    %326 = arith.divf %324, %325 : vector<8x1xf32>
    %327 = arith.mulf %321, %321 : vector<8x1xf32>
    %328 = arith.subf %326, %327 : vector<8x1xf32>
    %c3 = arith.constant 3 : index
    %329 = memref.load %arg0[%c3] : memref<12xf32, #tpu.memory_space<smem>>
    %cst_41 = arith.constant 9.99999974E-6 : f32
    %330 = vector.broadcast %cst_41 : f32 to vector<8x1xf32>
    %331 = arith.addf %328, %330 : vector<8x1xf32>
    %332 = math.rsqrt %331 : vector<8x1xf32>
    %333 = vector.broadcast %329 : f32 to vector<8x1xf32>
    %334 = arith.mulf %333, %332 : vector<8x1xf32>
    %335 = vector.broadcast %334 : vector<8x1xf32> to vector<8x8xf32>
    %336 = arith.mulf %317, %335 : vector<8x8xf32>
    %337 = arith.mulf %321, %334 : vector<8x1xf32>
    %338 = vector.broadcast %337 : vector<8x1xf32> to vector<8x8xf32>
    %339 = arith.subf %336, %338 : vector<8x8xf32>
    %340 = tpu.concatenate %293, %316, %339 in 1 : vector<8x128xf32>, vector<8x32xf32>, vector<8x8xf32> -> vector<8x168xf32>
    %c0_42 = arith.constant 0 : index
    %c0_43 = arith.constant 0 : index
    %341 = vector.load %arg12[%c0_42, %c0_43] : memref<168x512xf32, #tpu.memory_space<vmem>>, vector<168x512xf32>
    %cst_44 = arith.constant dense<0.000000e+00> : vector<8x512xf32>
    %342 = tpu.matmul %340, %341, %cst_44 {dimension_numbers = #tpu.dot_dimension_numbers<[1], [0], [0], [1], [0, 0, 1, 1], [], []>} : vector<8x168xf32>, vector<168x512xf32>, vector<8x512xf32> -> vector<8x512xf32>
    %343 = arith.addf %270, %342 : vector<8x512xf32>
    %c0_45 = arith.constant 0 : index
    %c0_46 = arith.constant 0 : index
    %344 = vector.load %arg3[%c0_45, %c0_46] : memref<8x72xf32, #tpu.memory_space<vmem>>, vector<8x72xf32>
    %345 = vector.extract_strided_slice %343 {offsets = [0, 1], sizes = [8, 511], strides = [1, 1]} : vector<8x512xf32> to vector<8x511xf32>
    %346 = vector.extract_strided_slice %343 {offsets = [0, 0], sizes = [8, 1], strides = [1, 1]} : vector<8x512xf32> to vector<8x1xf32>
    %347 = tpu.concatenate %345, %346 in 1 : vector<8x511xf32>, vector<8x1xf32> -> vector<8x512xf32>
    %348 = arith.maximumf %343, %347 : vector<8x512xf32>
    %349 = vector.extract_strided_slice %348 {offsets = [0, 16], sizes = [8, 496], strides = [1, 1]} : vector<8x512xf32> to vector<8x496xf32>
    %350 = vector.extract_strided_slice %348 {offsets = [0, 0], sizes = [8, 16], strides = [1, 1]} : vector<8x512xf32> to vector<8x16xf32>
    %351 = tpu.concatenate %349, %350 in 1 : vector<8x496xf32>, vector<8x16xf32> -> vector<8x512xf32>
    %352 = arith.maximumf %348, %351 : vector<8x512xf32>
    %c0_47 = arith.constant 0 : index
    %c0_48 = arith.constant 0 : index
    %353 = vector.load %arg9[%c0_47, %c0_48] : memref<512x128xf32, #tpu.memory_space<vmem>>, vector<512x128xf32>
    %cst_49 = arith.constant dense<0.000000e+00> : vector<8x128xf32>
    %354 = tpu.matmul %352, %353, %cst_49 {dimension_numbers = #tpu.dot_dimension_numbers<[1], [0], [0], [1], [0, 0, 1, 1], [], []>} : vector<8x512xf32>, vector<512x128xf32>, vector<8x128xf32> -> vector<8x128xf32>
    %355 = vector.extract_strided_slice %354 {offsets = [0, 1], sizes = [8, 127], strides = [1, 1]} : vector<8x128xf32> to vector<8x127xf32>
    %356 = vector.extract_strided_slice %354 {offsets = [0, 0], sizes = [8, 1], strides = [1, 1]} : vector<8x128xf32> to vector<8x1xf32>
    %357 = tpu.concatenate %355, %356 in 1 : vector<8x127xf32>, vector<8x1xf32> -> vector<8x128xf32>
    %358 = arith.maximumf %354, %357 : vector<8x128xf32>
    %359 = vector.extract_strided_slice %358 {offsets = [0, 8], sizes = [8, 120], strides = [1, 1]} : vector<8x128xf32> to vector<8x120xf32>
    %360 = vector.extract_strided_slice %358 {offsets = [0, 0], sizes = [8, 8], strides = [1, 1]} : vector<8x128xf32> to vector<8x8xf32>
    %361 = tpu.concatenate %359, %360 in 1 : vector<8x120xf32>, vector<8x8xf32> -> vector<8x128xf32>
    %362 = arith.maximumf %358, %361 : vector<8x128xf32>
    %c0_50 = arith.constant 0 : index
    %c0_51 = arith.constant 0 : index
    %363 = vector.load %arg10[%c0_50, %c0_51] : memref<128x32xf32, #tpu.memory_space<vmem>>, vector<128x32xf32>
    %cst_52 = arith.constant dense<0.000000e+00> : vector<8x32xf32>
    %364 = tpu.matmul %362, %363, %cst_52 {dimension_numbers = #tpu.dot_dimension_numbers<[1], [0], [0], [1], [0, 0, 1, 1], [], []>} : vector<8x128xf32>, vector<128x32xf32>, vector<8x32xf32> -> vector<8x32xf32>
    %365 = vector.extract_strided_slice %364 {offsets = [0, 1], sizes = [8, 31], strides = [1, 1]} : vector<8x32xf32> to vector<8x31xf32>
    %366 = vector.extract_strided_slice %364 {offsets = [0, 0], sizes = [8, 1], strides = [1, 1]} : vector<8x32xf32> to vector<8x1xf32>
    %367 = tpu.concatenate %365, %366 in 1 : vector<8x31xf32>, vector<8x1xf32> -> vector<8x32xf32>
    %368 = arith.maximumf %364, %367 : vector<8x32xf32>
    %369 = vector.extract_strided_slice %368 {offsets = [0, 4], sizes = [8, 28], strides = [1, 1]} : vector<8x32xf32> to vector<8x28xf32>
    %370 = vector.extract_strided_slice %368 {offsets = [0, 0], sizes = [8, 4], strides = [1, 1]} : vector<8x32xf32> to vector<8x4xf32>
    %371 = tpu.concatenate %369, %370 in 1 : vector<8x28xf32>, vector<8x4xf32> -> vector<8x32xf32>
    %372 = arith.maximumf %368, %371 : vector<8x32xf32>
    %c0_53 = arith.constant 0 : index
    %c0_54 = arith.constant 0 : index
    %373 = vector.load %arg11[%c0_53, %c0_54] : memref<32x8xf32, #tpu.memory_space<vmem>>, vector<32x8xf32>
    %cst_55 = arith.constant dense<0.000000e+00> : vector<8x8xf32>
    %374 = tpu.matmul %372, %373, %cst_55 {dimension_numbers = #tpu.dot_dimension_numbers<[1], [0], [0], [1], [0, 0, 1, 1], [], []>} : vector<8x32xf32>, vector<32x8xf32>, vector<8x8xf32> -> vector<8x8xf32>
    %c0_56 = arith.constant 0 : index
    %c0_57 = arith.constant 0 : index
    %375 = vector.load %arg5[%c0_56, %c0_57] : memref<9x512xf32, #tpu.memory_space<vmem>>, vector<9x512xf32>
    %376 = vector.extract_strided_slice %343 {offsets = [0, 495], sizes = [8, 17], strides = [1, 1]} : vector<8x512xf32> to vector<8x17xf32>
    %377 = vector.extract_strided_slice %343 {offsets = [0, 0], sizes = [8, 495], strides = [1, 1]} : vector<8x512xf32> to vector<8x495xf32>
    %378 = tpu.concatenate %376, %377 in 1 : vector<8x17xf32>, vector<8x495xf32> -> vector<8x512xf32>
    %379 = vector.extract_strided_slice %375 {offsets = [0, 0], sizes = [1, 512], strides = [1, 1]} : vector<9x512xf32> to vector<1x512xf32>
    %380 = vector.broadcast %379 : vector<1x512xf32> to vector<8x512xf32>
    %381 = arith.mulf %378, %380 : vector<8x512xf32>
    %382 = vector.extract_strided_slice %343 {offsets = [0, 496], sizes = [8, 16], strides = [1, 1]} : vector<8x512xf32> to vector<8x16xf32>
    %383 = vector.extract_strided_slice %343 {offsets = [0, 0], sizes = [8, 496], strides = [1, 1]} : vector<8x512xf32> to vector<8x496xf32>
    %384 = tpu.concatenate %382, %383 in 1 : vector<8x16xf32>, vector<8x496xf32> -> vector<8x512xf32>
    %385 = vector.extract_strided_slice %375 {offsets = [1, 0], sizes = [1, 512], strides = [1, 1]} : vector<9x512xf32> to vector<1x512xf32>
    %386 = vector.broadcast %385 : vector<1x512xf32> to vector<8x512xf32>
    %387 = arith.mulf %384, %386 : vector<8x512xf32>
    %388 = vector.extract_strided_slice %343 {offsets = [0, 497], sizes = [8, 15], strides = [1, 1]} : vector<8x512xf32> to vector<8x15xf32>
    %389 = vector.extract_strided_slice %343 {offsets = [0, 0], sizes = [8, 497], strides = [1, 1]} : vector<8x512xf32> to vector<8x497xf32>
    %390 = tpu.concatenate %388, %389 in 1 : vector<8x15xf32>, vector<8x497xf32> -> vector<8x512xf32>
    %391 = vector.extract_strided_slice %375 {offsets = [2, 0], sizes = [1, 512], strides = [1, 1]} : vector<9x512xf32> to vector<1x512xf32>
    %392 = vector.broadcast %391 : vector<1x512xf32> to vector<8x512xf32>
    %393 = arith.mulf %390, %392 : vector<8x512xf32>
    %394 = vector.extract_strided_slice %343 {offsets = [0, 511], sizes = [8, 1], strides = [1, 1]} : vector<8x512xf32> to vector<8x1xf32>
    %395 = vector.extract_strided_slice %343 {offsets = [0, 0], sizes = [8, 511], strides = [1, 1]} : vector<8x512xf32> to vector<8x511xf32>
    %396 = tpu.concatenate %394, %395 in 1 : vector<8x1xf32>, vector<8x511xf32> -> vector<8x512xf32>
    %397 = vector.extract_strided_slice %375 {offsets = [3, 0], sizes = [1, 512], strides = [1, 1]} : vector<9x512xf32> to vector<1x512xf32>
    %398 = vector.broadcast %397 : vector<1x512xf32> to vector<8x512xf32>
    %399 = arith.mulf %396, %398 : vector<8x512xf32>
    %400 = vector.extract_strided_slice %375 {offsets = [4, 0], sizes = [1, 512], strides = [1, 1]} : vector<9x512xf32> to vector<1x512xf32>
    %401 = vector.broadcast %400 : vector<1x512xf32> to vector<8x512xf32>
    %402 = arith.mulf %343, %401 : vector<8x512xf32>
    %403 = vector.extract_strided_slice %343 {offsets = [0, 1], sizes = [8, 511], strides = [1, 1]} : vector<8x512xf32> to vector<8x511xf32>
    %404 = vector.extract_strided_slice %343 {offsets = [0, 0], sizes = [8, 1], strides = [1, 1]} : vector<8x512xf32> to vector<8x1xf32>
    %405 = tpu.concatenate %403, %404 in 1 : vector<8x511xf32>, vector<8x1xf32> -> vector<8x512xf32>
    %406 = vector.extract_strided_slice %375 {offsets = [5, 0], sizes = [1, 512], strides = [1, 1]} : vector<9x512xf32> to vector<1x512xf32>
    %407 = vector.broadcast %406 : vector<1x512xf32> to vector<8x512xf32>
    %408 = arith.mulf %405, %407 : vector<8x512xf32>
    %409 = vector.extract_strided_slice %343 {offsets = [0, 15], sizes = [8, 497], strides = [1, 1]} : vector<8x512xf32> to vector<8x497xf32>
    %410 = vector.extract_strided_slice %343 {offsets = [0, 0], sizes = [8, 15], strides = [1, 1]} : vector<8x512xf32> to vector<8x15xf32>
    %411 = tpu.concatenate %409, %410 in 1 : vector<8x497xf32>, vector<8x15xf32> -> vector<8x512xf32>
    %412 = vector.extract_strided_slice %375 {offsets = [6, 0], sizes = [1, 512], strides = [1, 1]} : vector<9x512xf32> to vector<1x512xf32>
    %413 = vector.broadcast %412 : vector<1x512xf32> to vector<8x512xf32>
    %414 = arith.mulf %411, %413 : vector<8x512xf32>
    %415 = vector.extract_strided_slice %343 {offsets = [0, 16], sizes = [8, 496], strides = [1, 1]} : vector<8x512xf32> to vector<8x496xf32>
    %416 = vector.extract_strided_slice %343 {offsets = [0, 0], sizes = [8, 16], strides = [1, 1]} : vector<8x512xf32> to vector<8x16xf32>
    %417 = tpu.concatenate %415, %416 in 1 : vector<8x496xf32>, vector<8x16xf32> -> vector<8x512xf32>
    %418 = vector.extract_strided_slice %375 {offsets = [7, 0], sizes = [1, 512], strides = [1, 1]} : vector<9x512xf32> to vector<1x512xf32>
    %419 = vector.broadcast %418 : vector<1x512xf32> to vector<8x512xf32>
    %420 = arith.mulf %417, %419 : vector<8x512xf32>
    %421 = vector.extract_strided_slice %343 {offsets = [0, 17], sizes = [8, 495], strides = [1, 1]} : vector<8x512xf32> to vector<8x495xf32>
    %422 = vector.extract_strided_slice %343 {offsets = [0, 0], sizes = [8, 17], strides = [1, 1]} : vector<8x512xf32> to vector<8x17xf32>
    %423 = tpu.concatenate %421, %422 in 1 : vector<8x495xf32>, vector<8x17xf32> -> vector<8x512xf32>
    %424 = vector.extract_strided_slice %375 {offsets = [8, 0], sizes = [1, 512], strides = [1, 1]} : vector<9x512xf32> to vector<1x512xf32>
    %425 = vector.broadcast %424 : vector<1x512xf32> to vector<8x512xf32>
    %426 = arith.mulf %423, %425 : vector<8x512xf32>
    %427 = tpu.concatenate %381, %387, %393, %399, %402, %408, %414, %420, %426 in 0 : vector<8x512xf32>, vector<8x512xf32>, vector<8x512xf32>, vector<8x512xf32>, vector<8x512xf32>, vector<8x512xf32>, vector<8x512xf32>, vector<8x512xf32>, vector<8x512xf32> -> vector<72x512xf32>
    %c0_58 = arith.constant 0 : index
    %c0_59 = arith.constant 0 : index
    %428 = vector.load %arg6[%c0_58, %c0_59] : memref<9x128xf32, #tpu.memory_space<vmem>>, vector<9x128xf32>
    %429 = vector.extract_strided_slice %354 {offsets = [0, 119], sizes = [8, 9], strides = [1, 1]} : vector<8x128xf32> to vector<8x9xf32>
    %430 = vector.extract_strided_slice %354 {offsets = [0, 0], sizes = [8, 119], strides = [1, 1]} : vector<8x128xf32> to vector<8x119xf32>
    %431 = tpu.concatenate %429, %430 in 1 : vector<8x9xf32>, vector<8x119xf32> -> vector<8x128xf32>
    %432 = vector.extract_strided_slice %428 {offsets = [0, 0], sizes = [1, 128], strides = [1, 1]} : vector<9x128xf32> to vector<1x128xf32>
    %433 = vector.broadcast %432 : vector<1x128xf32> to vector<8x128xf32>
    %434 = arith.mulf %431, %433 : vector<8x128xf32>
    %435 = vector.extract_strided_slice %354 {offsets = [0, 120], sizes = [8, 8], strides = [1, 1]} : vector<8x128xf32> to vector<8x8xf32>
    %436 = vector.extract_strided_slice %354 {offsets = [0, 0], sizes = [8, 120], strides = [1, 1]} : vector<8x128xf32> to vector<8x120xf32>
    %437 = tpu.concatenate %435, %436 in 1 : vector<8x8xf32>, vector<8x120xf32> -> vector<8x128xf32>
    %438 = vector.extract_strided_slice %428 {offsets = [1, 0], sizes = [1, 128], strides = [1, 1]} : vector<9x128xf32> to vector<1x128xf32>
    %439 = vector.broadcast %438 : vector<1x128xf32> to vector<8x128xf32>
    %440 = arith.mulf %437, %439 : vector<8x128xf32>
    %441 = vector.extract_strided_slice %354 {offsets = [0, 121], sizes = [8, 7], strides = [1, 1]} : vector<8x128xf32> to vector<8x7xf32>
    %442 = vector.extract_strided_slice %354 {offsets = [0, 0], sizes = [8, 121], strides = [1, 1]} : vector<8x128xf32> to vector<8x121xf32>
    %443 = tpu.concatenate %441, %442 in 1 : vector<8x7xf32>, vector<8x121xf32> -> vector<8x128xf32>
    %444 = vector.extract_strided_slice %428 {offsets = [2, 0], sizes = [1, 128], strides = [1, 1]} : vector<9x128xf32> to vector<1x128xf32>
    %445 = vector.broadcast %444 : vector<1x128xf32> to vector<8x128xf32>
    %446 = arith.mulf %443, %445 : vector<8x128xf32>
    %447 = vector.extract_strided_slice %354 {offsets = [0, 127], sizes = [8, 1], strides = [1, 1]} : vector<8x128xf32> to vector<8x1xf32>
    %448 = vector.extract_strided_slice %354 {offsets = [0, 0], sizes = [8, 127], strides = [1, 1]} : vector<8x128xf32> to vector<8x127xf32>
    %449 = tpu.concatenate %447, %448 in 1 : vector<8x1xf32>, vector<8x127xf32> -> vector<8x128xf32>
    %450 = vector.extract_strided_slice %428 {offsets = [3, 0], sizes = [1, 128], strides = [1, 1]} : vector<9x128xf32> to vector<1x128xf32>
    %451 = vector.broadcast %450 : vector<1x128xf32> to vector<8x128xf32>
    %452 = arith.mulf %449, %451 : vector<8x128xf32>
    %453 = vector.extract_strided_slice %428 {offsets = [4, 0], sizes = [1, 128], strides = [1, 1]} : vector<9x128xf32> to vector<1x128xf32>
    %454 = vector.broadcast %453 : vector<1x128xf32> to vector<8x128xf32>
    %455 = arith.mulf %354, %454 : vector<8x128xf32>
    %456 = vector.extract_strided_slice %354 {offsets = [0, 1], sizes = [8, 127], strides = [1, 1]} : vector<8x128xf32> to vector<8x127xf32>
    %457 = vector.extract_strided_slice %354 {offsets = [0, 0], sizes = [8, 1], strides = [1, 1]} : vector<8x128xf32> to vector<8x1xf32>
    %458 = tpu.concatenate %456, %457 in 1 : vector<8x127xf32>, vector<8x1xf32> -> vector<8x128xf32>
    %459 = vector.extract_strided_slice %428 {offsets = [5, 0], sizes = [1, 128], strides = [1, 1]} : vector<9x128xf32> to vector<1x128xf32>
    %460 = vector.broadcast %459 : vector<1x128xf32> to vector<8x128xf32>
    %461 = arith.mulf %458, %460 : vector<8x128xf32>
    %462 = vector.extract_strided_slice %354 {offsets = [0, 7], sizes = [8, 121], strides = [1, 1]} : vector<8x128xf32> to vector<8x121xf32>
    %463 = vector.extract_strided_slice %354 {offsets = [0, 0], sizes = [8, 7], strides = [1, 1]} : vector<8x128xf32> to vector<8x7xf32>
    %464 = tpu.concatenate %462, %463 in 1 : vector<8x121xf32>, vector<8x7xf32> -> vector<8x128xf32>
    %465 = vector.extract_strided_slice %428 {offsets = [6, 0], sizes = [1, 128], strides = [1, 1]} : vector<9x128xf32> to vector<1x128xf32>
    %466 = vector.broadcast %465 : vector<1x128xf32> to vector<8x128xf32>
    %467 = arith.mulf %464, %466 : vector<8x128xf32>
    %468 = vector.extract_strided_slice %354 {offsets = [0, 8], sizes = [8, 120], strides = [1, 1]} : vector<8x128xf32> to vector<8x120xf32>
    %469 = vector.extract_strided_slice %354 {offsets = [0, 0], sizes = [8, 8], strides = [1, 1]} : vector<8x128xf32> to vector<8x8xf32>
    %470 = tpu.concatenate %468, %469 in 1 : vector<8x120xf32>, vector<8x8xf32> -> vector<8x128xf32>
    %471 = vector.extract_strided_slice %428 {offsets = [7, 0], sizes = [1, 128], strides = [1, 1]} : vector<9x128xf32> to vector<1x128xf32>
    %472 = vector.broadcast %471 : vector<1x128xf32> to vector<8x128xf32>
    %473 = arith.mulf %470, %472 : vector<8x128xf32>
    %474 = vector.extract_strided_slice %354 {offsets = [0, 9], sizes = [8, 119], strides = [1, 1]} : vector<8x128xf32> to vector<8x119xf32>
    %475 = vector.extract_strided_slice %354 {offsets = [0, 0], sizes = [8, 9], strides = [1, 1]} : vector<8x128xf32> to vector<8x9xf32>
    %476 = tpu.concatenate %474, %475 in 1 : vector<8x119xf32>, vector<8x9xf32> -> vector<8x128xf32>
    %477 = vector.extract_strided_slice %428 {offsets = [8, 0], sizes = [1, 128], strides = [1, 1]} : vector<9x128xf32> to vector<1x128xf32>
    %478 = vector.broadcast %477 : vector<1x128xf32> to vector<8x128xf32>
    %479 = arith.mulf %476, %478 : vector<8x128xf32>
    %480 = tpu.concatenate %434, %440, %446, %452, %455, %461, %467, %473, %479 in 0 : vector<8x128xf32>, vector<8x128xf32>, vector<8x128xf32>, vector<8x128xf32>, vector<8x128xf32>, vector<8x128xf32>, vector<8x128xf32>, vector<8x128xf32>, vector<8x128xf32> -> vector<72x128xf32>
    %c0_60 = arith.constant 0 : index
    %c0_61 = arith.constant 0 : index
    %481 = vector.load %arg7[%c0_60, %c0_61] : memref<9x32xf32, #tpu.memory_space<vmem>>, vector<9x32xf32>
    %482 = vector.extract_strided_slice %364 {offsets = [0, 27], sizes = [8, 5], strides = [1, 1]} : vector<8x32xf32> to vector<8x5xf32>
    %483 = vector.extract_strided_slice %364 {offsets = [0, 0], sizes = [8, 27], strides = [1, 1]} : vector<8x32xf32> to vector<8x27xf32>
    %484 = tpu.concatenate %482, %483 in 1 : vector<8x5xf32>, vector<8x27xf32> -> vector<8x32xf32>
    %485 = vector.extract_strided_slice %481 {offsets = [0, 0], sizes = [1, 32], strides = [1, 1]} : vector<9x32xf32> to vector<1x32xf32>
    %486 = vector.broadcast %485 : vector<1x32xf32> to vector<8x32xf32>
    %487 = arith.mulf %484, %486 : vector<8x32xf32>
    %488 = vector.extract_strided_slice %364 {offsets = [0, 28], sizes = [8, 4], strides = [1, 1]} : vector<8x32xf32> to vector<8x4xf32>
    %489 = vector.extract_strided_slice %364 {offsets = [0, 0], sizes = [8, 28], strides = [1, 1]} : vector<8x32xf32> to vector<8x28xf32>
    %490 = tpu.concatenate %488, %489 in 1 : vector<8x4xf32>, vector<8x28xf32> -> vector<8x32xf32>
    %491 = vector.extract_strided_slice %481 {offsets = [1, 0], sizes = [1, 32], strides = [1, 1]} : vector<9x32xf32> to vector<1x32xf32>
    %492 = vector.broadcast %491 : vector<1x32xf32> to vector<8x32xf32>
    %493 = arith.mulf %490, %492 : vector<8x32xf32>
    %494 = vector.extract_strided_slice %364 {offsets = [0, 29], sizes = [8, 3], strides = [1, 1]} : vector<8x32xf32> to vector<8x3xf32>
    %495 = vector.extract_strided_slice %364 {offsets = [0, 0], sizes = [8, 29], strides = [1, 1]} : vector<8x32xf32> to vector<8x29xf32>
    %496 = tpu.concatenate %494, %495 in 1 : vector<8x3xf32>, vector<8x29xf32> -> vector<8x32xf32>
    %497 = vector.extract_strided_slice %481 {offsets = [2, 0], sizes = [1, 32], strides = [1, 1]} : vector<9x32xf32> to vector<1x32xf32>
    %498 = vector.broadcast %497 : vector<1x32xf32> to vector<8x32xf32>
    %499 = arith.mulf %496, %498 : vector<8x32xf32>
    %500 = vector.extract_strided_slice %364 {offsets = [0, 31], sizes = [8, 1], strides = [1, 1]} : vector<8x32xf32> to vector<8x1xf32>
    %501 = vector.extract_strided_slice %364 {offsets = [0, 0], sizes = [8, 31], strides = [1, 1]} : vector<8x32xf32> to vector<8x31xf32>
    %502 = tpu.concatenate %500, %501 in 1 : vector<8x1xf32>, vector<8x31xf32> -> vector<8x32xf32>
    %503 = vector.extract_strided_slice %481 {offsets = [3, 0], sizes = [1, 32], strides = [1, 1]} : vector<9x32xf32> to vector<1x32xf32>
    %504 = vector.broadcast %503 : vector<1x32xf32> to vector<8x32xf32>
    %505 = arith.mulf %502, %504 : vector<8x32xf32>
    %506 = vector.extract_strided_slice %481 {offsets = [4, 0], sizes = [1, 32], strides = [1, 1]} : vector<9x32xf32> to vector<1x32xf32>
    %507 = vector.broadcast %506 : vector<1x32xf32> to vector<8x32xf32>
    %508 = arith.mulf %364, %507 : vector<8x32xf32>
    %509 = vector.extract_strided_slice %364 {offsets = [0, 1], sizes = [8, 31], strides = [1, 1]} : vector<8x32xf32> to vector<8x31xf32>
    %510 = vector.extract_strided_slice %364 {offsets = [0, 0], sizes = [8, 1], strides = [1, 1]} : vector<8x32xf32> to vector<8x1xf32>
    %511 = tpu.concatenate %509, %510 in 1 : vector<8x31xf32>, vector<8x1xf32> -> vector<8x32xf32>
    %512 = vector.extract_strided_slice %481 {offsets = [5, 0], sizes = [1, 32], strides = [1, 1]} : vector<9x32xf32> to vector<1x32xf32>
    %513 = vector.broadcast %512 : vector<1x32xf32> to vector<8x32xf32>
    %514 = arith.mulf %511, %513 : vector<8x32xf32>
    %515 = vector.extract_strided_slice %364 {offsets = [0, 3], sizes = [8, 29], strides = [1, 1]} : vector<8x32xf32> to vector<8x29xf32>
    %516 = vector.extract_strided_slice %364 {offsets = [0, 0], sizes = [8, 3], strides = [1, 1]} : vector<8x32xf32> to vector<8x3xf32>
    %517 = tpu.concatenate %515, %516 in 1 : vector<8x29xf32>, vector<8x3xf32> -> vector<8x32xf32>
    %518 = vector.extract_strided_slice %481 {offsets = [6, 0], sizes = [1, 32], strides = [1, 1]} : vector<9x32xf32> to vector<1x32xf32>
    %519 = vector.broadcast %518 : vector<1x32xf32> to vector<8x32xf32>
    %520 = arith.mulf %517, %519 : vector<8x32xf32>
    %521 = vector.extract_strided_slice %364 {offsets = [0, 4], sizes = [8, 28], strides = [1, 1]} : vector<8x32xf32> to vector<8x28xf32>
    %522 = vector.extract_strided_slice %364 {offsets = [0, 0], sizes = [8, 4], strides = [1, 1]} : vector<8x32xf32> to vector<8x4xf32>
    %523 = tpu.concatenate %521, %522 in 1 : vector<8x28xf32>, vector<8x4xf32> -> vector<8x32xf32>
    %524 = vector.extract_strided_slice %481 {offsets = [7, 0], sizes = [1, 32], strides = [1, 1]} : vector<9x32xf32> to vector<1x32xf32>
    %525 = vector.broadcast %524 : vector<1x32xf32> to vector<8x32xf32>
    %526 = arith.mulf %523, %525 : vector<8x32xf32>
    %527 = vector.extract_strided_slice %364 {offsets = [0, 5], sizes = [8, 27], strides = [1, 1]} : vector<8x32xf32> to vector<8x27xf32>
    %528 = vector.extract_strided_slice %364 {offsets = [0, 0], sizes = [8, 5], strides = [1, 1]} : vector<8x32xf32> to vector<8x5xf32>
    %529 = tpu.concatenate %527, %528 in 1 : vector<8x27xf32>, vector<8x5xf32> -> vector<8x32xf32>
    %530 = vector.extract_strided_slice %481 {offsets = [8, 0], sizes = [1, 32], strides = [1, 1]} : vector<9x32xf32> to vector<1x32xf32>
    %531 = vector.broadcast %530 : vector<1x32xf32> to vector<8x32xf32>
    %532 = arith.mulf %529, %531 : vector<8x32xf32>
    %533 = tpu.concatenate %487, %493, %499, %505, %508, %514, %520, %526, %532 in 0 : vector<8x32xf32>, vector<8x32xf32>, vector<8x32xf32>, vector<8x32xf32>, vector<8x32xf32>, vector<8x32xf32>, vector<8x32xf32>, vector<8x32xf32>, vector<8x32xf32> -> vector<72x32xf32>
    %c0_62 = arith.constant 0 : index
    %c0_63 = arith.constant 0 : index
    %534 = vector.load %arg8[%c0_62, %c0_63] : memref<9x8xf32, #tpu.memory_space<vmem>>, vector<9x8xf32>
    %535 = vector.extract_strided_slice %374 {offsets = [0, 5], sizes = [8, 3], strides = [1, 1]} : vector<8x8xf32> to vector<8x3xf32>
    %536 = vector.extract_strided_slice %374 {offsets = [0, 0], sizes = [8, 5], strides = [1, 1]} : vector<8x8xf32> to vector<8x5xf32>
    %537 = tpu.concatenate %535, %536 in 1 : vector<8x3xf32>, vector<8x5xf32> -> vector<8x8xf32>
    %538 = vector.extract_strided_slice %534 {offsets = [0, 0], sizes = [1, 8], strides = [1, 1]} : vector<9x8xf32> to vector<1x8xf32>
    %539 = vector.broadcast %538 : vector<1x8xf32> to vector<8x8xf32>
    %540 = arith.mulf %537, %539 : vector<8x8xf32>
    %541 = vector.extract_strided_slice %374 {offsets = [0, 6], sizes = [8, 2], strides = [1, 1]} : vector<8x8xf32> to vector<8x2xf32>
    %542 = vector.extract_strided_slice %374 {offsets = [0, 0], sizes = [8, 6], strides = [1, 1]} : vector<8x8xf32> to vector<8x6xf32>
    %543 = tpu.concatenate %541, %542 in 1 : vector<8x2xf32>, vector<8x6xf32> -> vector<8x8xf32>
    %544 = vector.extract_strided_slice %534 {offsets = [1, 0], sizes = [1, 8], strides = [1, 1]} : vector<9x8xf32> to vector<1x8xf32>
    %545 = vector.broadcast %544 : vector<1x8xf32> to vector<8x8xf32>
    %546 = arith.mulf %543, %545 : vector<8x8xf32>
    %547 = vector.extract_strided_slice %374 {offsets = [0, 7], sizes = [8, 1], strides = [1, 1]} : vector<8x8xf32> to vector<8x1xf32>
    %548 = vector.extract_strided_slice %374 {offsets = [0, 0], sizes = [8, 7], strides = [1, 1]} : vector<8x8xf32> to vector<8x7xf32>
    %549 = tpu.concatenate %547, %548 in 1 : vector<8x1xf32>, vector<8x7xf32> -> vector<8x8xf32>
    %550 = vector.extract_strided_slice %534 {offsets = [2, 0], sizes = [1, 8], strides = [1, 1]} : vector<9x8xf32> to vector<1x8xf32>
    %551 = vector.broadcast %550 : vector<1x8xf32> to vector<8x8xf32>
    %552 = arith.mulf %549, %551 : vector<8x8xf32>
    %553 = vector.extract_strided_slice %374 {offsets = [0, 7], sizes = [8, 1], strides = [1, 1]} : vector<8x8xf32> to vector<8x1xf32>
    %554 = vector.extract_strided_slice %374 {offsets = [0, 0], sizes = [8, 7], strides = [1, 1]} : vector<8x8xf32> to vector<8x7xf32>
    %555 = tpu.concatenate %553, %554 in 1 : vector<8x1xf32>, vector<8x7xf32> -> vector<8x8xf32>
    %556 = vector.extract_strided_slice %534 {offsets = [3, 0], sizes = [1, 8], strides = [1, 1]} : vector<9x8xf32> to vector<1x8xf32>
    %557 = vector.broadcast %556 : vector<1x8xf32> to vector<8x8xf32>
    %558 = arith.mulf %555, %557 : vector<8x8xf32>
    %559 = vector.extract_strided_slice %534 {offsets = [4, 0], sizes = [1, 8], strides = [1, 1]} : vector<9x8xf32> to vector<1x8xf32>
    %560 = vector.broadcast %559 : vector<1x8xf32> to vector<8x8xf32>
    %561 = arith.mulf %374, %560 : vector<8x8xf32>
    %562 = vector.extract_strided_slice %374 {offsets = [0, 1], sizes = [8, 7], strides = [1, 1]} : vector<8x8xf32> to vector<8x7xf32>
    %563 = vector.extract_strided_slice %374 {offsets = [0, 0], sizes = [8, 1], strides = [1, 1]} : vector<8x8xf32> to vector<8x1xf32>
    %564 = tpu.concatenate %562, %563 in 1 : vector<8x7xf32>, vector<8x1xf32> -> vector<8x8xf32>
    %565 = vector.extract_strided_slice %534 {offsets = [5, 0], sizes = [1, 8], strides = [1, 1]} : vector<9x8xf32> to vector<1x8xf32>
    %566 = vector.broadcast %565 : vector<1x8xf32> to vector<8x8xf32>
    %567 = arith.mulf %564, %566 : vector<8x8xf32>
    %568 = vector.extract_strided_slice %374 {offsets = [0, 1], sizes = [8, 7], strides = [1, 1]} : vector<8x8xf32> to vector<8x7xf32>
    %569 = vector.extract_strided_slice %374 {offsets = [0, 0], sizes = [8, 1], strides = [1, 1]} : vector<8x8xf32> to vector<8x1xf32>
    %570 = tpu.concatenate %568, %569 in 1 : vector<8x7xf32>, vector<8x1xf32> -> vector<8x8xf32>
    %571 = vector.extract_strided_slice %534 {offsets = [6, 0], sizes = [1, 8], strides = [1, 1]} : vector<9x8xf32> to vector<1x8xf32>
    %572 = vector.broadcast %571 : vector<1x8xf32> to vector<8x8xf32>
    %573 = arith.mulf %570, %572 : vector<8x8xf32>
    %574 = vector.extract_strided_slice %374 {offsets = [0, 2], sizes = [8, 6], strides = [1, 1]} : vector<8x8xf32> to vector<8x6xf32>
    %575 = vector.extract_strided_slice %374 {offsets = [0, 0], sizes = [8, 2], strides = [1, 1]} : vector<8x8xf32> to vector<8x2xf32>
    %576 = tpu.concatenate %574, %575 in 1 : vector<8x6xf32>, vector<8x2xf32> -> vector<8x8xf32>
    %577 = vector.extract_strided_slice %534 {offsets = [7, 0], sizes = [1, 8], strides = [1, 1]} : vector<9x8xf32> to vector<1x8xf32>
    %578 = vector.broadcast %577 : vector<1x8xf32> to vector<8x8xf32>
    %579 = arith.mulf %576, %578 : vector<8x8xf32>
    %580 = vector.extract_strided_slice %374 {offsets = [0, 3], sizes = [8, 5], strides = [1, 1]} : vector<8x8xf32> to vector<8x5xf32>
    %581 = vector.extract_strided_slice %374 {offsets = [0, 0], sizes = [8, 3], strides = [1, 1]} : vector<8x8xf32> to vector<8x3xf32>
    %582 = tpu.concatenate %580, %581 in 1 : vector<8x5xf32>, vector<8x3xf32> -> vector<8x8xf32>
    %583 = vector.extract_strided_slice %534 {offsets = [8, 0], sizes = [1, 8], strides = [1, 1]} : vector<9x8xf32> to vector<1x8xf32>
    %584 = vector.broadcast %583 : vector<1x8xf32> to vector<8x8xf32>
    %585 = arith.mulf %582, %584 : vector<8x8xf32>
    %586 = tpu.concatenate %540, %546, %552, %558, %561, %567, %573, %579, %585 in 0 : vector<8x8xf32>, vector<8x8xf32>, vector<8x8xf32>, vector<8x8xf32>, vector<8x8xf32>, vector<8x8xf32>, vector<8x8xf32>, vector<8x8xf32>, vector<8x8xf32> -> vector<72x8xf32>
    %587 = tpu.concatenate %427, %480, %533, %586 in 1 : vector<72x512xf32>, vector<72x128xf32>, vector<72x32xf32>, vector<72x8xf32> -> vector<72x680xf32>
    %cst_64 = arith.constant dense<0.000000e+00> : vector<8x680xf32>
    %588 = tpu.matmul %344, %587, %cst_64 {dimension_numbers = #tpu.dot_dimension_numbers<[1], [0], [0], [1], [0, 0, 1, 1], [], []>} : vector<8x72xf32>, vector<72x680xf32>, vector<8x680xf32> -> vector<8x680xf32>
    %cst_65 = arith.constant 0.000000e+00 : f32
    %589 = vector.broadcast %cst_65 : f32 to vector<8x680xf32>
    %590 = arith.maximumf %588, %589 : vector<8x680xf32>
    %591 = vector.extract_strided_slice %590 {offsets = [0, 0], sizes = [8, 512], strides = [1, 1]} : vector<8x680xf32> to vector<8x512xf32>
    %cst_66 = arith.constant dense<0.000000e+00> : vector<8xf32>
    %592 = vector.multi_reduction <add>, %591, %cst_66 [1] : vector<8x512xf32> to vector<8xf32>
    %593 = vector.shape_cast %592 : vector<8xf32> to vector<8x1xf32>
    %cst_67 = arith.constant 5.120000e+02 : f32
    %594 = vector.broadcast %cst_67 : f32 to vector<8x1xf32>
    %595 = arith.divf %593, %594 : vector<8x1xf32>
    %596 = arith.mulf %591, %591 : vector<8x512xf32>
    %cst_68 = arith.constant dense<0.000000e+00> : vector<8xf32>
    %597 = vector.multi_reduction <add>, %596, %cst_68 [1] : vector<8x512xf32> to vector<8xf32>
    %598 = vector.shape_cast %597 : vector<8xf32> to vector<8x1xf32>
    %cst_69 = arith.constant 5.120000e+02 : f32
    %599 = vector.broadcast %cst_69 : f32 to vector<8x1xf32>
    %600 = arith.divf %598, %599 : vector<8x1xf32>
    %601 = arith.mulf %595, %595 : vector<8x1xf32>
    %602 = arith.subf %600, %601 : vector<8x1xf32>
    %c4 = arith.constant 4 : index
    %603 = memref.load %arg0[%c4] : memref<12xf32, #tpu.memory_space<smem>>
    %cst_70 = arith.constant 9.99999974E-6 : f32
    %604 = vector.broadcast %cst_70 : f32 to vector<8x1xf32>
    %605 = arith.addf %602, %604 : vector<8x1xf32>
    %606 = math.rsqrt %605 : vector<8x1xf32>
    %607 = vector.broadcast %603 : f32 to vector<8x1xf32>
    %608 = arith.mulf %607, %606 : vector<8x1xf32>
    %609 = vector.broadcast %608 : vector<8x1xf32> to vector<8x512xf32>
    %610 = arith.mulf %591, %609 : vector<8x512xf32>
    %611 = arith.mulf %595, %608 : vector<8x1xf32>
    %612 = vector.broadcast %611 : vector<8x1xf32> to vector<8x512xf32>
    %613 = arith.subf %610, %612 : vector<8x512xf32>
    %614 = vector.extract_strided_slice %590 {offsets = [0, 512], sizes = [8, 128], strides = [1, 1]} : vector<8x680xf32> to vector<8x128xf32>
    %cst_71 = arith.constant dense<0.000000e+00> : vector<8xf32>
    %615 = vector.multi_reduction <add>, %614, %cst_71 [1] : vector<8x128xf32> to vector<8xf32>
    %616 = vector.shape_cast %615 : vector<8xf32> to vector<8x1xf32>
    %cst_72 = arith.constant 1.280000e+02 : f32
    %617 = vector.broadcast %cst_72 : f32 to vector<8x1xf32>
    %618 = arith.divf %616, %617 : vector<8x1xf32>
    %619 = arith.mulf %614, %614 : vector<8x128xf32>
    %cst_73 = arith.constant dense<0.000000e+00> : vector<8xf32>
    %620 = vector.multi_reduction <add>, %619, %cst_73 [1] : vector<8x128xf32> to vector<8xf32>
    %621 = vector.shape_cast %620 : vector<8xf32> to vector<8x1xf32>
    %cst_74 = arith.constant 1.280000e+02 : f32
    %622 = vector.broadcast %cst_74 : f32 to vector<8x1xf32>
    %623 = arith.divf %621, %622 : vector<8x1xf32>
    %624 = arith.mulf %618, %618 : vector<8x1xf32>
    %625 = arith.subf %623, %624 : vector<8x1xf32>
    %c5 = arith.constant 5 : index
    %626 = memref.load %arg0[%c5] : memref<12xf32, #tpu.memory_space<smem>>
    %cst_75 = arith.constant 9.99999974E-6 : f32
    %627 = vector.broadcast %cst_75 : f32 to vector<8x1xf32>
    %628 = arith.addf %625, %627 : vector<8x1xf32>
    %629 = math.rsqrt %628 : vector<8x1xf32>
    %630 = vector.broadcast %626 : f32 to vector<8x1xf32>
    %631 = arith.mulf %630, %629 : vector<8x1xf32>
    %632 = vector.broadcast %631 : vector<8x1xf32> to vector<8x128xf32>
    %633 = arith.mulf %614, %632 : vector<8x128xf32>
    %634 = arith.mulf %618, %631 : vector<8x1xf32>
    %635 = vector.broadcast %634 : vector<8x1xf32> to vector<8x128xf32>
    %636 = arith.subf %633, %635 : vector<8x128xf32>
    %637 = vector.extract_strided_slice %590 {offsets = [0, 640], sizes = [8, 32], strides = [1, 1]} : vector<8x680xf32> to vector<8x32xf32>
    %cst_76 = arith.constant dense<0.000000e+00> : vector<8xf32>
    %638 = vector.multi_reduction <add>, %637, %cst_76 [1] : vector<8x32xf32> to vector<8xf32>
    %639 = vector.shape_cast %638 : vector<8xf32> to vector<8x1xf32>
    %cst_77 = arith.constant 3.200000e+01 : f32
    %640 = vector.broadcast %cst_77 : f32 to vector<8x1xf32>
    %641 = arith.divf %639, %640 : vector<8x1xf32>
    %642 = arith.mulf %637, %637 : vector<8x32xf32>
    %cst_78 = arith.constant dense<0.000000e+00> : vector<8xf32>
    %643 = vector.multi_reduction <add>, %642, %cst_78 [1] : vector<8x32xf32> to vector<8xf32>
    %644 = vector.shape_cast %643 : vector<8xf32> to vector<8x1xf32>
    %cst_79 = arith.constant 3.200000e+01 : f32
    %645 = vector.broadcast %cst_79 : f32 to vector<8x1xf32>
    %646 = arith.divf %644, %645 : vector<8x1xf32>
    %647 = arith.mulf %641, %641 : vector<8x1xf32>
    %648 = arith.subf %646, %647 : vector<8x1xf32>
    %c6 = arith.constant 6 : index
    %649 = memref.load %arg0[%c6] : memref<12xf32, #tpu.memory_space<smem>>
    %cst_80 = arith.constant 9.99999974E-6 : f32
    %650 = vector.broadcast %cst_80 : f32 to vector<8x1xf32>
    %651 = arith.addf %648, %650 : vector<8x1xf32>
    %652 = math.rsqrt %651 : vector<8x1xf32>
    %653 = vector.broadcast %649 : f32 to vector<8x1xf32>
    %654 = arith.mulf %653, %652 : vector<8x1xf32>
    %655 = vector.broadcast %654 : vector<8x1xf32> to vector<8x32xf32>
    %656 = arith.mulf %637, %655 : vector<8x32xf32>
    %657 = arith.mulf %641, %654 : vector<8x1xf32>
    %658 = vector.broadcast %657 : vector<8x1xf32> to vector<8x32xf32>
    %659 = arith.subf %656, %658 : vector<8x32xf32>
    %660 = vector.extract_strided_slice %590 {offsets = [0, 672], sizes = [8, 8], strides = [1, 1]} : vector<8x680xf32> to vector<8x8xf32>
    %cst_81 = arith.constant dense<0.000000e+00> : vector<8xf32>
    %661 = vector.multi_reduction <add>, %660, %cst_81 [1] : vector<8x8xf32> to vector<8xf32>
    %662 = vector.shape_cast %661 : vector<8xf32> to vector<8x1xf32>
    %cst_82 = arith.constant 8.000000e+00 : f32
    %663 = vector.broadcast %cst_82 : f32 to vector<8x1xf32>
    %664 = arith.divf %662, %663 : vector<8x1xf32>
    %665 = arith.mulf %660, %660 : vector<8x8xf32>
    %cst_83 = arith.constant dense<0.000000e+00> : vector<8xf32>
    %666 = vector.multi_reduction <add>, %665, %cst_83 [1] : vector<8x8xf32> to vector<8xf32>
    %667 = vector.shape_cast %666 : vector<8xf32> to vector<8x1xf32>
    %cst_84 = arith.constant 8.000000e+00 : f32
    %668 = vector.broadcast %cst_84 : f32 to vector<8x1xf32>
    %669 = arith.divf %667, %668 : vector<8x1xf32>
    %670 = arith.mulf %664, %664 : vector<8x1xf32>
    %671 = arith.subf %669, %670 : vector<8x1xf32>
    %c7 = arith.constant 7 : index
    %672 = memref.load %arg0[%c7] : memref<12xf32, #tpu.memory_space<smem>>
    %cst_85 = arith.constant 9.99999974E-6 : f32
    %673 = vector.broadcast %cst_85 : f32 to vector<8x1xf32>
    %674 = arith.addf %671, %673 : vector<8x1xf32>
    %675 = math.rsqrt %674 : vector<8x1xf32>
    %676 = vector.broadcast %672 : f32 to vector<8x1xf32>
    %677 = arith.mulf %676, %675 : vector<8x1xf32>
    %678 = vector.broadcast %677 : vector<8x1xf32> to vector<8x8xf32>
    %679 = arith.mulf %660, %678 : vector<8x8xf32>
    %680 = arith.mulf %664, %677 : vector<8x1xf32>
    %681 = vector.broadcast %680 : vector<8x1xf32> to vector<8x8xf32>
    %682 = arith.subf %679, %681 : vector<8x8xf32>
    %683 = tpu.concatenate %636, %659, %682 in 1 : vector<8x128xf32>, vector<8x32xf32>, vector<8x8xf32> -> vector<8x168xf32>
    %c0_86 = arith.constant 0 : index
    %c0_87 = arith.constant 0 : index
    %684 = vector.load %arg12[%c0_86, %c0_87] : memref<168x512xf32, #tpu.memory_space<vmem>>, vector<168x512xf32>
    %cst_88 = arith.constant dense<0.000000e+00> : vector<8x512xf32>
    %685 = tpu.matmul %683, %684, %cst_88 {dimension_numbers = #tpu.dot_dimension_numbers<[1], [0], [0], [1], [0, 0, 1, 1], [], []>} : vector<8x168xf32>, vector<168x512xf32>, vector<8x512xf32> -> vector<8x512xf32>
    %686 = arith.addf %613, %685 : vector<8x512xf32>
    %c0_89 = arith.constant 0 : index
    %c0_90 = arith.constant 0 : index
    %687 = vector.load %arg4[%c0_89, %c0_90] : memref<10x72xf32, #tpu.memory_space<vmem>>, vector<10x72xf32>
    %688 = vector.extract_strided_slice %686 {offsets = [0, 1], sizes = [8, 511], strides = [1, 1]} : vector<8x512xf32> to vector<8x511xf32>
    %689 = vector.extract_strided_slice %686 {offsets = [0, 0], sizes = [8, 1], strides = [1, 1]} : vector<8x512xf32> to vector<8x1xf32>
    %690 = tpu.concatenate %688, %689 in 1 : vector<8x511xf32>, vector<8x1xf32> -> vector<8x512xf32>
    %691 = arith.maximumf %686, %690 : vector<8x512xf32>
    %692 = vector.extract_strided_slice %691 {offsets = [0, 16], sizes = [8, 496], strides = [1, 1]} : vector<8x512xf32> to vector<8x496xf32>
    %693 = vector.extract_strided_slice %691 {offsets = [0, 0], sizes = [8, 16], strides = [1, 1]} : vector<8x512xf32> to vector<8x16xf32>
    %694 = tpu.concatenate %692, %693 in 1 : vector<8x496xf32>, vector<8x16xf32> -> vector<8x512xf32>
    %695 = arith.maximumf %691, %694 : vector<8x512xf32>
    %c0_91 = arith.constant 0 : index
    %c0_92 = arith.constant 0 : index
    %696 = vector.load %arg9[%c0_91, %c0_92] : memref<512x128xf32, #tpu.memory_space<vmem>>, vector<512x128xf32>
    %cst_93 = arith.constant dense<0.000000e+00> : vector<8x128xf32>
    %697 = tpu.matmul %695, %696, %cst_93 {dimension_numbers = #tpu.dot_dimension_numbers<[1], [0], [0], [1], [0, 0, 1, 1], [], []>} : vector<8x512xf32>, vector<512x128xf32>, vector<8x128xf32> -> vector<8x128xf32>
    %698 = vector.extract_strided_slice %697 {offsets = [0, 1], sizes = [8, 127], strides = [1, 1]} : vector<8x128xf32> to vector<8x127xf32>
    %699 = vector.extract_strided_slice %697 {offsets = [0, 0], sizes = [8, 1], strides = [1, 1]} : vector<8x128xf32> to vector<8x1xf32>
    %700 = tpu.concatenate %698, %699 in 1 : vector<8x127xf32>, vector<8x1xf32> -> vector<8x128xf32>
    %701 = arith.maximumf %697, %700 : vector<8x128xf32>
    %702 = vector.extract_strided_slice %701 {offsets = [0, 8], sizes = [8, 120], strides = [1, 1]} : vector<8x128xf32> to vector<8x120xf32>
    %703 = vector.extract_strided_slice %701 {offsets = [0, 0], sizes = [8, 8], strides = [1, 1]} : vector<8x128xf32> to vector<8x8xf32>
    %704 = tpu.concatenate %702, %703 in 1 : vector<8x120xf32>, vector<8x8xf32> -> vector<8x128xf32>
    %705 = arith.maximumf %701, %704 : vector<8x128xf32>
    %c0_94 = arith.constant 0 : index
    %c0_95 = arith.constant 0 : index
    %706 = vector.load %arg10[%c0_94, %c0_95] : memref<128x32xf32, #tpu.memory_space<vmem>>, vector<128x32xf32>
    %cst_96 = arith.constant dense<0.000000e+00> : vector<8x32xf32>
    %707 = tpu.matmul %705, %706, %cst_96 {dimension_numbers = #tpu.dot_dimension_numbers<[1], [0], [0], [1], [0, 0, 1, 1], [], []>} : vector<8x128xf32>, vector<128x32xf32>, vector<8x32xf32> -> vector<8x32xf32>
    %708 = vector.extract_strided_slice %707 {offsets = [0, 1], sizes = [8, 31], strides = [1, 1]} : vector<8x32xf32> to vector<8x31xf32>
    %709 = vector.extract_strided_slice %707 {offsets = [0, 0], sizes = [8, 1], strides = [1, 1]} : vector<8x32xf32> to vector<8x1xf32>
    %710 = tpu.concatenate %708, %709 in 1 : vector<8x31xf32>, vector<8x1xf32> -> vector<8x32xf32>
    %711 = arith.maximumf %707, %710 : vector<8x32xf32>
    %712 = vector.extract_strided_slice %711 {offsets = [0, 4], sizes = [8, 28], strides = [1, 1]} : vector<8x32xf32> to vector<8x28xf32>
    %713 = vector.extract_strided_slice %711 {offsets = [0, 0], sizes = [8, 4], strides = [1, 1]} : vector<8x32xf32> to vector<8x4xf32>
    %714 = tpu.concatenate %712, %713 in 1 : vector<8x28xf32>, vector<8x4xf32> -> vector<8x32xf32>
    %715 = arith.maximumf %711, %714 : vector<8x32xf32>
    %c0_97 = arith.constant 0 : index
    %c0_98 = arith.constant 0 : index
    %716 = vector.load %arg11[%c0_97, %c0_98] : memref<32x8xf32, #tpu.memory_space<vmem>>, vector<32x8xf32>
    %cst_99 = arith.constant dense<0.000000e+00> : vector<8x8xf32>
    %717 = tpu.matmul %715, %716, %cst_99 {dimension_numbers = #tpu.dot_dimension_numbers<[1], [0], [0], [1], [0, 0, 1, 1], [], []>} : vector<8x32xf32>, vector<32x8xf32>, vector<8x8xf32> -> vector<8x8xf32>
    %c0_100 = arith.constant 0 : index
    %c0_101 = arith.constant 0 : index
    %718 = vector.load %arg5[%c0_100, %c0_101] : memref<9x512xf32, #tpu.memory_space<vmem>>, vector<9x512xf32>
    %719 = vector.extract_strided_slice %686 {offsets = [0, 495], sizes = [8, 17], strides = [1, 1]} : vector<8x512xf32> to vector<8x17xf32>
    %720 = vector.extract_strided_slice %686 {offsets = [0, 0], sizes = [8, 495], strides = [1, 1]} : vector<8x512xf32> to vector<8x495xf32>
    %721 = tpu.concatenate %719, %720 in 1 : vector<8x17xf32>, vector<8x495xf32> -> vector<8x512xf32>
    %722 = vector.extract_strided_slice %718 {offsets = [0, 0], sizes = [1, 512], strides = [1, 1]} : vector<9x512xf32> to vector<1x512xf32>
    %723 = vector.broadcast %722 : vector<1x512xf32> to vector<8x512xf32>
    %724 = arith.mulf %721, %723 : vector<8x512xf32>
    %725 = vector.extract_strided_slice %686 {offsets = [0, 496], sizes = [8, 16], strides = [1, 1]} : vector<8x512xf32> to vector<8x16xf32>
    %726 = vector.extract_strided_slice %686 {offsets = [0, 0], sizes = [8, 496], strides = [1, 1]} : vector<8x512xf32> to vector<8x496xf32>
    %727 = tpu.concatenate %725, %726 in 1 : vector<8x16xf32>, vector<8x496xf32> -> vector<8x512xf32>
    %728 = vector.extract_strided_slice %718 {offsets = [1, 0], sizes = [1, 512], strides = [1, 1]} : vector<9x512xf32> to vector<1x512xf32>
    %729 = vector.broadcast %728 : vector<1x512xf32> to vector<8x512xf32>
    %730 = arith.mulf %727, %729 : vector<8x512xf32>
    %731 = vector.extract_strided_slice %686 {offsets = [0, 497], sizes = [8, 15], strides = [1, 1]} : vector<8x512xf32> to vector<8x15xf32>
    %732 = vector.extract_strided_slice %686 {offsets = [0, 0], sizes = [8, 497], strides = [1, 1]} : vector<8x512xf32> to vector<8x497xf32>
    %733 = tpu.concatenate %731, %732 in 1 : vector<8x15xf32>, vector<8x497xf32> -> vector<8x512xf32>
    %734 = vector.extract_strided_slice %718 {offsets = [2, 0], sizes = [1, 512], strides = [1, 1]} : vector<9x512xf32> to vector<1x512xf32>
    %735 = vector.broadcast %734 : vector<1x512xf32> to vector<8x512xf32>
    %736 = arith.mulf %733, %735 : vector<8x512xf32>
    %737 = vector.extract_strided_slice %686 {offsets = [0, 511], sizes = [8, 1], strides = [1, 1]} : vector<8x512xf32> to vector<8x1xf32>
    %738 = vector.extract_strided_slice %686 {offsets = [0, 0], sizes = [8, 511], strides = [1, 1]} : vector<8x512xf32> to vector<8x511xf32>
    %739 = tpu.concatenate %737, %738 in 1 : vector<8x1xf32>, vector<8x511xf32> -> vector<8x512xf32>
    %740 = vector.extract_strided_slice %718 {offsets = [3, 0], sizes = [1, 512], strides = [1, 1]} : vector<9x512xf32> to vector<1x512xf32>
    %741 = vector.broadcast %740 : vector<1x512xf32> to vector<8x512xf32>
    %742 = arith.mulf %739, %741 : vector<8x512xf32>
    %743 = vector.extract_strided_slice %718 {offsets = [4, 0], sizes = [1, 512], strides = [1, 1]} : vector<9x512xf32> to vector<1x512xf32>
    %744 = vector.broadcast %743 : vector<1x512xf32> to vector<8x512xf32>
    %745 = arith.mulf %686, %744 : vector<8x512xf32>
    %746 = vector.extract_strided_slice %686 {offsets = [0, 1], sizes = [8, 511], strides = [1, 1]} : vector<8x512xf32> to vector<8x511xf32>
    %747 = vector.extract_strided_slice %686 {offsets = [0, 0], sizes = [8, 1], strides = [1, 1]} : vector<8x512xf32> to vector<8x1xf32>
    %748 = tpu.concatenate %746, %747 in 1 : vector<8x511xf32>, vector<8x1xf32> -> vector<8x512xf32>
    %749 = vector.extract_strided_slice %718 {offsets = [5, 0], sizes = [1, 512], strides = [1, 1]} : vector<9x512xf32> to vector<1x512xf32>
    %750 = vector.broadcast %749 : vector<1x512xf32> to vector<8x512xf32>
    %751 = arith.mulf %748, %750 : vector<8x512xf32>
    %752 = vector.extract_strided_slice %686 {offsets = [0, 15], sizes = [8, 497], strides = [1, 1]} : vector<8x512xf32> to vector<8x497xf32>
    %753 = vector.extract_strided_slice %686 {offsets = [0, 0], sizes = [8, 15], strides = [1, 1]} : vector<8x512xf32> to vector<8x15xf32>
    %754 = tpu.concatenate %752, %753 in 1 : vector<8x497xf32>, vector<8x15xf32> -> vector<8x512xf32>
    %755 = vector.extract_strided_slice %718 {offsets = [6, 0], sizes = [1, 512], strides = [1, 1]} : vector<9x512xf32> to vector<1x512xf32>
    %756 = vector.broadcast %755 : vector<1x512xf32> to vector<8x512xf32>
    %757 = arith.mulf %754, %756 : vector<8x512xf32>
    %758 = vector.extract_strided_slice %686 {offsets = [0, 16], sizes = [8, 496], strides = [1, 1]} : vector<8x512xf32> to vector<8x496xf32>
    %759 = vector.extract_strided_slice %686 {offsets = [0, 0], sizes = [8, 16], strides = [1, 1]} : vector<8x512xf32> to vector<8x16xf32>
    %760 = tpu.concatenate %758, %759 in 1 : vector<8x496xf32>, vector<8x16xf32> -> vector<8x512xf32>
    %761 = vector.extract_strided_slice %718 {offsets = [7, 0], sizes = [1, 512], strides = [1, 1]} : vector<9x512xf32> to vector<1x512xf32>
    %762 = vector.broadcast %761 : vector<1x512xf32> to vector<8x512xf32>
    %763 = arith.mulf %760, %762 : vector<8x512xf32>
    %764 = vector.extract_strided_slice %686 {offsets = [0, 17], sizes = [8, 495], strides = [1, 1]} : vector<8x512xf32> to vector<8x495xf32>
    %765 = vector.extract_strided_slice %686 {offsets = [0, 0], sizes = [8, 17], strides = [1, 1]} : vector<8x512xf32> to vector<8x17xf32>
    %766 = tpu.concatenate %764, %765 in 1 : vector<8x495xf32>, vector<8x17xf32> -> vector<8x512xf32>
    %767 = vector.extract_strided_slice %718 {offsets = [8, 0], sizes = [1, 512], strides = [1, 1]} : vector<9x512xf32> to vector<1x512xf32>
    %768 = vector.broadcast %767 : vector<1x512xf32> to vector<8x512xf32>
    %769 = arith.mulf %766, %768 : vector<8x512xf32>
    %770 = tpu.concatenate %724, %730, %736, %742, %745, %751, %757, %763, %769 in 0 : vector<8x512xf32>, vector<8x512xf32>, vector<8x512xf32>, vector<8x512xf32>, vector<8x512xf32>, vector<8x512xf32>, vector<8x512xf32>, vector<8x512xf32>, vector<8x512xf32> -> vector<72x512xf32>
    %c0_102 = arith.constant 0 : index
    %c0_103 = arith.constant 0 : index
    %771 = vector.load %arg6[%c0_102, %c0_103] : memref<9x128xf32, #tpu.memory_space<vmem>>, vector<9x128xf32>
    %772 = vector.extract_strided_slice %697 {offsets = [0, 119], sizes = [8, 9], strides = [1, 1]} : vector<8x128xf32> to vector<8x9xf32>
    %773 = vector.extract_strided_slice %697 {offsets = [0, 0], sizes = [8, 119], strides = [1, 1]} : vector<8x128xf32> to vector<8x119xf32>
    %774 = tpu.concatenate %772, %773 in 1 : vector<8x9xf32>, vector<8x119xf32> -> vector<8x128xf32>
    %775 = vector.extract_strided_slice %771 {offsets = [0, 0], sizes = [1, 128], strides = [1, 1]} : vector<9x128xf32> to vector<1x128xf32>
    %776 = vector.broadcast %775 : vector<1x128xf32> to vector<8x128xf32>
    %777 = arith.mulf %774, %776 : vector<8x128xf32>
    %778 = vector.extract_strided_slice %697 {offsets = [0, 120], sizes = [8, 8], strides = [1, 1]} : vector<8x128xf32> to vector<8x8xf32>
    %779 = vector.extract_strided_slice %697 {offsets = [0, 0], sizes = [8, 120], strides = [1, 1]} : vector<8x128xf32> to vector<8x120xf32>
    %780 = tpu.concatenate %778, %779 in 1 : vector<8x8xf32>, vector<8x120xf32> -> vector<8x128xf32>
    %781 = vector.extract_strided_slice %771 {offsets = [1, 0], sizes = [1, 128], strides = [1, 1]} : vector<9x128xf32> to vector<1x128xf32>
    %782 = vector.broadcast %781 : vector<1x128xf32> to vector<8x128xf32>
    %783 = arith.mulf %780, %782 : vector<8x128xf32>
    %784 = vector.extract_strided_slice %697 {offsets = [0, 121], sizes = [8, 7], strides = [1, 1]} : vector<8x128xf32> to vector<8x7xf32>
    %785 = vector.extract_strided_slice %697 {offsets = [0, 0], sizes = [8, 121], strides = [1, 1]} : vector<8x128xf32> to vector<8x121xf32>
    %786 = tpu.concatenate %784, %785 in 1 : vector<8x7xf32>, vector<8x121xf32> -> vector<8x128xf32>
    %787 = vector.extract_strided_slice %771 {offsets = [2, 0], sizes = [1, 128], strides = [1, 1]} : vector<9x128xf32> to vector<1x128xf32>
    %788 = vector.broadcast %787 : vector<1x128xf32> to vector<8x128xf32>
    %789 = arith.mulf %786, %788 : vector<8x128xf32>
    %790 = vector.extract_strided_slice %697 {offsets = [0, 127], sizes = [8, 1], strides = [1, 1]} : vector<8x128xf32> to vector<8x1xf32>
    %791 = vector.extract_strided_slice %697 {offsets = [0, 0], sizes = [8, 127], strides = [1, 1]} : vector<8x128xf32> to vector<8x127xf32>
    %792 = tpu.concatenate %790, %791 in 1 : vector<8x1xf32>, vector<8x127xf32> -> vector<8x128xf32>
    %793 = vector.extract_strided_slice %771 {offsets = [3, 0], sizes = [1, 128], strides = [1, 1]} : vector<9x128xf32> to vector<1x128xf32>
    %794 = vector.broadcast %793 : vector<1x128xf32> to vector<8x128xf32>
    %795 = arith.mulf %792, %794 : vector<8x128xf32>
    %796 = vector.extract_strided_slice %771 {offsets = [4, 0], sizes = [1, 128], strides = [1, 1]} : vector<9x128xf32> to vector<1x128xf32>
    %797 = vector.broadcast %796 : vector<1x128xf32> to vector<8x128xf32>
    %798 = arith.mulf %697, %797 : vector<8x128xf32>
    %799 = vector.extract_strided_slice %697 {offsets = [0, 1], sizes = [8, 127], strides = [1, 1]} : vector<8x128xf32> to vector<8x127xf32>
    %800 = vector.extract_strided_slice %697 {offsets = [0, 0], sizes = [8, 1], strides = [1, 1]} : vector<8x128xf32> to vector<8x1xf32>
    %801 = tpu.concatenate %799, %800 in 1 : vector<8x127xf32>, vector<8x1xf32> -> vector<8x128xf32>
    %802 = vector.extract_strided_slice %771 {offsets = [5, 0], sizes = [1, 128], strides = [1, 1]} : vector<9x128xf32> to vector<1x128xf32>
    %803 = vector.broadcast %802 : vector<1x128xf32> to vector<8x128xf32>
    %804 = arith.mulf %801, %803 : vector<8x128xf32>
    %805 = vector.extract_strided_slice %697 {offsets = [0, 7], sizes = [8, 121], strides = [1, 1]} : vector<8x128xf32> to vector<8x121xf32>
    %806 = vector.extract_strided_slice %697 {offsets = [0, 0], sizes = [8, 7], strides = [1, 1]} : vector<8x128xf32> to vector<8x7xf32>
    %807 = tpu.concatenate %805, %806 in 1 : vector<8x121xf32>, vector<8x7xf32> -> vector<8x128xf32>
    %808 = vector.extract_strided_slice %771 {offsets = [6, 0], sizes = [1, 128], strides = [1, 1]} : vector<9x128xf32> to vector<1x128xf32>
    %809 = vector.broadcast %808 : vector<1x128xf32> to vector<8x128xf32>
    %810 = arith.mulf %807, %809 : vector<8x128xf32>
    %811 = vector.extract_strided_slice %697 {offsets = [0, 8], sizes = [8, 120], strides = [1, 1]} : vector<8x128xf32> to vector<8x120xf32>
    %812 = vector.extract_strided_slice %697 {offsets = [0, 0], sizes = [8, 8], strides = [1, 1]} : vector<8x128xf32> to vector<8x8xf32>
    %813 = tpu.concatenate %811, %812 in 1 : vector<8x120xf32>, vector<8x8xf32> -> vector<8x128xf32>
    %814 = vector.extract_strided_slice %771 {offsets = [7, 0], sizes = [1, 128], strides = [1, 1]} : vector<9x128xf32> to vector<1x128xf32>
    %815 = vector.broadcast %814 : vector<1x128xf32> to vector<8x128xf32>
    %816 = arith.mulf %813, %815 : vector<8x128xf32>
    %817 = vector.extract_strided_slice %697 {offsets = [0, 9], sizes = [8, 119], strides = [1, 1]} : vector<8x128xf32> to vector<8x119xf32>
    %818 = vector.extract_strided_slice %697 {offsets = [0, 0], sizes = [8, 9], strides = [1, 1]} : vector<8x128xf32> to vector<8x9xf32>
    %819 = tpu.concatenate %817, %818 in 1 : vector<8x119xf32>, vector<8x9xf32> -> vector<8x128xf32>
    %820 = vector.extract_strided_slice %771 {offsets = [8, 0], sizes = [1, 128], strides = [1, 1]} : vector<9x128xf32> to vector<1x128xf32>
    %821 = vector.broadcast %820 : vector<1x128xf32> to vector<8x128xf32>
    %822 = arith.mulf %819, %821 : vector<8x128xf32>
    %823 = tpu.concatenate %777, %783, %789, %795, %798, %804, %810, %816, %822 in 0 : vector<8x128xf32>, vector<8x128xf32>, vector<8x128xf32>, vector<8x128xf32>, vector<8x128xf32>, vector<8x128xf32>, vector<8x128xf32>, vector<8x128xf32>, vector<8x128xf32> -> vector<72x128xf32>
    %c0_104 = arith.constant 0 : index
    %c0_105 = arith.constant 0 : index
    %824 = vector.load %arg7[%c0_104, %c0_105] : memref<9x32xf32, #tpu.memory_space<vmem>>, vector<9x32xf32>
    %825 = vector.extract_strided_slice %707 {offsets = [0, 27], sizes = [8, 5], strides = [1, 1]} : vector<8x32xf32> to vector<8x5xf32>
    %826 = vector.extract_strided_slice %707 {offsets = [0, 0], sizes = [8, 27], strides = [1, 1]} : vector<8x32xf32> to vector<8x27xf32>
    %827 = tpu.concatenate %825, %826 in 1 : vector<8x5xf32>, vector<8x27xf32> -> vector<8x32xf32>
    %828 = vector.extract_strided_slice %824 {offsets = [0, 0], sizes = [1, 32], strides = [1, 1]} : vector<9x32xf32> to vector<1x32xf32>
    %829 = vector.broadcast %828 : vector<1x32xf32> to vector<8x32xf32>
    %830 = arith.mulf %827, %829 : vector<8x32xf32>
    %831 = vector.extract_strided_slice %707 {offsets = [0, 28], sizes = [8, 4], strides = [1, 1]} : vector<8x32xf32> to vector<8x4xf32>
    %832 = vector.extract_strided_slice %707 {offsets = [0, 0], sizes = [8, 28], strides = [1, 1]} : vector<8x32xf32> to vector<8x28xf32>
    %833 = tpu.concatenate %831, %832 in 1 : vector<8x4xf32>, vector<8x28xf32> -> vector<8x32xf32>
    %834 = vector.extract_strided_slice %824 {offsets = [1, 0], sizes = [1, 32], strides = [1, 1]} : vector<9x32xf32> to vector<1x32xf32>
    %835 = vector.broadcast %834 : vector<1x32xf32> to vector<8x32xf32>
    %836 = arith.mulf %833, %835 : vector<8x32xf32>
    %837 = vector.extract_strided_slice %707 {offsets = [0, 29], sizes = [8, 3], strides = [1, 1]} : vector<8x32xf32> to vector<8x3xf32>
    %838 = vector.extract_strided_slice %707 {offsets = [0, 0], sizes = [8, 29], strides = [1, 1]} : vector<8x32xf32> to vector<8x29xf32>
    %839 = tpu.concatenate %837, %838 in 1 : vector<8x3xf32>, vector<8x29xf32> -> vector<8x32xf32>
    %840 = vector.extract_strided_slice %824 {offsets = [2, 0], sizes = [1, 32], strides = [1, 1]} : vector<9x32xf32> to vector<1x32xf32>
    %841 = vector.broadcast %840 : vector<1x32xf32> to vector<8x32xf32>
    %842 = arith.mulf %839, %841 : vector<8x32xf32>
    %843 = vector.extract_strided_slice %707 {offsets = [0, 31], sizes = [8, 1], strides = [1, 1]} : vector<8x32xf32> to vector<8x1xf32>
    %844 = vector.extract_strided_slice %707 {offsets = [0, 0], sizes = [8, 31], strides = [1, 1]} : vector<8x32xf32> to vector<8x31xf32>
    %845 = tpu.concatenate %843, %844 in 1 : vector<8x1xf32>, vector<8x31xf32> -> vector<8x32xf32>
    %846 = vector.extract_strided_slice %824 {offsets = [3, 0], sizes = [1, 32], strides = [1, 1]} : vector<9x32xf32> to vector<1x32xf32>
    %847 = vector.broadcast %846 : vector<1x32xf32> to vector<8x32xf32>
    %848 = arith.mulf %845, %847 : vector<8x32xf32>
    %849 = vector.extract_strided_slice %824 {offsets = [4, 0], sizes = [1, 32], strides = [1, 1]} : vector<9x32xf32> to vector<1x32xf32>
    %850 = vector.broadcast %849 : vector<1x32xf32> to vector<8x32xf32>
    %851 = arith.mulf %707, %850 : vector<8x32xf32>
    %852 = vector.extract_strided_slice %707 {offsets = [0, 1], sizes = [8, 31], strides = [1, 1]} : vector<8x32xf32> to vector<8x31xf32>
    %853 = vector.extract_strided_slice %707 {offsets = [0, 0], sizes = [8, 1], strides = [1, 1]} : vector<8x32xf32> to vector<8x1xf32>
    %854 = tpu.concatenate %852, %853 in 1 : vector<8x31xf32>, vector<8x1xf32> -> vector<8x32xf32>
    %855 = vector.extract_strided_slice %824 {offsets = [5, 0], sizes = [1, 32], strides = [1, 1]} : vector<9x32xf32> to vector<1x32xf32>
    %856 = vector.broadcast %855 : vector<1x32xf32> to vector<8x32xf32>
    %857 = arith.mulf %854, %856 : vector<8x32xf32>
    %858 = vector.extract_strided_slice %707 {offsets = [0, 3], sizes = [8, 29], strides = [1, 1]} : vector<8x32xf32> to vector<8x29xf32>
    %859 = vector.extract_strided_slice %707 {offsets = [0, 0], sizes = [8, 3], strides = [1, 1]} : vector<8x32xf32> to vector<8x3xf32>
    %860 = tpu.concatenate %858, %859 in 1 : vector<8x29xf32>, vector<8x3xf32> -> vector<8x32xf32>
    %861 = vector.extract_strided_slice %824 {offsets = [6, 0], sizes = [1, 32], strides = [1, 1]} : vector<9x32xf32> to vector<1x32xf32>
    %862 = vector.broadcast %861 : vector<1x32xf32> to vector<8x32xf32>
    %863 = arith.mulf %860, %862 : vector<8x32xf32>
    %864 = vector.extract_strided_slice %707 {offsets = [0, 4], sizes = [8, 28], strides = [1, 1]} : vector<8x32xf32> to vector<8x28xf32>
    %865 = vector.extract_strided_slice %707 {offsets = [0, 0], sizes = [8, 4], strides = [1, 1]} : vector<8x32xf32> to vector<8x4xf32>
    %866 = tpu.concatenate %864, %865 in 1 : vector<8x28xf32>, vector<8x4xf32> -> vector<8x32xf32>
    %867 = vector.extract_strided_slice %824 {offsets = [7, 0], sizes = [1, 32], strides = [1, 1]} : vector<9x32xf32> to vector<1x32xf32>
    %868 = vector.broadcast %867 : vector<1x32xf32> to vector<8x32xf32>
    %869 = arith.mulf %866, %868 : vector<8x32xf32>
    %870 = vector.extract_strided_slice %707 {offsets = [0, 5], sizes = [8, 27], strides = [1, 1]} : vector<8x32xf32> to vector<8x27xf32>
    %871 = vector.extract_strided_slice %707 {offsets = [0, 0], sizes = [8, 5], strides = [1, 1]} : vector<8x32xf32> to vector<8x5xf32>
    %872 = tpu.concatenate %870, %871 in 1 : vector<8x27xf32>, vector<8x5xf32> -> vector<8x32xf32>
    %873 = vector.extract_strided_slice %824 {offsets = [8, 0], sizes = [1, 32], strides = [1, 1]} : vector<9x32xf32> to vector<1x32xf32>
    %874 = vector.broadcast %873 : vector<1x32xf32> to vector<8x32xf32>
    %875 = arith.mulf %872, %874 : vector<8x32xf32>
    %876 = tpu.concatenate %830, %836, %842, %848, %851, %857, %863, %869, %875 in 0 : vector<8x32xf32>, vector<8x32xf32>, vector<8x32xf32>, vector<8x32xf32>, vector<8x32xf32>, vector<8x32xf32>, vector<8x32xf32>, vector<8x32xf32>, vector<8x32xf32> -> vector<72x32xf32>
    %c0_106 = arith.constant 0 : index
    %c0_107 = arith.constant 0 : index
    %877 = vector.load %arg8[%c0_106, %c0_107] : memref<9x8xf32, #tpu.memory_space<vmem>>, vector<9x8xf32>
    %878 = vector.extract_strided_slice %717 {offsets = [0, 5], sizes = [8, 3], strides = [1, 1]} : vector<8x8xf32> to vector<8x3xf32>
    %879 = vector.extract_strided_slice %717 {offsets = [0, 0], sizes = [8, 5], strides = [1, 1]} : vector<8x8xf32> to vector<8x5xf32>
    %880 = tpu.concatenate %878, %879 in 1 : vector<8x3xf32>, vector<8x5xf32> -> vector<8x8xf32>
    %881 = vector.extract_strided_slice %877 {offsets = [0, 0], sizes = [1, 8], strides = [1, 1]} : vector<9x8xf32> to vector<1x8xf32>
    %882 = vector.broadcast %881 : vector<1x8xf32> to vector<8x8xf32>
    %883 = arith.mulf %880, %882 : vector<8x8xf32>
    %884 = vector.extract_strided_slice %717 {offsets = [0, 6], sizes = [8, 2], strides = [1, 1]} : vector<8x8xf32> to vector<8x2xf32>
    %885 = vector.extract_strided_slice %717 {offsets = [0, 0], sizes = [8, 6], strides = [1, 1]} : vector<8x8xf32> to vector<8x6xf32>
    %886 = tpu.concatenate %884, %885 in 1 : vector<8x2xf32>, vector<8x6xf32> -> vector<8x8xf32>
    %887 = vector.extract_strided_slice %877 {offsets = [1, 0], sizes = [1, 8], strides = [1, 1]} : vector<9x8xf32> to vector<1x8xf32>
    %888 = vector.broadcast %887 : vector<1x8xf32> to vector<8x8xf32>
    %889 = arith.mulf %886, %888 : vector<8x8xf32>
    %890 = vector.extract_strided_slice %717 {offsets = [0, 7], sizes = [8, 1], strides = [1, 1]} : vector<8x8xf32> to vector<8x1xf32>
    %891 = vector.extract_strided_slice %717 {offsets = [0, 0], sizes = [8, 7], strides = [1, 1]} : vector<8x8xf32> to vector<8x7xf32>
    %892 = tpu.concatenate %890, %891 in 1 : vector<8x1xf32>, vector<8x7xf32> -> vector<8x8xf32>
    %893 = vector.extract_strided_slice %877 {offsets = [2, 0], sizes = [1, 8], strides = [1, 1]} : vector<9x8xf32> to vector<1x8xf32>
    %894 = vector.broadcast %893 : vector<1x8xf32> to vector<8x8xf32>
    %895 = arith.mulf %892, %894 : vector<8x8xf32>
    %896 = vector.extract_strided_slice %717 {offsets = [0, 7], sizes = [8, 1], strides = [1, 1]} : vector<8x8xf32> to vector<8x1xf32>
    %897 = vector.extract_strided_slice %717 {offsets = [0, 0], sizes = [8, 7], strides = [1, 1]} : vector<8x8xf32> to vector<8x7xf32>
    %898 = tpu.concatenate %896, %897 in 1 : vector<8x1xf32>, vector<8x7xf32> -> vector<8x8xf32>
    %899 = vector.extract_strided_slice %877 {offsets = [3, 0], sizes = [1, 8], strides = [1, 1]} : vector<9x8xf32> to vector<1x8xf32>
    %900 = vector.broadcast %899 : vector<1x8xf32> to vector<8x8xf32>
    %901 = arith.mulf %898, %900 : vector<8x8xf32>
    %902 = vector.extract_strided_slice %877 {offsets = [4, 0], sizes = [1, 8], strides = [1, 1]} : vector<9x8xf32> to vector<1x8xf32>
    %903 = vector.broadcast %902 : vector<1x8xf32> to vector<8x8xf32>
    %904 = arith.mulf %717, %903 : vector<8x8xf32>
    %905 = vector.extract_strided_slice %717 {offsets = [0, 1], sizes = [8, 7], strides = [1, 1]} : vector<8x8xf32> to vector<8x7xf32>
    %906 = vector.extract_strided_slice %717 {offsets = [0, 0], sizes = [8, 1], strides = [1, 1]} : vector<8x8xf32> to vector<8x1xf32>
    %907 = tpu.concatenate %905, %906 in 1 : vector<8x7xf32>, vector<8x1xf32> -> vector<8x8xf32>
    %908 = vector.extract_strided_slice %877 {offsets = [5, 0], sizes = [1, 8], strides = [1, 1]} : vector<9x8xf32> to vector<1x8xf32>
    %909 = vector.broadcast %908 : vector<1x8xf32> to vector<8x8xf32>
    %910 = arith.mulf %907, %909 : vector<8x8xf32>
    %911 = vector.extract_strided_slice %717 {offsets = [0, 1], sizes = [8, 7], strides = [1, 1]} : vector<8x8xf32> to vector<8x7xf32>
    %912 = vector.extract_strided_slice %717 {offsets = [0, 0], sizes = [8, 1], strides = [1, 1]} : vector<8x8xf32> to vector<8x1xf32>
    %913 = tpu.concatenate %911, %912 in 1 : vector<8x7xf32>, vector<8x1xf32> -> vector<8x8xf32>
    %914 = vector.extract_strided_slice %877 {offsets = [6, 0], sizes = [1, 8], strides = [1, 1]} : vector<9x8xf32> to vector<1x8xf32>
    %915 = vector.broadcast %914 : vector<1x8xf32> to vector<8x8xf32>
    %916 = arith.mulf %913, %915 : vector<8x8xf32>
    %917 = vector.extract_strided_slice %717 {offsets = [0, 2], sizes = [8, 6], strides = [1, 1]} : vector<8x8xf32> to vector<8x6xf32>
    %918 = vector.extract_strided_slice %717 {offsets = [0, 0], sizes = [8, 2], strides = [1, 1]} : vector<8x8xf32> to vector<8x2xf32>
    %919 = tpu.concatenate %917, %918 in 1 : vector<8x6xf32>, vector<8x2xf32> -> vector<8x8xf32>
    %920 = vector.extract_strided_slice %877 {offsets = [7, 0], sizes = [1, 8], strides = [1, 1]} : vector<9x8xf32> to vector<1x8xf32>
    %921 = vector.broadcast %920 : vector<1x8xf32> to vector<8x8xf32>
    %922 = arith.mulf %919, %921 : vector<8x8xf32>
    %923 = vector.extract_strided_slice %717 {offsets = [0, 3], sizes = [8, 5], strides = [1, 1]} : vector<8x8xf32> to vector<8x5xf32>
    %924 = vector.extract_strided_slice %717 {offsets = [0, 0], sizes = [8, 3], strides = [1, 1]} : vector<8x8xf32> to vector<8x3xf32>
    %925 = tpu.concatenate %923, %924 in 1 : vector<8x5xf32>, vector<8x3xf32> -> vector<8x8xf32>
    %926 = vector.extract_strided_slice %877 {offsets = [8, 0], sizes = [1, 8], strides = [1, 1]} : vector<9x8xf32> to vector<1x8xf32>
    %927 = vector.broadcast %926 : vector<1x8xf32> to vector<8x8xf32>
    %928 = arith.mulf %925, %927 : vector<8x8xf32>
    %929 = tpu.concatenate %883, %889, %895, %901, %904, %910, %916, %922, %928 in 0 : vector<8x8xf32>, vector<8x8xf32>, vector<8x8xf32>, vector<8x8xf32>, vector<8x8xf32>, vector<8x8xf32>, vector<8x8xf32>, vector<8x8xf32>, vector<8x8xf32> -> vector<72x8xf32>
    %930 = tpu.concatenate %770, %823, %876, %929 in 1 : vector<72x512xf32>, vector<72x128xf32>, vector<72x32xf32>, vector<72x8xf32> -> vector<72x680xf32>
    %cst_108 = arith.constant dense<0.000000e+00> : vector<10x680xf32>
    %931 = tpu.matmul %687, %930, %cst_108 {dimension_numbers = #tpu.dot_dimension_numbers<[1], [0], [0], [1], [0, 0, 1, 1], [], []>} : vector<10x72xf32>, vector<72x680xf32>, vector<10x680xf32> -> vector<10x680xf32>
    %cst_109 = arith.constant 0.000000e+00 : f32
    %932 = vector.broadcast %cst_109 : f32 to vector<10x680xf32>
    %933 = arith.maximumf %931, %932 : vector<10x680xf32>
    %934 = vector.extract_strided_slice %933 {offsets = [0, 0], sizes = [10, 512], strides = [1, 1]} : vector<10x680xf32> to vector<10x512xf32>
    %cst_110 = arith.constant dense<0.000000e+00> : vector<10xf32>
    %935 = vector.multi_reduction <add>, %934, %cst_110 [1] : vector<10x512xf32> to vector<10xf32>
    %936 = vector.shape_cast %935 : vector<10xf32> to vector<10x1xf32>
    %cst_111 = arith.constant 5.120000e+02 : f32
    %937 = vector.broadcast %cst_111 : f32 to vector<10x1xf32>
    %938 = arith.divf %936, %937 : vector<10x1xf32>
    %939 = arith.mulf %934, %934 : vector<10x512xf32>
    %cst_112 = arith.constant dense<0.000000e+00> : vector<10xf32>
    %940 = vector.multi_reduction <add>, %939, %cst_112 [1] : vector<10x512xf32> to vector<10xf32>
    %941 = vector.shape_cast %940 : vector<10xf32> to vector<10x1xf32>
    %cst_113 = arith.constant 5.120000e+02 : f32
    %942 = vector.broadcast %cst_113 : f32 to vector<10x1xf32>
    %943 = arith.divf %941, %942 : vector<10x1xf32>
    %944 = arith.mulf %938, %938 : vector<10x1xf32>
    %945 = arith.subf %943, %944 : vector<10x1xf32>
    %c8 = arith.constant 8 : index
    %946 = memref.load %arg0[%c8] : memref<12xf32, #tpu.memory_space<smem>>
    %cst_114 = arith.constant 9.99999974E-6 : f32
    %947 = vector.broadcast %cst_114 : f32 to vector<10x1xf32>
    %948 = arith.addf %945, %947 : vector<10x1xf32>
    %949 = math.rsqrt %948 : vector<10x1xf32>
    %950 = vector.broadcast %946 : f32 to vector<10x1xf32>
    %951 = arith.mulf %950, %949 : vector<10x1xf32>
    %952 = vector.broadcast %951 : vector<10x1xf32> to vector<10x512xf32>
    %953 = arith.mulf %934, %952 : vector<10x512xf32>
    %954 = arith.mulf %938, %951 : vector<10x1xf32>
    %955 = vector.broadcast %954 : vector<10x1xf32> to vector<10x512xf32>
    %956 = arith.subf %953, %955 : vector<10x512xf32>
    %957 = vector.extract_strided_slice %933 {offsets = [0, 512], sizes = [10, 128], strides = [1, 1]} : vector<10x680xf32> to vector<10x128xf32>
    %cst_115 = arith.constant dense<0.000000e+00> : vector<10xf32>
    %958 = vector.multi_reduction <add>, %957, %cst_115 [1] : vector<10x128xf32> to vector<10xf32>
    %959 = vector.shape_cast %958 : vector<10xf32> to vector<10x1xf32>
    %cst_116 = arith.constant 1.280000e+02 : f32
    %960 = vector.broadcast %cst_116 : f32 to vector<10x1xf32>
    %961 = arith.divf %959, %960 : vector<10x1xf32>
    %962 = arith.mulf %957, %957 : vector<10x128xf32>
    %cst_117 = arith.constant dense<0.000000e+00> : vector<10xf32>
    %963 = vector.multi_reduction <add>, %962, %cst_117 [1] : vector<10x128xf32> to vector<10xf32>
    %964 = vector.shape_cast %963 : vector<10xf32> to vector<10x1xf32>
    %cst_118 = arith.constant 1.280000e+02 : f32
    %965 = vector.broadcast %cst_118 : f32 to vector<10x1xf32>
    %966 = arith.divf %964, %965 : vector<10x1xf32>
    %967 = arith.mulf %961, %961 : vector<10x1xf32>
    %968 = arith.subf %966, %967 : vector<10x1xf32>
    %c9 = arith.constant 9 : index
    %969 = memref.load %arg0[%c9] : memref<12xf32, #tpu.memory_space<smem>>
    %cst_119 = arith.constant 9.99999974E-6 : f32
    %970 = vector.broadcast %cst_119 : f32 to vector<10x1xf32>
    %971 = arith.addf %968, %970 : vector<10x1xf32>
    %972 = math.rsqrt %971 : vector<10x1xf32>
    %973 = vector.broadcast %969 : f32 to vector<10x1xf32>
    %974 = arith.mulf %973, %972 : vector<10x1xf32>
    %975 = vector.broadcast %974 : vector<10x1xf32> to vector<10x128xf32>
    %976 = arith.mulf %957, %975 : vector<10x128xf32>
    %977 = arith.mulf %961, %974 : vector<10x1xf32>
    %978 = vector.broadcast %977 : vector<10x1xf32> to vector<10x128xf32>
    %979 = arith.subf %976, %978 : vector<10x128xf32>
    %980 = vector.extract_strided_slice %933 {offsets = [0, 640], sizes = [10, 32], strides = [1, 1]} : vector<10x680xf32> to vector<10x32xf32>
    %cst_120 = arith.constant dense<0.000000e+00> : vector<10xf32>
    %981 = vector.multi_reduction <add>, %980, %cst_120 [1] : vector<10x32xf32> to vector<10xf32>
    %982 = vector.shape_cast %981 : vector<10xf32> to vector<10x1xf32>
    %cst_121 = arith.constant 3.200000e+01 : f32
    %983 = vector.broadcast %cst_121 : f32 to vector<10x1xf32>
    %984 = arith.divf %982, %983 : vector<10x1xf32>
    %985 = arith.mulf %980, %980 : vector<10x32xf32>
    %cst_122 = arith.constant dense<0.000000e+00> : vector<10xf32>
    %986 = vector.multi_reduction <add>, %985, %cst_122 [1] : vector<10x32xf32> to vector<10xf32>
    %987 = vector.shape_cast %986 : vector<10xf32> to vector<10x1xf32>
    %cst_123 = arith.constant 3.200000e+01 : f32
    %988 = vector.broadcast %cst_123 : f32 to vector<10x1xf32>
    %989 = arith.divf %987, %988 : vector<10x1xf32>
    %990 = arith.mulf %984, %984 : vector<10x1xf32>
    %991 = arith.subf %989, %990 : vector<10x1xf32>
    %c10 = arith.constant 10 : index
    %992 = memref.load %arg0[%c10] : memref<12xf32, #tpu.memory_space<smem>>
    %cst_124 = arith.constant 9.99999974E-6 : f32
    %993 = vector.broadcast %cst_124 : f32 to vector<10x1xf32>
    %994 = arith.addf %991, %993 : vector<10x1xf32>
    %995 = math.rsqrt %994 : vector<10x1xf32>
    %996 = vector.broadcast %992 : f32 to vector<10x1xf32>
    %997 = arith.mulf %996, %995 : vector<10x1xf32>
    %998 = vector.broadcast %997 : vector<10x1xf32> to vector<10x32xf32>
    %999 = arith.mulf %980, %998 : vector<10x32xf32>
    %1000 = arith.mulf %984, %997 : vector<10x1xf32>
    %1001 = vector.broadcast %1000 : vector<10x1xf32> to vector<10x32xf32>
    %1002 = arith.subf %999, %1001 : vector<10x32xf32>
    %1003 = vector.extract_strided_slice %933 {offsets = [0, 672], sizes = [10, 8], strides = [1, 1]} : vector<10x680xf32> to vector<10x8xf32>
    %cst_125 = arith.constant dense<0.000000e+00> : vector<10xf32>
    %1004 = vector.multi_reduction <add>, %1003, %cst_125 [1] : vector<10x8xf32> to vector<10xf32>
    %1005 = vector.shape_cast %1004 : vector<10xf32> to vector<10x1xf32>
    %cst_126 = arith.constant 8.000000e+00 : f32
    %1006 = vector.broadcast %cst_126 : f32 to vector<10x1xf32>
    %1007 = arith.divf %1005, %1006 : vector<10x1xf32>
    %1008 = arith.mulf %1003, %1003 : vector<10x8xf32>
    %cst_127 = arith.constant dense<0.000000e+00> : vector<10xf32>
    %1009 = vector.multi_reduction <add>, %1008, %cst_127 [1] : vector<10x8xf32> to vector<10xf32>
    %1010 = vector.shape_cast %1009 : vector<10xf32> to vector<10x1xf32>
    %cst_128 = arith.constant 8.000000e+00 : f32
    %1011 = vector.broadcast %cst_128 : f32 to vector<10x1xf32>
    %1012 = arith.divf %1010, %1011 : vector<10x1xf32>
    %1013 = arith.mulf %1007, %1007 : vector<10x1xf32>
    %1014 = arith.subf %1012, %1013 : vector<10x1xf32>
    %c11 = arith.constant 11 : index
    %1015 = memref.load %arg0[%c11] : memref<12xf32, #tpu.memory_space<smem>>
    %cst_129 = arith.constant 9.99999974E-6 : f32
    %1016 = vector.broadcast %cst_129 : f32 to vector<10x1xf32>
    %1017 = arith.addf %1014, %1016 : vector<10x1xf32>
    %1018 = math.rsqrt %1017 : vector<10x1xf32>
    %1019 = vector.broadcast %1015 : f32 to vector<10x1xf32>
    %1020 = arith.mulf %1019, %1018 : vector<10x1xf32>
    %1021 = vector.broadcast %1020 : vector<10x1xf32> to vector<10x8xf32>
    %1022 = arith.mulf %1003, %1021 : vector<10x8xf32>
    %1023 = arith.mulf %1007, %1020 : vector<10x1xf32>
    %1024 = vector.broadcast %1023 : vector<10x1xf32> to vector<10x8xf32>
    %1025 = arith.subf %1022, %1024 : vector<10x8xf32>
    %1026 = tpu.concatenate %979, %1002, %1025 in 1 : vector<10x128xf32>, vector<10x32xf32>, vector<10x8xf32> -> vector<10x168xf32>
    %c0_130 = arith.constant 0 : index
    %c0_131 = arith.constant 0 : index
    %1027 = vector.load %arg12[%c0_130, %c0_131] : memref<168x512xf32, #tpu.memory_space<vmem>>, vector<168x512xf32>
    %cst_132 = arith.constant dense<0.000000e+00> : vector<10x512xf32>
    %1028 = tpu.matmul %1026, %1027, %cst_132 {dimension_numbers = #tpu.dot_dimension_numbers<[1], [0], [0], [1], [0, 0, 1, 1], [], []>} : vector<10x168xf32>, vector<168x512xf32>, vector<10x512xf32> -> vector<10x512xf32>
    %1029 = arith.addf %956, %1028 : vector<10x512xf32>
    %c0_133 = arith.constant 0 : index
    %c0_134 = arith.constant 0 : index
    %1030 = vector.load %arg13[%c0_133, %c0_134] : memref<512x2xf32, #tpu.memory_space<vmem>>, vector<512x2xf32>
    %cst_135 = arith.constant dense<0.000000e+00> : vector<10x2xf32>
    %1031 = tpu.matmul %1029, %1030, %cst_135 {dimension_numbers = #tpu.dot_dimension_numbers<[1], [0], [0], [1], [0, 0, 1, 1], [], []>} : vector<10x512xf32>, vector<512x2xf32>, vector<10x2xf32> -> vector<10x2xf32>
    %c0_136 = arith.constant 0 : index
    %c0_137 = arith.constant 0 : index
    %1032 = vector.load %arg14[%c0_136, %c0_137] : memref<10x2xf32, #tpu.memory_space<vmem>>, vector<10x2xf32>
    tpu.vector_store %arg14[%c0_136, %c0_137], %1031 {strides = array<i32>} : memref<10x2xf32, #tpu.memory_space<vmem>>, vector<10x2xf32>,
    return
  }
}

</mosaic_0001>

<llo_original>
// kernel: tile.228
$region0: #{tile.228}
  #allocation0 [shape = 's32[1]{0}', space=sflag, size = 0x4, scoped, tag = 'scoped memory for tile.228']
  %s0 = inlined_call_operand.vmem [shape: pred[64], index: 0, kind: input, shape index: {}]
  %s1 = inlined_call_operand.vmem [shape: pred[2,64], index: 1, kind: output, shape index: {}]
  // Predicated region
  $region2: #{tile.228} parent=0 // pred_check
    _
  $region3: #{tile.228} parent=0 // pred_check_branch
    %3 = sbr.rel (0) target = $region5
  $region4: #{tile.228} parent=0 // pred_region
    _
  $region5: #{tile.228} parent=0 // pred_fallthru
    _
  %v4 = vld [vmem:[%s0] ss:$0 sm:$0xff]
  %v6 = vshra.s32 %v4, 0
  %v7 = vand.u32 %v6, 255
  %v8 = vpack.c.b16 0, %v7
  %v9 = vpack.c.b8 0, %v8
  %s11 = ssub.s32 2, 1
  %12 = vst [vmem:[%s1] sm:%s11] %v9

// kernel: tile.261
$region0: #{tile.261}
  %s0 = inlined_call_operand.vmem [shape: pred[2,64], index: 0, kind: input, shape index: {}]
  %s1 = inlined_call_operand.vmem [shape: pred[1,128], index: 1, kind: output, shape index: {}]
  $region1: #{tile.261} parent=0
    #allocation0 [shape = 'u8[4096]{0}', space=vmem, size = 0x1000, scoped, tag = 'scoped mem for output reshape']
    #allocation1 [shape = 'u8[4096]{0}', space=vmem, size = 0x1000, scoped, tag = 'scoped mem for input reshape']
    %s3 = ssub.s32 16, 1
    %s4 = sand.u32 %s3, 15
    %p5 = scmp.ne.s32.totalorder %s4, 0
    %s6 = scalar_select %p5, 1, 0
    %s7 = sand.u32 %s3, 240
    %p8 = scmp.ne.s32.totalorder %s7, 0
    %s9 = scalar_select %p8, 2, 0
    %s10 = sor.u32 %s6, %s9
    %v11 = vld [vmem:[%s0] sm:%s10]
    %v12 = vunpack.c.0.s8 %v11
    %v13 = vunpack.c.1.s8 %v11
    %v14 = vunpack.c.2.s8 %v11
    %v15 = vunpack.c.3.s8 %v11
    %16 = vst [vmem:[#allocation1] sm:%s3] %v12
    %v17 = vld [vmem:[#allocation1] sm:$0x1]
    %vm18 = vcmask 523264
    %19 = vst.msk [vmem:[#allocation0] sm:$0x1] %vm18, %v17
    %s20 = scalar_lea.vmem [#allocation1], 1
    %v21 = vld [vmem:[%s20] sm:$0x1]
    %22 = vrot.lane.b32.xlu0 %v21, 64
    %v23 = vpop.permute.xlu0 %22
    %vm24 = vcmask 1048064
    %25 = vst.msk [vmem:[#allocation0] sm:$0x1] %vm24, %v23
    %s27 = ssub.s32 16, 1
    %v28 = vld [vmem:[#allocation0] sm:%s27]
    %s30 = ssub.s32 2, 1
    %v31 = vpack.c.b16 0, %v28
    %v32 = vpack.c.b8 0, %v31
    %33 = vst [vmem:[%s1] sm:%s30] %v32

// kernel: tile.273
$region0: #{tile.273}
  #allocation0 [shape = 's32[1]{0}', space=sflag, size = 0x4, scoped, tag = 'scoped memory for tile.273']
  %s0 = inlined_call_operand.vmem [shape: pred[16], index: 0, kind: input, shape index: {}]
  %s1 = inlined_call_operand.vmem [shape: pred[2,16], index: 1, kind: output, shape index: {}]
  // Predicated region
  $region2: #{tile.273} parent=0 // pred_check
    _
  $region3: #{tile.273} parent=0 // pred_check_branch
    %3 = sbr.rel (0) target = $region5
  $region4: #{tile.273} parent=0 // pred_region
    _
  $region5: #{tile.273} parent=0 // pred_fallthru
    _
  %v4 = vld [vmem:[%s0] ss:$0 sm:$0xff]
  %v6 = vshra.s32 %v4, 0
  %v7 = vand.u32 %v6, 255
  %v8 = vpack.c.b16 0, %v7
  %v9 = vpack.c.b8 0, %v8
  %s11 = ssub.s32 2, 1
  %12 = vst [vmem:[%s1] sm:%s11] %v9

// kernel: tile.306
$region0: #{tile.306}
  %s0 = inlined_call_operand.vmem [shape: pred[2,16], index: 0, kind: input, shape index: {}]
  %s1 = inlined_call_operand.vmem [shape: pred[1,32], index: 1, kind: output, shape index: {}]
  $region1: #{tile.306} parent=0
    #allocation0 [shape = 'u8[4096]{0}', space=vmem, size = 0x1000, scoped, tag = 'scoped mem for output reshape']
    #allocation1 [shape = 'u8[4096]{0}', space=vmem, size = 0x1000, scoped, tag = 'scoped mem for input reshape']
    %s3 = ssub.s32 16, 1
    %s4 = sand.u32 %s3, 15
    %p5 = scmp.ne.s32.totalorder %s4, 0
    %s6 = scalar_select %p5, 1, 0
    %s7 = sand.u32 %s3, 240
    %p8 = scmp.ne.s32.totalorder %s7, 0
    %s9 = scalar_select %p8, 2, 0
    %s10 = sor.u32 %s6, %s9
    %v11 = vld [vmem:[%s0] sm:%s10]
    %v12 = vunpack.c.0.s8 %v11
    %v13 = vunpack.c.1.s8 %v11
    %v14 = vunpack.c.2.s8 %v11
    %v15 = vunpack.c.3.s8 %v11
    %16 = vst [vmem:[#allocation1] sm:%s3] %v12
    %v17 = vld [vmem:[#allocation1] sm:$0x1]
    %vm18 = vcmask 130048
    %19 = vst.msk [vmem:[#allocation0] sm:$0x1] %vm18, %v17
    %s20 = scalar_lea.vmem [#allocation1], 1
    %v21 = vld [vmem:[%s20] sm:$0x1]
    %22 = vrot.lane.b32.xlu0 %v21, 16
    %v23 = vpop.permute.xlu0 %22
    %vm24 = vcmask 261248
    %25 = vst.msk [vmem:[#allocation0] sm:$0x1] %vm24, %v23
    %s27 = ssub.s32 16, 1
    %v28 = vld [vmem:[#allocation0] sm:%s27]
    %s30 = ssub.s32 2, 1
    %v31 = vpack.c.b16 0, %v28
    %v32 = vpack.c.b8 0, %v31
    %33 = vst [vmem:[%s1] sm:%s30] %v32

// kernel: tile.318
$region0: #{tile.318}
  #allocation0 [shape = 's32[1]{0}', space=sflag, size = 0x4, scoped, tag = 'scoped memory for tile.318']
  %s0 = inlined_call_operand.vmem [shape: pred[4], index: 0, kind: input, shape index: {}]
  %s1 = inlined_call_operand.vmem [shape: pred[2,4], index: 1, kind: output, shape index: {}]
  // Predicated region
  $region2: #{tile.318} parent=0 // pred_check
    _
  $region3: #{tile.318} parent=0 // pred_check_branch
    %3 = sbr.rel (0) target = $region5
  $region4: #{tile.318} parent=0 // pred_region
    _
  $region5: #{tile.318} parent=0 // pred_fallthru
    _
  %v4 = vld [vmem:[%s0] ss:$0 sm:$0xff]
  %v6 = vshra.s32 %v4, 0
  %v7 = vand.u32 %v6, 255
  %v8 = vpack.c.b16 0, %v7
  %v9 = vpack.c.b8 0, %v8
  %s11 = ssub.s32 2, 1
  %12 = vst [vmem:[%s1] sm:%s11] %v9

// kernel: tile.351
$region0: #{tile.351}
  %s0 = inlined_call_operand.vmem [shape: pred[2,4], index: 0, kind: input, shape index: {}]
  %s1 = inlined_call_operand.vmem [shape: pred[1,8], index: 1, kind: output, shape index: {}]
  $region1: #{tile.351} parent=0
    #allocation0 [shape = 'u8[4096]{0}', space=vmem, size = 0x1000, scoped, tag = 'scoped mem for output reshape']
    #allocation1 [shape = 'u8[4096]{0}', space=vmem, size = 0x1000, scoped, tag = 'scoped mem for input reshape']
    %s3 = ssub.s32 16, 1
    %s4 = sand.u32 %s3, 15
    %p5 = scmp.ne.s32.totalorder %s4, 0
    %s6 = scalar_select %p5, 1, 0
    %s7 = sand.u32 %s3, 240
    %p8 = scmp.ne.s32.totalorder %s7, 0
    %s9 = scalar_select %p8, 2, 0
    %s10 = sor.u32 %s6, %s9
    %v11 = vld [vmem:[%s0] sm:%s10]
    %v12 = vunpack.c.0.s8 %v11
    %v13 = vunpack.c.1.s8 %v11
    %v14 = vunpack.c.2.s8 %v11
    %v15 = vunpack.c.3.s8 %v11
    %16 = vst [vmem:[#allocation1] sm:%s3] %v12
    %v17 = vld [vmem:[#allocation1] sm:$0x1]
    %vm18 = vcmask 31744
    %19 = vst.msk [vmem:[#allocation0] sm:$0x1] %vm18, %v17
    %s20 = scalar_lea.vmem [#allocation1], 1
    %v21 = vld [vmem:[%s20] sm:$0x1]
    %22 = vrot.lane.b32.xlu0 %v21, 4
    %v23 = vpop.permute.xlu0 %22
    %vm24 = vcmask 64544
    %25 = vst.msk [vmem:[#allocation0] sm:$0x1] %vm24, %v23
    %s27 = ssub.s32 16, 1
    %v28 = vld [vmem:[#allocation0] sm:%s27]
    %s30 = ssub.s32 2, 1
    %v31 = vpack.c.b16 0, %v28
    %v32 = vpack.c.b8 0, %v31
    %33 = vst [vmem:[%s1] sm:%s30] %v32

// kernel: multires_forward.1
$region0: #{multires_forward.1}
  #allocation0 [shape = 'u32[]', space=smem, size = 0x4, offset = 0x4, fixed_abs, tag = 'smem constant byte address 0x4 - core index']
  #allocation1 [shape = 'u32[72,128]{1,0:T(1,128)}', space=vmem, size = 0x9000, scoped, tag = 'internal scratch']
  %s0 = inlined_call_operand.vmem [shape: f32[12], index: 0, kind: input, shape index: {}]
  %s1 = inlined_call_operand.vmem [shape: f32[3,512], index: 1, kind: input, shape index: {}]
  %s2 = inlined_call_operand.vmem [shape: f32[8,27], index: 2, kind: input, shape index: {}]
  %s3 = inlined_call_operand.vmem [shape: f32[8,72], index: 3, kind: input, shape index: {}]
  %s4 = inlined_call_operand.vmem [shape: f32[10,72], index: 4, kind: input, shape index: {}]
  %s5 = inlined_call_operand.vmem [shape: f32[9,512], index: 5, kind: input, shape index: {}]
  %s6 = inlined_call_operand.vmem [shape: f32[9,128], index: 6, kind: input, shape index: {}]
  %s7 = inlined_call_operand.vmem [shape: f32[9,32], index: 7, kind: input, shape index: {}]
  %s8 = inlined_call_operand.vmem [shape: f32[9,8], index: 8, kind: input, shape index: {}]
  %s9 = inlined_call_operand.vmem [shape: f32[512,128], index: 9, kind: input, shape index: {}]
  %s10 = inlined_call_operand.vmem [shape: f32[128,32], index: 10, kind: input, shape index: {}]
  %s11 = inlined_call_operand.vmem [shape: f32[32,8], index: 11, kind: input, shape index: {}]
  %s12 = inlined_call_operand.vmem [shape: f32[168,512], index: 12, kind: input, shape index: {}]
  %s13 = inlined_call_operand.vmem [shape: f32[512,2], index: 13, kind: input, shape index: {}]
  %s14 = inlined_call_operand.vmem [shape: f32[10,2], index: 14, kind: output, shape index: {}]
  %s15 = sld [smem:[#allocation0]]
  $region70: #{multires_forward.1} parent=0
    _
  %s17 = ssub.s32 1, %s15
  %s18 = scalar_select 0, %s17, %s15
  $region1: #{multires_forward.1} parent=0
    #allocation2 [shape = 'u8[512]{0}', space=smem, size = 0x200, scoped, tag = 'input window, operand 0, single buffered']
    #allocation3 [shape = 's32[1]{0}', space=sflag, size = 0x4, scoped, tag = 'scoped memory for multires_forward.1']
    %19 = vsyncpa [#allocation3], 0
    // Predicated region
    $region2: #{multires_forward.1} parent=1 // pred_check
      _
    $region3: #{multires_forward.1} parent=1 // pred_check_branch
      %21 = sbr.rel (0) target = $region5
    $region4: #{multires_forward.1} parent=1 // pred_region
      %23 = vsyncadd [#allocation3], 0
      %s25 = sshll.u32 %s0, 4
      %s26 = int_to_ptr.vmem [resolvable:$true] %s25
      %28 = dma.vmem_to_smem %s26, 16, [#allocation2], [#allocation3]
    $region5: #{multires_forward.1} parent=1 // pred_fallthru
      _
    // Predicated region
    $region6: #{multires_forward.1} parent=1 // pred_check
      _
    $region7: #{multires_forward.1} parent=1 // pred_check_branch
      %30 = sbr.rel (0) target = $region9
    $region8: #{multires_forward.1} parent=1 // pred_region
      _
    $region9: #{multires_forward.1} parent=1 // pred_fallthru
      _
    // Predicated region
    $region10: #{multires_forward.1} parent=1 // pred_check
      _
    $region11: #{multires_forward.1} parent=1 // pred_check_branch
      %32 = sbr.rel (0) target = $region13
    $region12: #{multires_forward.1} parent=1 // pred_region
      _
    $region13: #{multires_forward.1} parent=1 // pred_fallthru
      _
    // Predicated region
    $region14: #{multires_forward.1} parent=1 // pred_check
      _
    $region15: #{multires_forward.1} parent=1 // pred_check_branch
      %34 = sbr.rel (0) target = $region17
    $region16: #{multires_forward.1} parent=1 // pred_region
      _
    $region17: #{multires_forward.1} parent=1 // pred_fallthru
      _
    // Predicated region
    $region18: #{multires_forward.1} parent=1 // pred_check
      _
    $region19: #{multires_forward.1} parent=1 // pred_check_branch
      %36 = sbr.rel (0) target = $region21
    $region20: #{multires_forward.1} parent=1 // pred_region
      _
    $region21: #{multires_forward.1} parent=1 // pred_fallthru
      _
    // Predicated region
    $region22: #{multires_forward.1} parent=1 // pred_check
      _
    $region23: #{multires_forward.1} parent=1 // pred_check_branch
      %38 = sbr.rel (0) target = $region25
    $region24: #{multires_forward.1} parent=1 // pred_region
      _
    $region25: #{multires_forward.1} parent=1 // pred_fallthru
      _
    // Predicated region
    $region26: #{multires_forward.1} parent=1 // pred_check
      _
    $region27: #{multires_forward.1} parent=1 // pred_check_branch
      %40 = sbr.rel (0) target = $region29
    $region28: #{multires_forward.1} parent=1 // pred_region
      _
    $region29: #{multires_forward.1} parent=1 // pred_fallthru
      _
    // Predicated region
    $region30: #{multires_forward.1} parent=1 // pred_check
      _
    $region31: #{multires_forward.1} parent=1 // pred_check_branch
      %42 = sbr.rel (0) target = $region33
    $region32: #{multires_forward.1} parent=1 // pred_region
      _
    $region33: #{multires_forward.1} parent=1 // pred_fallthru
      _
    // Predicated region
    $region34: #{multires_forward.1} parent=1 // pred_check
      _
    $region35: #{multires_forward.1} parent=1 // pred_check_branch
      %44 = sbr.rel (0) target = $region37
    $region36: #{multires_forward.1} parent=1 // pred_region
      _
    $region37: #{multires_forward.1} parent=1 // pred_fallthru
      _
    // Predicated region
    $region38: #{multires_forward.1} parent=1 // pred_check
      _
    $region39: #{multires_forward.1} parent=1 // pred_check_branch
      %46 = sbr.rel (0) target = $region41
    $region40: #{multires_forward.1} parent=1 // pred_region
      _
    $region41: #{multires_forward.1} parent=1 // pred_fallthru
      _
    // Predicated region
    $region42: #{multires_forward.1} parent=1 // pred_check
      _
    $region43: #{multires_forward.1} parent=1 // pred_check_branch
      %48 = sbr.rel (0) target = $region45
    $region44: #{multires_forward.1} parent=1 // pred_region
      _
    $region45: #{multires_forward.1} parent=1 // pred_fallthru
      _
    // Predicated region
    $region46: #{multires_forward.1} parent=1 // pred_check
      _
    $region47: #{multires_forward.1} parent=1 // pred_check_branch
      %50 = sbr.rel (0) target = $region49
    $region48: #{multires_forward.1} parent=1 // pred_region
      _
    $region49: #{multires_forward.1} parent=1 // pred_fallthru
      _
    // Predicated region
    $region50: #{multires_forward.1} parent=1 // pred_check
      _
    $region51: #{multires_forward.1} parent=1 // pred_check_branch
      %52 = sbr.rel (0) target = $region53
    $region52: #{multires_forward.1} parent=1 // pred_region
      _
    $region53: #{multires_forward.1} parent=1 // pred_fallthru
      _
    // Predicated region
    $region54: #{multires_forward.1} parent=1 // pred_check
      _
    $region55: #{multires_forward.1} parent=1 // pred_check_branch
      %54 = sbr.rel (0) target = $region57
    $region56: #{multires_forward.1} parent=1 // pred_region
      _
    $region57: #{multires_forward.1} parent=1 // pred_fallthru
      _
    // Predicated region
    $region58: #{multires_forward.1} parent=1 // pred_check
      _
    $region59: #{multires_forward.1} parent=1 // pred_check_branch
      %56 = sbr.rel (0) target = $region61
    $region60: #{multires_forward.1} parent=1 // pred_region
      %58 = dma.done [#allocation3], 16
    $region61: #{multires_forward.1} parent=1 // pred_fallthru
      _
    %59 = sfence
    %v60 = vld [vmem:[%s1] sm:$0x77]
    %v61 = vld [vmem:[%s1 + $0x8] sm:$0x77]
    %v62 = vld [vmem:[%s2] sm:$0xff]
    %65 = vst [vmem:[#allocation1] ss:$2 sm:$0xff] %v60
    %s66 = scalar_lea.vmem [#allocation1], 16
    %67 = vst [vmem:[%s66] ss:$2 sm:$0xff] %v61
    %v68 = vld.sshfl [vmem:[#allocation1] sm:$0xff pattern:$0x75316420]
    %v69 = vld.sshfl [vmem:[#allocation1 + $0x8] sm:$0xff pattern:$0x75316420]
    %v70 = vld.sshfl [vmem:[#allocation1 + $0x10] sm:$0xff pattern:$0x75316420]
    %v71 = vld.sshfl [vmem:[#allocation1 + $0x18] sm:$0xff pattern:$0x75316420]
    %72 = vrot.lane.b32.xlu0 %v68, 127
    %v73 = vpop.permute.xlu0 %72
    %74 = vrot.lane.b32.xlu0 %v69, 127
    %v75 = vpop.permute.xlu0 %74
    %76 = vrot.lane.b32.xlu0 %v70, 127
    %v77 = vpop.permute.xlu0 %76
    %78 = vrot.lane.b32.xlu0 %v71, 127
    %v79 = vpop.permute.xlu0 %78
    %vm80 = vcmask 1039360
    %v81 = vsel %vm80, %v73, %v75
    %v82 = vsel %vm80, %v75, %v77
    %v83 = vsel %vm80, %v77, %v79
    %88 = vst [vmem:[#allocation1] ss:$2 sm:$0xff] %v60
    %v89 = vld.sshfl [vmem:[#allocation1] sm:$0xff pattern:$0x75316420]
    %90 = vrot.lane.b32.xlu0 %v89, 127
    %v91 = vpop.permute.xlu0 %90
    %v93 = vsel %vm80, %v79, %v91
    %v95 = vrot.slane %v82, 4
    %v96 = vrot.slane %v93, 4
    %vm97 = vcmask 1043456
    %v98 = vsel %vm97, %v81, %v95
    %v99 = vsel %vm97, %v83, %v96
    %v102 = vmax.f32 %v60, %v98
    %v103 = vmax.f32 %v61, %v99
    %106 = vst [vmem:[#allocation1] ss:$2 sm:$0xff] %v102
    %s107 = scalar_lea.vmem [#allocation1], 16
    %108 = vst [vmem:[%s107] ss:$2 sm:$0xff] %v103
    %v109 = vld.sshfl [vmem:[#allocation1] sm:$0xff pattern:$0x75316420]
    %v110 = vld.sshfl [vmem:[#allocation1 + $0x8] sm:$0xff pattern:$0x75316420]
    %v111 = vld.sshfl [vmem:[#allocation1 + $0x10] sm:$0xff pattern:$0x75316420]
    %v112 = vld.sshfl [vmem:[#allocation1 + $0x18] sm:$0xff pattern:$0x75316420]
    %113 = vrot.lane.b32.xlu0 %v109, 112
    %v114 = vpop.permute.xlu0 %113
    %115 = vrot.lane.b32.xlu0 %v110, 112
    %v116 = vpop.permute.xlu0 %115
    %117 = vrot.lane.b32.xlu0 %v111, 112
    %v118 = vpop.permute.xlu0 %117
    %119 = vrot.lane.b32.xlu0 %v112, 112
    %v120 = vpop.permute.xlu0 %119
    %vm121 = vcmask 916480
    %v122 = vsel %vm121, %v114, %v116
    %v123 = vsel %vm121, %v116, %v118
    %v124 = vsel %vm121, %v118, %v120
    %126 = vst [vmem:[#allocation1] ss:$2 sm:$0xff] %v102
    %v127 = vld.sshfl [vmem:[#allocation1] sm:$0xff pattern:$0x75316420]
    %128 = vrot.lane.b32.xlu0 %v127, 112
    %v129 = vpop.permute.xlu0 %128
    %v131 = vsel %vm121, %v120, %v129
    %v133 = vrot.slane %v123, 4
    %v134 = vrot.slane %v131, 4
    %v135 = vsel %vm97, %v122, %v133
    %v136 = vsel %vm97, %v124, %v134
    %v139 = vmax.f32 %v102, %v135
    %v140 = vmax.f32 %v103, %v136
    %v141 = vld [vmem:[%s9] sm:$0xff]
    %v142 = vld [vmem:[%s9 + $0x8] sm:$0xff]
    %v143 = vld [vmem:[%s9 + $0x10] sm:$0xff]
    %v144 = vld [vmem:[%s9 + $0x18] sm:$0xff]
    %v145 = vld [vmem:[%s9 + $0x20] sm:$0xff]
    %v146 = vld [vmem:[%s9 + $0x28] sm:$0xff]
    %v147 = vld [vmem:[%s9 + $0x30] sm:$0xff]
    %v148 = vld [vmem:[%s9 + $0x38] sm:$0xff]
    %v149 = vld [vmem:[%s9 + $0x40] sm:$0xff]
    %v150 = vld [vmem:[%s9 + $0x48] sm:$0xff]
    %v151 = vld [vmem:[%s9 + $0x50] sm:$0xff]
    %v152 = vld [vmem:[%s9 + $0x58] sm:$0xff]
    %v153 = vld [vmem:[%s9 + $0x60] sm:$0xff]
    %v154 = vld [vmem:[%s9 + $0x68] sm:$0xff]
    %v155 = vld [vmem:[%s9 + $0x70] sm:$0xff]
    %v156 = vld [vmem:[%s9 + $0x78] sm:$0xff]
    %v157 = vld [vmem:[%s9 + $0x80] sm:$0xff]
    %v158 = vld [vmem:[%s9 + $0x88] sm:$0xff]
    %v159 = vld [vmem:[%s9 + $0x90] sm:$0xff]
    %v160 = vld [vmem:[%s9 + $0x98] sm:$0xff]
    %v161 = vld [vmem:[%s9 + $0xa0] sm:$0xff]
    %v162 = vld [vmem:[%s9 + $0xa8] sm:$0xff]
    %v163 = vld [vmem:[%s9 + $0xb0] sm:$0xff]
    %v164 = vld [vmem:[%s9 + $0xb8] sm:$0xff]
    %v165 = vld [vmem:[%s9 + $0xc0] sm:$0xff]
    %v166 = vld [vmem:[%s9 + $0xc8] sm:$0xff]
    %v167 = vld [vmem:[%s9 + $0xd0] sm:$0xff]
    %v168 = vld [vmem:[%s9 + $0xd8] sm:$0xff]
    %v169 = vld [vmem:[%s9 + $0xe0] sm:$0xff]
    %v170 = vld [vmem:[%s9 + $0xe8] sm:$0xff]
    %v171 = vld [vmem:[%s9 + $0xf0] sm:$0xff]
    %v172 = vld [vmem:[%s9 + $0xf8] sm:$0xff]
    %v173 = vld [vmem:[%s9 + $0x100] sm:$0xff]
    %v174 = vld [vmem:[%s9 + $0x108] sm:$0xff]
    %v175 = vld [vmem:[%s9 + $0x110] sm:$0xff]
    %v176 = vld [vmem:[%s9 + $0x118] sm:$0xff]
    %v177 = vld [vmem:[%s9 + $0x120] sm:$0xff]
    %v178 = vld [vmem:[%s9 + $0x128] sm:$0xff]
    %v179 = vld [vmem:[%s9 + $0x130] sm:$0xff]
    %v180 = vld [vmem:[%s9 + $0x138] sm:$0xff]
    %v181 = vld [vmem:[%s9 + $0x140] sm:$0xff]
    %v182 = vld [vmem:[%s9 + $0x148] sm:$0xff]
    %v183 = vld [vmem:[%s9 + $0x150] sm:$0xff]
    %v184 = vld [vmem:[%s9 + $0x158] sm:$0xff]
    %v185 = vld [vmem:[%s9 + $0x160] sm:$0xff]
    %v186 = vld [vmem:[%s9 + $0x168] sm:$0xff]
    %v187 = vld [vmem:[%s9 + $0x170] sm:$0xff]
    %v188 = vld [vmem:[%s9 + $0x178] sm:$0xff]
    %v189 = vld [vmem:[%s9 + $0x180] sm:$0xff]
    %v190 = vld [vmem:[%s9 + $0x188] sm:$0xff]
    %v191 = vld [vmem:[%s9 + $0x190] sm:$0xff]
    %v192 = vld [vmem:[%s9 + $0x198] sm:$0xff]
    %v193 = vld [vmem:[%s9 + $0x1a0] sm:$0xff]
    %v194 = vld [vmem:[%s9 + $0x1a8] sm:$0xff]
    %v195 = vld [vmem:[%s9 + $0x1b0] sm:$0xff]
    %v196 = vld [vmem:[%s9 + $0x1b8] sm:$0xff]
    %v197 = vld [vmem:[%s9 + $0x1c0] sm:$0xff]
    %v198 = vld [vmem:[%s9 + $0x1c8] sm:$0xff]
    %v199 = vld [vmem:[%s9 + $0x1d0] sm:$0xff]
    %v200 = vld [vmem:[%s9 + $0x1d8] sm:$0xff]
    %v201 = vld [vmem:[%s9 + $0x1e0] sm:$0xff]
    %v202 = vld [vmem:[%s9 + $0x1e8] sm:$0xff]
    %v203 = vld [vmem:[%s9 + $0x1f0] sm:$0xff]
    %v204 = vld [vmem:[%s9 + $0x1f8] sm:$0xff]
    %207 = vst [vmem:[#allocation1] ss:$2 sm:$0xff] %v139
    %s208 = scalar_lea.vmem [#allocation1], 16
    %209 = vst [vmem:[%s208] ss:$2 sm:$0xff] %v140
    %v210 = vld.sshfl [vmem:[#allocation1] sm:$0xff pattern:$0x75316420]
    %v211 = vld.sshfl [vmem:[#allocation1 + $0x8] sm:$0xff pattern:$0x75316420]
    %v212 = vld.sshfl [vmem:[#allocation1 + $0x10] sm:$0xff pattern:$0x75316420]
    %v213 = vld.sshfl [vmem:[#allocation1 + $0x18] sm:$0xff pattern:$0x75316420]
    %218 = vmatpush.msra.mxu0 %v156
    %219 = vmatpush.msra.mxu0 %v155
    %220 = vmatpush.msra.mxu0 %v154
    %221 = vmatpush.msra.mxu0 %v153
    %222 = vmatpush.msra.mxu0 %v152
    %223 = vmatpush.msra.mxu0 %v151
    %224 = vmatpush.msra.mxu0 %v150
    %225 = vmatpush.msra.mxu0 %v149
    %226 = vmatpush.msra.mxu0 %v148
    %227 = vmatpush.msra.mxu0 %v147
    %228 = vmatpush.msra.mxu0 %v146
    %229 = vmatpush.msra.mxu0 %v145
    %230 = vmatpush.msra.mxu0 %v144
    %231 = vmatpush.msra.mxu0 %v143
    %232 = vmatpush.msra.mxu0 %v142
    %233 = vmatpush.msra.mxu0 %v141
    %234 = vmatmul.f32.gmra.mxu0 %v210
    %v235 = vpop.f32.mrf.mxu0
    %v236 = vadd.f32 0.0, %v235
    %237 = vdwg.mxu0
    %238 = vmatpush.msra.mxu0 %v172
    %239 = vmatpush.msra.mxu0 %v171
    %240 = vmatpush.msra.mxu0 %v170
    %241 = vmatpush.msra.mxu0 %v169
    %242 = vmatpush.msra.mxu0 %v168
    %243 = vmatpush.msra.mxu0 %v167
    %244 = vmatpush.msra.mxu0 %v166
    %245 = vmatpush.msra.mxu0 %v165
    %246 = vmatpush.msra.mxu0 %v164
    %247 = vmatpush.msra.mxu0 %v163
    %248 = vmatpush.msra.mxu0 %v162
    %249 = vmatpush.msra.mxu0 %v161
    %250 = vmatpush.msra.mxu0 %v160
    %251 = vmatpush.msra.mxu0 %v159
    %252 = vmatpush.msra.mxu0 %v158
    %253 = vmatpush.msra.mxu0 %v157
    %254 = vmatmul.f32.gmra.mxu0 %v211
    %v255 = vpop.f32.mrf.mxu0
    %v256 = vadd.f32 %v236, %v255
    %257 = vdwg.mxu0
    %258 = vmatpush.msra.mxu0 %v188
    %259 = vmatpush.msra.mxu0 %v187
    %260 = vmatpush.msra.mxu0 %v186
    %261 = vmatpush.msra.mxu0 %v185
    %262 = vmatpush.msra.mxu0 %v184
    %263 = vmatpush.msra.mxu0 %v183
    %264 = vmatpush.msra.mxu0 %v182
    %265 = vmatpush.msra.mxu0 %v181
    %266 = vmatpush.msra.mxu0 %v180
    %267 = vmatpush.msra.mxu0 %v179
    %268 = vmatpush.msra.mxu0 %v178
    %269 = vmatpush.msra.mxu0 %v177
    %270 = vmatpush.msra.mxu0 %v176
    %271 = vmatpush.msra.mxu0 %v175
    %272 = vmatpush.msra.mxu0 %v174
    %273 = vmatpush.msra.mxu0 %v173
    %274 = vmatmul.f32.gmra.mxu0 %v212
    %v275 = vpop.f32.mrf.mxu0
    %v276 = vadd.f32 %v256, %v275
    %277 = vdwg.mxu0
    %278 = vmatpush.msra.mxu0 %v204
    %279 = vmatpush.msra.mxu0 %v203
    %280 = vmatpush.msra.mxu0 %v202
    %281 = vmatpush.msra.mxu0 %v201
    %282 = vmatpush.msra.mxu0 %v200
    %283 = vmatpush.msra.mxu0 %v199
    %284 = vmatpush.msra.mxu0 %v198
    %285 = vmatpush.msra.mxu0 %v197
    %286 = vmatpush.msra.mxu0 %v196
    %287 = vmatpush.msra.mxu0 %v195
    %288 = vmatpush.msra.mxu0 %v194
    %289 = vmatpush.msra.mxu0 %v193
    %290 = vmatpush.msra.mxu0 %v192
    %291 = vmatpush.msra.mxu0 %v191
    %292 = vmatpush.msra.mxu0 %v190
    %293 = vmatpush.msra.mxu0 %v189
    %294 = vmatmul.f32.gmra.mxu0 %v213
    %v295 = vpop.f32.mrf.mxu0
    %v296 = vadd.f32 %v276, %v295
    %297 = vdwg.mxu0
    %299 = vrot.lane.b32.xlu0 %v296, 127
    %v300 = vpop.permute.xlu0 %299
    %v302 = vmax.f32 %v296, %v300
    %304 = vrot.lane.b32.xlu0 %v302, 120
    %v305 = vpop.permute.xlu0 %304
    %v307 = vmax.f32 %v302, %v305
    %v308 = vld [vmem:[%s10] sm:$0xff]
    %v309 = vld [vmem:[%s10 + $0x8] sm:$0xff]
    %v310 = vld [vmem:[%s10 + $0x10] sm:$0xff]
    %v311 = vld [vmem:[%s10 + $0x18] sm:$0xff]
    %v312 = vld [vmem:[%s10 + $0x20] sm:$0xff]
    %v313 = vld [vmem:[%s10 + $0x28] sm:$0xff]
    %v314 = vld [vmem:[%s10 + $0x30] sm:$0xff]
    %v315 = vld [vmem:[%s10 + $0x38] sm:$0xff]
    %v316 = vld [vmem:[%s10 + $0x40] sm:$0xff]
    %v317 = vld [vmem:[%s10 + $0x48] sm:$0xff]
    %v318 = vld [vmem:[%s10 + $0x50] sm:$0xff]
    %v319 = vld [vmem:[%s10 + $0x58] sm:$0xff]
    %v320 = vld [vmem:[%s10 + $0x60] sm:$0xff]
    %v321 = vld [vmem:[%s10 + $0x68] sm:$0xff]
    %v322 = vld [vmem:[%s10 + $0x70] sm:$0xff]
    %v323 = vld [vmem:[%s10 + $0x78] sm:$0xff]
    %324 = vmatpush.msra.mxu0 %v323
    %325 = vmatpush.msra.mxu0 %v322
    %326 = vmatpush.msra.mxu0 %v321
    %327 = vmatpush.msra.mxu0 %v320
    %328 = vmatpush.msra.mxu0 %v319
    %329 = vmatpush.msra.mxu0 %v318
    %330 = vmatpush.msra.mxu0 %v317
    %331 = vmatpush.msra.mxu0 %v316
    %332 = vmatpush.msra.mxu0 %v315
    %333 = vmatpush.msra.mxu0 %v314
    %334 = vmatpush.msra.mxu0 %v313
    %335 = vmatpush.msra.mxu0 %v312
    %336 = vmatpush.msra.mxu0 %v311
    %337 = vmatpush.msra.mxu0 %v310
    %338 = vmatpush.msra.mxu0 %v309
    %339 = vmatpush.msra.mxu0 %v308
    %340 = vmatmul.f32.gmra.mxu0 %v307
    %v341 = vpop.f32.mrf.mxu0
    %v342 = vadd.f32 0.0, %v341
    %343 = vdwg.mxu0
    %345 = vrot.lane.b32.xlu0 %v342, 127
    %v346 = vpop.permute.xlu0 %345
    %348 = vrot.lane.b32.xlu0 %v342, 31
    %v349 = vpop.permute.xlu0 %348
    %vm351 = vcmask 252928
    %v352 = vsel %vm351, %v346, %v349
    %v353 = vmax.f32 %v342, %v352
    %355 = vrot.lane.b32.xlu0 %v353, 124
    %v356 = vpop.permute.xlu0 %355
    %358 = vrot.lane.b32.xlu0 %v353, 28
    %v359 = vpop.permute.xlu0 %358
    %vm361 = vcmask 228352
    %v362 = vsel %vm361, %v356, %v359
    %v363 = vmax.f32 %v353, %v362
    %v364 = vld [vmem:[%s11] sm:$0xff]
    %v365 = vld [vmem:[%s11 + $0x8] sm:$0xff]
    %v366 = vld [vmem:[%s11 + $0x10] sm:$0xff]
    %v367 = vld [vmem:[%s11 + $0x18] sm:$0xff]
    %vm368 = vcmask 261120
    %v370 = vsel %vm368, %v363, 0
    %372 = vmatpush.msra.mxu0 0.0
    %373 = vmatpush.msra.mxu0 0.0
    %374 = vmatpush.msra.mxu0 0.0
    %375 = vmatpush.msra.mxu0 0.0
    %376 = vmatpush.msra.mxu0 0.0
    %377 = vmatpush.msra.mxu0 0.0
    %378 = vmatpush.msra.mxu0 0.0
    %379 = vmatpush.msra.mxu0 0.0
    %380 = vmatpush.msra.mxu0 0.0
    %381 = vmatpush.msra.mxu0 0.0
    %382 = vmatpush.msra.mxu0 0.0
    %383 = vmatpush.msra.mxu0 0.0
    %384 = vmatpush.msra.mxu0 %v367
    %385 = vmatpush.msra.mxu0 %v366
    %386 = vmatpush.msra.mxu0 %v365
    %387 = vmatpush.msra.mxu0 %v364
    %388 = vmatmul.f32.gmra.mxu0 %v370
    %v389 = vpop.f32.mrf.mxu0
    %v390 = vadd.f32 0.0, %v389
    %391 = vdwg.mxu0
    %v392 = vld [vmem:[%s5] sm:$0xff]
    %v393 = vld [vmem:[%s5 + $0x8] sm:$0xff]
    %v394 = vld [vmem:[%s5 + $0x10] sm:$0xff]
    %v395 = vld [vmem:[%s5 + $0x18] sm:$0xff]
    %v396 = vld [vmem:[%s5 + $0x20] sm:$0x1]
    %v397 = vld [vmem:[%s5 + $0x28] sm:$0x1]
    %v398 = vld [vmem:[%s5 + $0x30] sm:$0x1]
    %v399 = vld [vmem:[%s5 + $0x38] sm:$0x1]
    %400 = vst [vmem:[#allocation1] ss:$2 sm:$0xff] %v61
    %v401 = vld.sshfl [vmem:[#allocation1 + $0x8] sm:$0xff pattern:$0x75316420]
    %402 = vrot.lane.b32.xlu0 %v401, 17
    %v403 = vpop.permute.xlu0 %402
    %405 = vst [vmem:[#allocation1] ss:$2 sm:$0xff] %v60
    %s406 = scalar_lea.vmem [#allocation1], 16
    %407 = vst [vmem:[%s406] ss:$2 sm:$0xff] %v61
    %v408 = vld.sshfl [vmem:[#allocation1] sm:$0xff pattern:$0x75316420]
    %v409 = vld.sshfl [vmem:[#allocation1 + $0x8] sm:$0xff pattern:$0x75316420]
    %v410 = vld.sshfl [vmem:[#allocation1 + $0x10] sm:$0xff pattern:$0x75316420]
    %v411 = vld.sshfl [vmem:[#allocation1 + $0x18] sm:$0xff pattern:$0x75316420]
    %412 = vrot.lane.b32.xlu0 %v408, 17
    %v413 = vpop.permute.xlu0 %412
    %414 = vrot.lane.b32.xlu0 %v409, 17
    %v415 = vpop.permute.xlu0 %414
    %416 = vrot.lane.b32.xlu0 %v410, 17
    %v417 = vpop.permute.xlu0 %416
    %418 = vrot.lane.b32.xlu0 %v411, 17
    %v419 = vpop.permute.xlu0 %418
    %vm420 = vcmask 138240
    %v421 = vsel %vm420, %v413, %v415
    %v422 = vsel %vm420, %v415, %v417
    %v423 = vsel %vm420, %v417, %v419
    %v428 = vsel %vm420, %v403, %v413
    %v429 = vperm.slane %v392, 0
    %v430 = vperm.slane %v393, 0
    %v431 = vperm.slane %v394, 0
    %v432 = vperm.slane %v395, 0
    %v433 = vmul.f32 %v428, %v429
    %v434 = vmul.f32 %v421, %v430
    %v435 = vmul.f32 %v422, %v431
    %v436 = vmul.f32 %v423, %v432
    %437 = vst [vmem:[#allocation1] ss:$2 sm:$0xff] %v61
    %v438 = vld.sshfl [vmem:[#allocation1 + $0x8] sm:$0xff pattern:$0x75316420]
    %439 = vrot.lane.b32.xlu0 %v438, 16
    %v440 = vpop.permute.xlu0 %439
    %442 = vst [vmem:[#allocation1] ss:$2 sm:$0xff] %v60
    %s443 = scalar_lea.vmem [#allocation1], 16
    %444 = vst [vmem:[%s443] ss:$2 sm:$0xff] %v61
    %v445 = vld.sshfl [vmem:[#allocation1] sm:$0xff pattern:$0x75316420]
    %v446 = vld.sshfl [vmem:[#allocation1 + $0x8] sm:$0xff pattern:$0x75316420]
    %v447 = vld.sshfl [vmem:[#allocation1 + $0x10] sm:$0xff pattern:$0x75316420]
    %v448 = vld.sshfl [vmem:[#allocation1 + $0x18] sm:$0xff pattern:$0x75316420]
    %449 = vrot.lane.b32.xlu0 %v445, 16
    %v450 = vpop.permute.xlu0 %449
    %451 = vrot.lane.b32.xlu0 %v446, 16
    %v452 = vpop.permute.xlu0 %451
    %453 = vrot.lane.b32.xlu0 %v447, 16
    %v454 = vpop.permute.xlu0 %453
    %455 = vrot.lane.b32.xlu0 %v448, 16
    %v456 = vpop.permute.xlu0 %455
    %vm457 = vcmask 130048
    %v458 = vsel %vm457, %v450, %v452
    %v459 = vsel %vm457, %v452, %v454
    %v460 = vsel %vm457, %v454, %v456
    %v465 = vsel %vm457, %v440, %v450
    %v466 = vperm.slane %v392, 1
    %v467 = vperm.slane %v393, 1
    %v468 = vperm.slane %v394, 1
    %v469 = vperm.slane %v395, 1
    %v470 = vmul.f32 %v465, %v466
    %v471 = vmul.f32 %v458, %v467
    %v472 = vmul.f32 %v459, %v468
    %v473 = vmul.f32 %v460, %v469
    %474 = vst [vmem:[#allocation1] ss:$2 sm:$0xff] %v61
    %v475 = vld.sshfl [vmem:[#allocation1 + $0x8] sm:$0xff pattern:$0x75316420]
    %476 = vrot.lane.b32.xlu0 %v475, 15
    %v477 = vpop.permute.xlu0 %476
    %479 = vst [vmem:[#allocation1] ss:$2 sm:$0xff] %v60
    %s480 = scalar_lea.vmem [#allocation1], 16
    %481 = vst [vmem:[%s480] ss:$2 sm:$0xff] %v61
    %v482 = vld.sshfl [vmem:[#allocation1] sm:$0xff pattern:$0x75316420]
    %v483 = vld.sshfl [vmem:[#allocation1 + $0x8] sm:$0xff pattern:$0x75316420]
    %v484 = vld.sshfl [vmem:[#allocation1 + $0x10] sm:$0xff pattern:$0x75316420]
    %v485 = vld.sshfl [vmem:[#allocation1 + $0x18] sm:$0xff pattern:$0x75316420]
    %486 = vrot.lane.b32.xlu0 %v482, 15
    %v487 = vpop.permute.xlu0 %486
    %488 = vrot.lane.b32.xlu0 %v483, 15
    %v489 = vpop.permute.xlu0 %488
    %490 = vrot.lane.b32.xlu0 %v484, 15
    %v491 = vpop.permute.xlu0 %490
    %492 = vrot.lane.b32.xlu0 %v485, 15
    %v493 = vpop.permute.xlu0 %492
    %vm494 = vcmask 121856
    %v495 = vsel %vm494, %v487, %v489
    %v496 = vsel %vm494, %v489, %v491
    %v497 = vsel %vm494, %v491, %v493
    %v502 = vsel %vm494, %v477, %v487
    %v503 = vperm.slane %v392, 2
    %v504 = vperm.slane %v393, 2
    %v505 = vperm.slane %v394, 2
    %v506 = vperm.slane %v395, 2
    %v507 = vmul.f32 %v502, %v503
    %v508 = vmul.f32 %v495, %v504
    %v509 = vmul.f32 %v496, %v505
    %v510 = vmul.f32 %v497, %v506
    %511 = vst [vmem:[#allocation1] ss:$2 sm:$0xff] %v61
    %v512 = vld.sshfl [vmem:[#allocation1 + $0x8] sm:$0xff pattern:$0x75316420]
    %513 = vrot.lane.b32.xlu0 %v512, 1
    %v514 = vpop.permute.xlu0 %513
    %516 = vst [vmem:[#allocation1] ss:$2 sm:$0xff] %v60
    %s517 = scalar_lea.vmem [#allocation1], 16
    %518 = vst [vmem:[%s517] ss:$2 sm:$0xff] %v61
    %v519 = vld.sshfl [vmem:[#allocation1] sm:$0xff pattern:$0x75316420]
    %v520 = vld.sshfl [vmem:[#allocation1 + $0x8] sm:$0xff pattern:$0x75316420]
    %v521 = vld.sshfl [vmem:[#allocation1 + $0x10] sm:$0xff pattern:$0x75316420]
    %v522 = vld.sshfl [vmem:[#allocation1 + $0x18] sm:$0xff pattern:$0x75316420]
    %523 = vrot.lane.b32.xlu0 %v519, 1
    %v524 = vpop.permute.xlu0 %523
    %525 = vrot.lane.b32.xlu0 %v520, 1
    %v526 = vpop.permute.xlu0 %525
    %527 = vrot.lane.b32.xlu0 %v521, 1
    %v528 = vpop.permute.xlu0 %527
    %529 = vrot.lane.b32.xlu0 %v522, 1
    %v530 = vpop.permute.xlu0 %529
    %vm531 = vcmask 7168
    %v532 = vsel %vm531, %v524, %v526
    %v533 = vsel %vm531, %v526, %v528
    %v534 = vsel %vm531, %v528, %v530
    %v539 = vsel %vm531, %v514, %v524
    %v540 = vperm.slane %v392, 3
    %v541 = vperm.slane %v393, 3
    %v542 = vperm.slane %v394, 3
    %v543 = vperm.slane %v395, 3
    %v544 = vmul.f32 %v539, %v540
    %v545 = vmul.f32 %v532, %v541
    %v546 = vmul.f32 %v533, %v542
    %v547 = vmul.f32 %v534, %v543
    %v548 = vperm.slane %v392, 4
    %v549 = vperm.slane %v393, 4
    %v550 = vperm.slane %v394, 4
    %v551 = vperm.slane %v395, 4
    %v556 = vrot.slane %v549, 4
    %v557 = vrot.slane %v551, 4
    %v558 = vsel %vm97, %v548, %v556
    %v559 = vsel %vm97, %v550, %v557
    %v562 = vmul.f32 %v60, %v558
    %v563 = vmul.f32 %v61, %v559
    %v564 = vperm.slane %v392, 5
    %v565 = vperm.slane %v393, 5
    %v566 = vperm.slane %v394, 5
    %v567 = vperm.slane %v395, 5
    %v568 = vmul.f32 %v81, %v564
    %v569 = vmul.f32 %v82, %v565
    %v570 = vmul.f32 %v83, %v566
    %v571 = vmul.f32 %v93, %v567
    %572 = vst [vmem:[#allocation1] ss:$2 sm:$0xff] %v60
    %s573 = scalar_lea.vmem [#allocation1], 16
    %574 = vst [vmem:[%s573] ss:$2 sm:$0xff] %v61
    %v575 = vld.sshfl [vmem:[#allocation1] sm:$0xff pattern:$0x75316420]
    %v576 = vld.sshfl [vmem:[#allocation1 + $0x8] sm:$0xff pattern:$0x75316420]
    %v577 = vld.sshfl [vmem:[#allocation1 + $0x10] sm:$0xff pattern:$0x75316420]
    %v578 = vld.sshfl [vmem:[#allocation1 + $0x18] sm:$0xff pattern:$0x75316420]
    %579 = vrot.lane.b32.xlu0 %v575, 113
    %v580 = vpop.permute.xlu0 %579
    %581 = vrot.lane.b32.xlu0 %v576, 113
    %v582 = vpop.permute.xlu0 %581
    %583 = vrot.lane.b32.xlu0 %v577, 113
    %v584 = vpop.permute.xlu0 %583
    %585 = vrot.lane.b32.xlu0 %v578, 113
    %v586 = vpop.permute.xlu0 %585
    %vm587 = vcmask 924672
    %v588 = vsel %vm587, %v580, %v582
    %v589 = vsel %vm587, %v582, %v584
    %v590 = vsel %vm587, %v584, %v586
    %595 = vst [vmem:[#allocation1] ss:$2 sm:$0xff] %v60
    %v596 = vld.sshfl [vmem:[#allocation1] sm:$0xff pattern:$0x75316420]
    %597 = vrot.lane.b32.xlu0 %v596, 113
    %v598 = vpop.permute.xlu0 %597
    %v600 = vsel %vm587, %v586, %v598
    %v601 = vperm.slane %v392, 6
    %v602 = vperm.slane %v393, 6
    %v603 = vperm.slane %v394, 6
    %v604 = vperm.slane %v395, 6
    %v605 = vmul.f32 %v588, %v601
    %v606 = vmul.f32 %v589, %v602
    %v607 = vmul.f32 %v590, %v603
    %v608 = vmul.f32 %v600, %v604
    %609 = vst [vmem:[#allocation1] ss:$2 sm:$0xff] %v60
    %s610 = scalar_lea.vmem [#allocation1], 16
    %611 = vst [vmem:[%s610] ss:$2 sm:$0xff] %v61
    %v612 = vld.sshfl [vmem:[#allocation1] sm:$0xff pattern:$0x75316420]
    %v613 = vld.sshfl [vmem:[#allocation1 + $0x8] sm:$0xff pattern:$0x75316420]
    %v614 = vld.sshfl [vmem:[#allocation1 + $0x10] sm:$0xff pattern:$0x75316420]
    %v615 = vld.sshfl [vmem:[#allocation1 + $0x18] sm:$0xff pattern:$0x75316420]
    %616 = vrot.lane.b32.xlu0 %v612, 112
    %v617 = vpop.permute.xlu0 %616
    %618 = vrot.lane.b32.xlu0 %v613, 112
    %v619 = vpop.permute.xlu0 %618
    %620 = vrot.lane.b32.xlu0 %v614, 112
    %v621 = vpop.permute.xlu0 %620
    %622 = vrot.lane.b32.xlu0 %v615, 112
    %v623 = vpop.permute.xlu0 %622
    %v624 = vsel %vm121, %v617, %v619
    %v625 = vsel %vm121, %v619, %v621
    %v626 = vsel %vm121, %v621, %v623
    %631 = vst [vmem:[#allocation1] ss:$2 sm:$0xff] %v60
    %v632 = vld.sshfl [vmem:[#allocation1] sm:$0xff pattern:$0x75316420]
    %633 = vrot.lane.b32.xlu0 %v632, 112
    %v634 = vpop.permute.xlu0 %633
    %v636 = vsel %vm121, %v623, %v634
    %v637 = vperm.slane %v392, 7
    %v638 = vperm.slane %v393, 7
    %v639 = vperm.slane %v394, 7
    %v640 = vperm.slane %v395, 7
    %v641 = vmul.f32 %v624, %v637
    %v642 = vmul.f32 %v625, %v638
    %v643 = vmul.f32 %v626, %v639
    %v644 = vmul.f32 %v636, %v640
    %645 = vst [vmem:[#allocation1] ss:$2 sm:$0xff] %v60
    %s646 = scalar_lea.vmem [#allocation1], 16
    %647 = vst [vmem:[%s646] ss:$2 sm:$0xff] %v61
    %v648 = vld.sshfl [vmem:[#allocation1] sm:$0xff pattern:$0x75316420]
    %v649 = vld.sshfl [vmem:[#allocation1 + $0x8] sm:$0xff pattern:$0x75316420]
    %v650 = vld.sshfl [vmem:[#allocation1 + $0x10] sm:$0xff pattern:$0x75316420]
    %v651 = vld.sshfl [vmem:[#allocation1 + $0x18] sm:$0xff pattern:$0x75316420]
    %652 = vrot.lane.b32.xlu0 %v648, 111
    %v653 = vpop.permute.xlu0 %652
    %654 = vrot.lane.b32.xlu0 %v649, 111
    %v655 = vpop.permute.xlu0 %654
    %656 = vrot.lane.b32.xlu0 %v650, 111
    %v657 = vpop.permute.xlu0 %656
    %658 = vrot.lane.b32.xlu0 %v651, 111
    %v659 = vpop.permute.xlu0 %658
    %vm660 = vcmask 908288
    %v661 = vsel %vm660, %v653, %v655
    %v662 = vsel %vm660, %v655, %v657
    %v663 = vsel %vm660, %v657, %v659
    %668 = vst [vmem:[#allocation1] ss:$2 sm:$0xff] %v60
    %v669 = vld.sshfl [vmem:[#allocation1] sm:$0xff pattern:$0x75316420]
    %670 = vrot.lane.b32.xlu0 %v669, 111
    %v671 = vpop.permute.xlu0 %670
    %v673 = vsel %vm660, %v659, %v671
    %v674 = vperm.slane %v396, 0
    %v675 = vperm.slane %v397, 0
    %v676 = vperm.slane %v398, 0
    %v677 = vperm.slane %v399, 0
    %v678 = vmul.f32 %v661, %v674
    %v679 = vmul.f32 %v662, %v675
    %v680 = vmul.f32 %v663, %v676
    %v681 = vmul.f32 %v673, %v677
    %v686 = vrot.slane %v470, 5
    %v687 = vrot.slane %v471, 5
    %v688 = vrot.slane %v472, 5
    %v689 = vrot.slane %v473, 5
    %v698 = vrot.slane %v507, 2
    %v699 = vrot.slane %v508, 2
    %v700 = vrot.slane %v509, 2
    %v701 = vrot.slane %v510, 2
    %v710 = vrot.slane %v544, 7
    %v711 = vrot.slane %v545, 7
    %v712 = vrot.slane %v546, 7
    %v713 = vrot.slane %v547, 7
    %s720 = scalar_lea.vmem [#allocation1], 1
    %721 = vst [vmem:[%s720] ss:$2 sm:$0xff] %v562
    %s722 = scalar_lea.vmem [#allocation1], 17
    %723 = vst [vmem:[%s722] ss:$2 sm:$0xff] %v563
    %v724 = vld.sshfl [vmem:[#allocation1] sm:$0xff pattern:$0x75316420]
    %v725 = vld.sshfl [vmem:[#allocation1 + $0x8] sm:$0xff pattern:$0x75316420]
    %v726 = vld.sshfl [vmem:[#allocation1 + $0x10] sm:$0xff pattern:$0x75316420]
    %v727 = vld.sshfl [vmem:[#allocation1 + $0x18] sm:$0xff pattern:$0x75316420]
    %v736 = vrot.slane %v568, 1
    %v737 = vrot.slane %v569, 1
    %v738 = vrot.slane %v570, 1
    %v739 = vrot.slane %v571, 1
    %v748 = vrot.slane %v605, 6
    %v749 = vrot.slane %v606, 6
    %v750 = vrot.slane %v607, 6
    %v751 = vrot.slane %v608, 6
    %v760 = vrot.slane %v641, 3
    %v761 = vrot.slane %v642, 3
    %v762 = vrot.slane %v643, 3
    %v763 = vrot.slane %v644, 3
    %vm768 = vcmask 1042432
    %v769 = vsel %vm768, %v433, %v686
    %v770 = vsel %vm768, %v434, %v687
    %v771 = vsel %vm768, %v435, %v688
    %v772 = vsel %vm768, %v436, %v689
    %vm773 = vcmask 1045504
    %v774 = vsel %vm773, %v769, %v698
    %v775 = vsel %vm773, %v770, %v699
    %v776 = vsel %vm773, %v771, %v700
    %v777 = vsel %vm773, %v772, %v701
    %vm778 = vcmask 1040384
    %v779 = vsel %vm778, %v698, %v710
    %v780 = vsel %vm778, %v699, %v711
    %v781 = vsel %vm778, %v700, %v712
    %v782 = vsel %vm778, %v701, %v713
    %v783 = vsel %vm97, %v779, %v724
    %v784 = vsel %vm97, %v780, %v725
    %v785 = vsel %vm97, %v781, %v726
    %v786 = vsel %vm97, %v782, %v727
    %vm787 = vcmask 1046528
    %v788 = vsel %vm787, %v783, %v736
    %v789 = vsel %vm787, %v784, %v737
    %v790 = vsel %vm787, %v785, %v738
    %v791 = vsel %vm787, %v786, %v739
    %vm792 = vcmask 1041408
    %v793 = vsel %vm792, %v736, %v748
    %v794 = vsel %vm792, %v737, %v749
    %v795 = vsel %vm792, %v738, %v750
    %v796 = vsel %vm792, %v739, %v751
    %vm797 = vcmask 1044480
    %v798 = vsel %vm797, %v793, %v760
    %v799 = vsel %vm797, %v794, %v761
    %v800 = vsel %vm797, %v795, %v762
    %v801 = vsel %vm797, %v796, %v763
    %v802 = vld [vmem:[%s6] sm:$0xff]
    %v803 = vld [vmem:[%s6 + $0x8] sm:$0x1]
    %804 = vrot.lane.b32.xlu0 %v296, 9
    %v805 = vpop.permute.xlu0 %804
    %v807 = vperm.slane %v802, 0
    %v808 = vmul.f32 %v805, %v807
    %809 = vrot.lane.b32.xlu0 %v296, 8
    %v810 = vpop.permute.xlu0 %809
    %vm812 = vcmask 64512
    %v813 = vperm.slane %v802, 1
    %v814 = vmul.f32 %v810, %v813
    %815 = vrot.lane.b32.xlu0 %v296, 7
    %v816 = vpop.permute.xlu0 %815
    %vm818 = vcmask 56320
    %v819 = vperm.slane %v802, 2
    %v820 = vmul.f32 %v816, %v819
    %821 = vrot.lane.b32.xlu0 %v296, 1
    %v822 = vpop.permute.xlu0 %821
    %v824 = vperm.slane %v802, 3
    %v825 = vmul.f32 %v822, %v824
    %v826 = vperm.slane %v802, 4
    %v827 = vmul.f32 %v296, %v826
    %v828 = vperm.slane %v802, 5
    %v829 = vmul.f32 %v300, %v828
    %830 = vrot.lane.b32.xlu0 %v296, 121
    %v831 = vpop.permute.xlu0 %830
    %v833 = vperm.slane %v802, 6
    %v834 = vmul.f32 %v831, %v833
    %835 = vrot.lane.b32.xlu0 %v296, 120
    %v836 = vpop.permute.xlu0 %835
    %v838 = vperm.slane %v802, 7
    %v839 = vmul.f32 %v836, %v838
    %840 = vrot.lane.b32.xlu0 %v296, 119
    %v841 = vpop.permute.xlu0 %840
    %v843 = vperm.slane %v803, 0
    %v844 = vmul.f32 %v841, %v843
    %v846 = vrot.slane %v814, 5
    %v849 = vrot.slane %v820, 2
    %v852 = vrot.slane %v825, 7
    %v855 = vrot.slane %v827, 4
    %v858 = vrot.slane %v829, 1
    %v861 = vrot.slane %v834, 6
    %v864 = vrot.slane %v839, 3
    %v866 = vsel %vm768, %v808, %v846
    %v867 = vsel %vm773, %v866, %v849
    %v868 = vsel %vm778, %v849, %v852
    %v869 = vsel %vm97, %v868, %v855
    %v870 = vsel %vm787, %v869, %v858
    %v871 = vsel %vm792, %v858, %v861
    %v872 = vsel %vm797, %v871, %v864
    %v873 = vld [vmem:[%s7] sm:$0xff]
    %v874 = vld [vmem:[%s7 + $0x8] sm:$0x1]
    %875 = vrot.lane.b32.xlu0 %v342, 101
    %v876 = vpop.permute.xlu0 %875
    %878 = vrot.lane.b32.xlu0 %v342, 5
    %v879 = vpop.permute.xlu0 %878
    %vm881 = vcmask 39936
    %v882 = vsel %vm881, %v876, %v879
    %v883 = vperm.slane %v873, 0
    %v884 = vmul.f32 %v882, %v883
    %885 = vrot.lane.b32.xlu0 %v342, 100
    %v886 = vpop.permute.xlu0 %885
    %888 = vrot.lane.b32.xlu0 %v342, 4
    %v889 = vpop.permute.xlu0 %888
    %vm891 = vcmask 31744
    %v892 = vsel %vm891, %v886, %v889
    %v893 = vperm.slane %v873, 1
    %v894 = vmul.f32 %v892, %v893
    %895 = vrot.lane.b32.xlu0 %v342, 99
    %v896 = vpop.permute.xlu0 %895
    %898 = vrot.lane.b32.xlu0 %v342, 3
    %v899 = vpop.permute.xlu0 %898
    %vm901 = vcmask 23552
    %v902 = vsel %vm901, %v896, %v899
    %v903 = vperm.slane %v873, 2
    %v904 = vmul.f32 %v902, %v903
    %905 = vrot.lane.b32.xlu0 %v342, 97
    %v906 = vpop.permute.xlu0 %905
    %908 = vrot.lane.b32.xlu0 %v342, 1
    %v909 = vpop.permute.xlu0 %908
    %v911 = vsel %vm531, %v906, %v909
    %v912 = vperm.slane %v873, 3
    %v913 = vmul.f32 %v911, %v912
    %v914 = vperm.slane %v873, 4
    %v915 = vmul.f32 %v342, %v914
    %v916 = vperm.slane %v873, 5
    %v917 = vmul.f32 %v352, %v916
    %918 = vrot.lane.b32.xlu0 %v342, 125
    %v919 = vpop.permute.xlu0 %918
    %921 = vrot.lane.b32.xlu0 %v342, 29
    %v922 = vpop.permute.xlu0 %921
    %vm924 = vcmask 236544
    %v925 = vsel %vm924, %v919, %v922
    %v926 = vperm.slane %v873, 6
    %v927 = vmul.f32 %v925, %v926
    %928 = vrot.lane.b32.xlu0 %v342, 124
    %v929 = vpop.permute.xlu0 %928
    %931 = vrot.lane.b32.xlu0 %v342, 28
    %v932 = vpop.permute.xlu0 %931
    %v934 = vsel %vm361, %v929, %v932
    %v935 = vperm.slane %v873, 7
    %v936 = vmul.f32 %v934, %v935
    %937 = vrot.lane.b32.xlu0 %v342, 123
    %v938 = vpop.permute.xlu0 %937
    %940 = vrot.lane.b32.xlu0 %v342, 27
    %v941 = vpop.permute.xlu0 %940
    %vm943 = vcmask 220160
    %v944 = vsel %vm943, %v938, %v941
    %v945 = vperm.slane %v874, 0
    %v946 = vmul.f32 %v944, %v945
    %v948 = vrot.slane %v894, 5
    %v951 = vrot.slane %v904, 2
    %v954 = vrot.slane %v913, 7
    %v957 = vrot.slane %v915, 4
    %v960 = vrot.slane %v917, 1
    %v963 = vrot.slane %v927, 6
    %v966 = vrot.slane %v936, 3
    %v968 = vsel %vm768, %v884, %v948
    %v969 = vsel %vm773, %v968, %v951
    %v970 = vsel %vm778, %v951, %v954
    %v971 = vsel %vm97, %v970, %v957
    %v972 = vsel %vm787, %v971, %v960
    %v973 = vsel %vm792, %v960, %v963
    %v974 = vsel %vm797, %v973, %v966
    %v975 = vld [vmem:[%s8] sm:$0xff]
    %v976 = vld [vmem:[%s8 + $0x8] sm:$0x1]
    %978 = vrot.lane.b32.xlu0 %v390, 123
    %v979 = vpop.permute.xlu0 %978
    %981 = vrot.lane.b32.xlu0 %v390, 3
    %v982 = vpop.permute.xlu0 %981
    %v984 = vsel %vm901, %v979, %v982
    %v985 = vperm.slane %v975, 0
    %v986 = vmul.f32 %v984, %v985
    %987 = vrot.lane.b32.xlu0 %v390, 122
    %v988 = vpop.permute.xlu0 %987
    %990 = vrot.lane.b32.xlu0 %v390, 2
    %v991 = vpop.permute.xlu0 %990
    %vm993 = vcmask 15360
    %v994 = vsel %vm993, %v988, %v991
    %v995 = vperm.slane %v975, 1
    %v996 = vmul.f32 %v994, %v995
    %997 = vrot.lane.b32.xlu0 %v390, 121
    %v998 = vpop.permute.xlu0 %997
    %1000 = vrot.lane.b32.xlu0 %v390, 1
    %v1001 = vpop.permute.xlu0 %1000
    %v1003 = vsel %vm531, %v998, %v1001
    %v1004 = vperm.slane %v975, 2
    %v1005 = vmul.f32 %v1003, %v1004
    %v1006 = vperm.slane %v975, 3
    %v1007 = vmul.f32 %v1003, %v1006
    %v1008 = vperm.slane %v975, 4
    %v1009 = vmul.f32 %v390, %v1008
    %1010 = vrot.lane.b32.xlu0 %v390, 127
    %v1011 = vpop.permute.xlu0 %1010
    %1013 = vrot.lane.b32.xlu0 %v390, 7
    %v1014 = vpop.permute.xlu0 %1013
    %v1016 = vsel %vm818, %v1011, %v1014
    %v1017 = vperm.slane %v975, 5
    %v1018 = vmul.f32 %v1016, %v1017
    %v1019 = vperm.slane %v975, 6
    %v1020 = vmul.f32 %v1016, %v1019
    %1021 = vrot.lane.b32.xlu0 %v390, 126
    %v1022 = vpop.permute.xlu0 %1021
    %1024 = vrot.lane.b32.xlu0 %v390, 6
    %v1025 = vpop.permute.xlu0 %1024
    %vm1027 = vcmask 48128
    %v1028 = vsel %vm1027, %v1022, %v1025
    %v1029 = vperm.slane %v975, 7
    %v1030 = vmul.f32 %v1028, %v1029
    %1031 = vrot.lane.b32.xlu0 %v390, 125
    %v1032 = vpop.permute.xlu0 %1031
    %1034 = vrot.lane.b32.xlu0 %v390, 5
    %v1035 = vpop.permute.xlu0 %1034
    %v1037 = vsel %vm881, %v1032, %v1035
    %v1038 = vperm.slane %v976, 0
    %v1039 = vmul.f32 %v1037, %v1038
    %v1041 = vrot.slane %v996, 5
    %v1044 = vrot.slane %v1005, 2
    %v1047 = vrot.slane %v1007, 7
    %v1050 = vrot.slane %v1009, 4
    %v1053 = vrot.slane %v1018, 1
    %v1056 = vrot.slane %v1020, 6
    %v1059 = vrot.slane %v1030, 3
    %v1061 = vsel %vm768, %v986, %v1041
    %v1062 = vsel %vm773, %v1061, %v1044
    %v1063 = vsel %vm778, %v1044, %v1047
    %v1064 = vsel %vm97, %v1063, %v1050
    %v1065 = vsel %vm787, %v1064, %v1053
    %v1066 = vsel %vm792, %v1053, %v1056
    %v1067 = vsel %vm797, %v1066, %v1059
    %1072 = vrot.lane.b32.xlu0 %v1062, 32
    %v1073 = vpop.permute.xlu0 %1072
    %1074 = vrot.lane.b32.xlu0 %v1065, 32
    %v1075 = vpop.permute.xlu0 %1074
    %1076 = vrot.lane.b32.xlu0 %v1067, 32
    %v1077 = vpop.permute.xlu0 %1076
    %1078 = vrot.lane.b32.xlu0 %v1039, 32
    %v1079 = vpop.permute.xlu0 %1078
    %v1084 = vsel %vm368, %v969, %v1073
    %v1085 = vsel %vm368, %v972, %v1075
    %v1086 = vsel %vm368, %v974, %v1077
    %v1087 = vsel %vm368, %v946, %v1079
    %v1089 = vsel %vm943, %v62, 0
    %v1092 = vsel %vm768, %v678, 0
    %v1095 = vsel %vm768, %v679, 0
    %v1098 = vsel %vm768, %v680, 0
    %v1101 = vsel %vm768, %v681, 0
    %v1104 = vsel %vm768, %v844, 0
    %v1107 = vsel %vm768, %v1087, 0
    %1109 = vmatpush.msra.mxu0 0.0
    %1110 = vmatpush.msra.mxu0 0.0
    %1111 = vmatpush.msra.mxu0 0.0
    %1112 = vmatpush.msra.mxu0 0.0
    %1113 = vmatpush.msra.mxu0 0.0
    %1114 = vmatpush.msra.mxu0 0.0
    %1115 = vmatpush.msra.mxu0 0.0
    %1116 = vmatpush.msra.mxu0 0.0
    %1117 = vmatpush.msra.mxu0 0.0
    %1118 = vmatpush.msra.mxu0 0.0
    %1119 = vmatpush.msra.mxu0 0.0
    %1120 = vmatpush.msra.mxu0 0.0
    %1121 = vmatpush.msra.mxu0 %v1092
    %1122 = vmatpush.msra.mxu0 %v798
    %1123 = vmatpush.msra.mxu0 %v788
    %1124 = vmatpush.msra.mxu0 %v774
    %1125 = vmatmul.f32.gmra.mxu0 %v1089
    %v1126 = vpop.f32.mrf.mxu0
    %v1127 = vadd.f32 0.0, %v1126
    %1128 = vdwg.mxu0
    %1129 = vmatpush.msra.mxu0 0.0
    %1130 = vmatpush.msra.mxu0 0.0
    %1131 = vmatpush.msra.mxu0 0.0
    %1132 = vmatpush.msra.mxu0 0.0
    %1133 = vmatpush.msra.mxu0 0.0
    %1134 = vmatpush.msra.mxu0 0.0
    %1135 = vmatpush.msra.mxu0 0.0
    %1136 = vmatpush.msra.mxu0 0.0
    %1137 = vmatpush.msra.mxu0 0.0
    %1138 = vmatpush.msra.mxu0 0.0
    %1139 = vmatpush.msra.mxu0 0.0
    %1140 = vmatpush.msra.mxu0 0.0
    %1141 = vmatpush.msra.mxu0 %v1095
    %1142 = vmatpush.msra.mxu0 %v799
    %1143 = vmatpush.msra.mxu0 %v789
    %1144 = vmatpush.msra.mxu0 %v775
    %1145 = vmatmul.f32.gmra.mxu0 %v1089
    %v1146 = vpop.f32.mrf.mxu0
    %v1147 = vadd.f32 0.0, %v1146
    %1148 = vdwg.mxu0
    %1149 = vmatpush.msra.mxu0 0.0
    %1150 = vmatpush.msra.mxu0 0.0
    %1151 = vmatpush.msra.mxu0 0.0
    %1152 = vmatpush.msra.mxu0 0.0
    %1153 = vmatpush.msra.mxu0 0.0
    %1154 = vmatpush.msra.mxu0 0.0
    %1155 = vmatpush.msra.mxu0 0.0
    %1156 = vmatpush.msra.mxu0 0.0
    %1157 = vmatpush.msra.mxu0 0.0
    %1158 = vmatpush.msra.mxu0 0.0
    %1159 = vmatpush.msra.mxu0 0.0
    %1160 = vmatpush.msra.mxu0 0.0
    %1161 = vmatpush.msra.mxu0 %v1098
    %1162 = vmatpush.msra.mxu0 %v800
    %1163 = vmatpush.msra.mxu0 %v790
    %1164 = vmatpush.msra.mxu0 %v776
    %1165 = vmatmul.f32.gmra.mxu0 %v1089
    %v1166 = vpop.f32.mrf.mxu0
    %v1167 = vadd.f32 0.0, %v1166
    %1168 = vdwg.mxu0
    %1169 = vmatpush.msra.mxu0 0.0
    %1170 = vmatpush.msra.mxu0 0.0
    %1171 = vmatpush.msra.mxu0 0.0
    %1172 = vmatpush.msra.mxu0 0.0
    %1173 = vmatpush.msra.mxu0 0.0
    %1174 = vmatpush.msra.mxu0 0.0
    %1175 = vmatpush.msra.mxu0 0.0
    %1176 = vmatpush.msra.mxu0 0.0
    %1177 = vmatpush.msra.mxu0 0.0
    %1178 = vmatpush.msra.mxu0 0.0
    %1179 = vmatpush.msra.mxu0 0.0
    %1180 = vmatpush.msra.mxu0 0.0
    %1181 = vmatpush.msra.mxu0 %v1101
    %1182 = vmatpush.msra.mxu0 %v801
    %1183 = vmatpush.msra.mxu0 %v791
    %1184 = vmatpush.msra.mxu0 %v777
    %1185 = vmatmul.f32.gmra.mxu0 %v1089
    %v1186 = vpop.f32.mrf.mxu0
    %v1187 = vadd.f32 0.0, %v1186
    %1188 = vdwg.mxu0
    %1189 = vmatpush.msra.mxu0 0.0
    %1190 = vmatpush.msra.mxu0 0.0
    %1191 = vmatpush.msra.mxu0 0.0
    %1192 = vmatpush.msra.mxu0 0.0
    %1193 = vmatpush.msra.mxu0 0.0
    %1194 = vmatpush.msra.mxu0 0.0
    %1195 = vmatpush.msra.mxu0 0.0
    %1196 = vmatpush.msra.mxu0 0.0
    %1197 = vmatpush.msra.mxu0 0.0
    %1198 = vmatpush.msra.mxu0 0.0
    %1199 = vmatpush.msra.mxu0 0.0
    %1200 = vmatpush.msra.mxu0 0.0
    %1201 = vmatpush.msra.mxu0 %v1104
    %1202 = vmatpush.msra.mxu0 %v872
    %1203 = vmatpush.msra.mxu0 %v870
    %1204 = vmatpush.msra.mxu0 %v867
    %1205 = vmatmul.f32.gmra.mxu0 %v1089
    %v1206 = vpop.f32.mrf.mxu0
    %v1207 = vadd.f32 0.0, %v1206
    %1208 = vdwg.mxu0
    %1209 = vmatpush.msra.mxu0 0.0
    %1210 = vmatpush.msra.mxu0 0.0
    %1211 = vmatpush.msra.mxu0 0.0
    %1212 = vmatpush.msra.mxu0 0.0
    %1213 = vmatpush.msra.mxu0 0.0
    %1214 = vmatpush.msra.mxu0 0.0
    %1215 = vmatpush.msra.mxu0 0.0
    %1216 = vmatpush.msra.mxu0 0.0
    %1217 = vmatpush.msra.mxu0 0.0
    %1218 = vmatpush.msra.mxu0 0.0
    %1219 = vmatpush.msra.mxu0 0.0
    %1220 = vmatpush.msra.mxu0 0.0
    %1221 = vmatpush.msra.mxu0 %v1107
    %1222 = vmatpush.msra.mxu0 %v1086
    %1223 = vmatpush.msra.mxu0 %v1085
    %1224 = vmatpush.msra.mxu0 %v1084
    %1225 = vmatmul.f32.gmra.mxu0 %v1089
    %v1226 = vpop.f32.mrf.mxu0
    %v1227 = vadd.f32 0.0, %v1226
    %1228 = vdwg.mxu0
    %v1229 = vmax.f32 %v1127, 0.0
    %v1230 = vmax.f32 %v1147, 0.0
    %v1231 = vmax.f32 %v1167, 0.0
    %v1232 = vmax.f32 %v1187, 0.0
    %v1233 = vmax.f32 %v1207, 0.0
    %v1234 = vmax.f32 %v1227, 0.0
    %v1235 = vadd.f32 %v1229, %v1230
    %v1236 = vadd.f32 %v1235, %v1231
    %v1237 = vadd.f32 %v1236, %v1232
    %1238 = vadd.xlane.f32.xlu0 %v1237
    %v1239 = vpop.xlane.xlu0 %1238
    %v1240 = vrcp.pop 512.0
    %v1241 = vmul.f32 512.0, %v1240
    %v1242 = vsub.f32 1.0, %v1241
    %v1243 = vmul.f32 %v1240, %v1242
    %v1244 = vadd.f32 %v1240, %v1243
    %vm1245 = vweird.f32 %v1240
    %v1246 = vsel %vm1245, %v1240, %v1244
    %v1247 = vmul.f32 %v1239, %v1246
    %v1248 = vmul.f32 %v1229, %v1229
    %v1249 = vmul.f32 %v1230, %v1230
    %v1250 = vmul.f32 %v1231, %v1231
    %v1251 = vmul.f32 %v1232, %v1232
    %v1252 = vadd.f32 %v1248, %v1249
    %v1253 = vadd.f32 %v1252, %v1250
    %v1254 = vadd.f32 %v1253, %v1251
    %1255 = vadd.xlane.f32.xlu0 %v1254
    %v1256 = vpop.xlane.xlu0 %1255
    %v1257 = vmul.f32 %v1256, %v1246
    %v1258 = vmul.f32 %v1247, %v1247
    %v1259 = vsub.f32 %v1257, %v1258
    %s1260 = sld [smem:[#allocation2]]
    %v1261 = vadd.f32 %v1259, 1e-05
    %v1262 = vrsqrt.pop %v1261
    %v1263 = vmul.f32 %v1262, %v1261
    %v1264 = vmul.f32 %v1263, %v1262
    %v1265 = vmul.f32 0.5, %v1264
    %v1266 = vsub.f32 1.5, %v1265
    %v1267 = vmul.f32 %v1262, %v1266
    %vm1268 = vweird.f32 %v1261
    %vm1269 = vweird.f32 %v1262
    %vm1270 = vmor %vm1268, %vm1269
    %v1271 = vsel %vm1270, %v1262, %v1267
    %v1272 = vstv %s1260
    %v1273 = vmul.f32 %v1272, %v1271
    %v1274 = vmul.f32 %v1229, %v1273
    %v1275 = vmul.f32 %v1230, %v1273
    %v1276 = vmul.f32 %v1231, %v1273
    %v1277 = vmul.f32 %v1232, %v1273
    %v1278 = vmul.f32 %v1247, %v1273
    %v1279 = vsub.f32 %v1274, %v1278
    %v1280 = vsub.f32 %v1275, %v1278
    %v1281 = vsub.f32 %v1276, %v1278
    %v1282 = vsub.f32 %v1277, %v1278
    %1283 = vadd.xlane.f32.xlu0 %v1233
    %v1284 = vpop.xlane.xlu0 %1283
    %v1285 = vrcp.pop 128.0
    %v1286 = vmul.f32 128.0, %v1285
    %v1287 = vsub.f32 1.0, %v1286
    %v1288 = vmul.f32 %v1285, %v1287
    %v1289 = vadd.f32 %v1285, %v1288
    %vm1290 = vweird.f32 %v1285
    %v1291 = vsel %vm1290, %v1285, %v1289
    %v1292 = vmul.f32 %v1284, %v1291
    %v1293 = vmul.f32 %v1233, %v1233
    %1294 = vadd.xlane.f32.xlu0 %v1293
    %v1295 = vpop.xlane.xlu0 %1294
    %v1296 = vmul.f32 %v1295, %v1291
    %v1297 = vmul.f32 %v1292, %v1292
    %v1298 = vsub.f32 %v1296, %v1297
    %s1299 = sld [smem:[#allocation2 + $0x1]]
    %v1300 = vadd.f32 %v1298, 1e-05
    %v1301 = vrsqrt.pop %v1300
    %v1302 = vmul.f32 %v1301, %v1300
    %v1303 = vmul.f32 %v1302, %v1301
    %v1304 = vmul.f32 0.5, %v1303
    %v1305 = vsub.f32 1.5, %v1304
    %v1306 = vmul.f32 %v1301, %v1305
    %vm1307 = vweird.f32 %v1300
    %vm1308 = vweird.f32 %v1301
    %vm1309 = vmor %vm1307, %vm1308
    %v1310 = vsel %vm1309, %v1301, %v1306
    %v1311 = vstv %s1299
    %v1312 = vmul.f32 %v1311, %v1310
    %v1313 = vmul.f32 %v1233, %v1312
    %v1314 = vmul.f32 %v1292, %v1312
    %v1315 = vsub.f32 %v1313, %v1314
    %v1316 = vsel %vm368, %v1234, 0.0
    %1317 = vadd.xlane.f32.xlu0 %v1316
    %v1318 = vpop.xlane.xlu0 %1317
    %v1319 = vrcp.pop 32.0
    %v1320 = vmul.f32 32.0, %v1319
    %v1321 = vsub.f32 1.0, %v1320
    %v1322 = vmul.f32 %v1319, %v1321
    %v1323 = vadd.f32 %v1319, %v1322
    %vm1324 = vweird.f32 %v1319
    %v1325 = vsel %vm1324, %v1319, %v1323
    %v1326 = vmul.f32 %v1318, %v1325
    %v1327 = vmul.f32 %v1234, %v1234
    %v1328 = vsel %vm368, %v1327, 0.0
    %1329 = vadd.xlane.f32.xlu0 %v1328
    %v1330 = vpop.xlane.xlu0 %1329
    %v1331 = vmul.f32 %v1330, %v1325
    %v1332 = vmul.f32 %v1326, %v1326
    %v1333 = vsub.f32 %v1331, %v1332
    %s1334 = sld [smem:[#allocation2 + $0x2]]
    %v1335 = vadd.f32 %v1333, 1e-05
    %v1336 = vrsqrt.pop %v1335
    %v1337 = vmul.f32 %v1336, %v1335
    %v1338 = vmul.f32 %v1337, %v1336
    %v1339 = vmul.f32 0.5, %v1338
    %v1340 = vsub.f32 1.5, %v1339
    %v1341 = vmul.f32 %v1336, %v1340
    %vm1342 = vweird.f32 %v1335
    %vm1343 = vweird.f32 %v1336
    %vm1344 = vmor %vm1342, %vm1343
    %v1345 = vsel %vm1344, %v1336, %v1341
    %v1346 = vstv %s1334
    %v1347 = vmul.f32 %v1346, %v1345
    %v1348 = vmul.f32 %v1234, %v1347
    %v1349 = vmul.f32 %v1326, %v1347
    %v1350 = vsub.f32 %v1348, %v1349
    %1352 = vrot.lane.b32.xlu0 %v1234, 96
    %v1353 = vpop.permute.xlu0 %1352
    %v1355 = vsel %vm812, %v1353, 0.0
    %1356 = vadd.xlane.f32.xlu0 %v1355
    %v1357 = vpop.xlane.xlu0 %1356
    %v1358 = vrcp.pop 8.0
    %v1359 = vmul.f32 8.0, %v1358
    %v1360 = vsub.f32 1.0, %v1359
    %v1361 = vmul.f32 %v1358, %v1360
    %v1362 = vadd.f32 %v1358, %v1361
    %vm1363 = vweird.f32 %v1358
    %v1364 = vsel %vm1363, %v1358, %v1362
    %v1365 = vmul.f32 %v1357, %v1364
    %1367 = vrot.lane.b32.xlu0 %v1327, 96
    %v1368 = vpop.permute.xlu0 %1367
    %v1370 = vsel %vm812, %v1368, 0.0
    %1371 = vadd.xlane.f32.xlu0 %v1370
    %v1372 = vpop.xlane.xlu0 %1371
    %v1373 = vmul.f32 %v1372, %v1364
    %v1374 = vmul.f32 %v1365, %v1365
    %v1375 = vsub.f32 %v1373, %v1374
    %s1376 = sld [smem:[#allocation2 + $0x3]]
    %v1377 = vadd.f32 %v1375, 1e-05
    %v1378 = vrsqrt.pop %v1377
    %v1379 = vmul.f32 %v1378, %v1377
    %v1380 = vmul.f32 %v1379, %v1378
    %v1381 = vmul.f32 0.5, %v1380
    %v1382 = vsub.f32 1.5, %v1381
    %v1383 = vmul.f32 %v1378, %v1382
    %vm1384 = vweird.f32 %v1377
    %vm1385 = vweird.f32 %v1378
    %vm1386 = vmor %vm1384, %vm1385
    %v1387 = vsel %vm1386, %v1378, %v1383
    %v1388 = vstv %s1376
    %v1389 = vmul.f32 %v1388, %v1387
    %v1390 = vmul.f32 %v1234, %v1389
    %v1391 = vmul.f32 %v1365, %v1389
    %v1392 = vsub.f32 %v1390, %v1391
    %v1393 = vsel %vm368, %v1350, %v1392
    %v1394 = vld [vmem:[%s12] sm:$0xff]
    %v1395 = vld [vmem:[%s12 + $0x8] sm:$0xff]
    %v1396 = vld [vmem:[%s12 + $0x10] sm:$0xff]
    %v1397 = vld [vmem:[%s12 + $0x18] sm:$0xff]
    %v1398 = vld [vmem:[%s12 + $0x20] sm:$0xff]
    %v1399 = vld [vmem:[%s12 + $0x28] sm:$0xff]
    %v1400 = vld [vmem:[%s12 + $0x30] sm:$0xff]
    %v1401 = vld [vmem:[%s12 + $0x38] sm:$0xff]
    %v1402 = vld [vmem:[%s12 + $0x40] sm:$0xff]
    %v1403 = vld [vmem:[%s12 + $0x48] sm:$0xff]
    %v1404 = vld [vmem:[%s12 + $0x50] sm:$0xff]
    %v1405 = vld [vmem:[%s12 + $0x58] sm:$0xff]
    %v1406 = vld [vmem:[%s12 + $0x60] sm:$0xff]
    %v1407 = vld [vmem:[%s12 + $0x68] sm:$0xff]
    %v1408 = vld [vmem:[%s12 + $0x70] sm:$0xff]
    %v1409 = vld [vmem:[%s12 + $0x78] sm:$0xff]
    %v1410 = vld [vmem:[%s12 + $0x80] sm:$0xff]
    %v1411 = vld [vmem:[%s12 + $0x88] sm:$0xff]
    %v1412 = vld [vmem:[%s12 + $0x90] sm:$0xff]
    %v1413 = vld [vmem:[%s12 + $0x98] sm:$0xff]
    %v1414 = vld [vmem:[%s12 + $0xa0] sm:$0xff]
    %v1415 = vld [vmem:[%s12 + $0xa8] sm:$0xff]
    %v1416 = vld [vmem:[%s12 + $0xb0] sm:$0xff]
    %v1417 = vld [vmem:[%s12 + $0xb8] sm:$0xff]
    %v1418 = vld [vmem:[%s12 + $0xc0] sm:$0xff]
    %v1419 = vld [vmem:[%s12 + $0xc8] sm:$0xff]
    %v1420 = vld [vmem:[%s12 + $0xd0] sm:$0xff]
    %v1421 = vld [vmem:[%s12 + $0xd8] sm:$0xff]
    %v1422 = vld [vmem:[%s12 + $0xe0] sm:$0xff]
    %v1423 = vld [vmem:[%s12 + $0xe8] sm:$0xff]
    %v1424 = vld [vmem:[%s12 + $0xf0] sm:$0xff]
    %v1425 = vld [vmem:[%s12 + $0xf8] sm:$0xff]
    %v1426 = vld [vmem:[%s12 + $0x100] sm:$0xff]
    %v1427 = vld [vmem:[%s12 + $0x108] sm:$0xff]
    %v1428 = vld [vmem:[%s12 + $0x110] sm:$0xff]
    %v1429 = vld [vmem:[%s12 + $0x118] sm:$0xff]
    %v1430 = vld [vmem:[%s12 + $0x120] sm:$0xff]
    %v1431 = vld [vmem:[%s12 + $0x128] sm:$0xff]
    %v1432 = vld [vmem:[%s12 + $0x130] sm:$0xff]
    %v1433 = vld [vmem:[%s12 + $0x138] sm:$0xff]
    %v1434 = vld [vmem:[%s12 + $0x140] sm:$0xff]
    %v1435 = vld [vmem:[%s12 + $0x148] sm:$0xff]
    %v1436 = vld [vmem:[%s12 + $0x150] sm:$0xff]
    %v1437 = vld [vmem:[%s12 + $0x158] sm:$0xff]
    %v1438 = vld [vmem:[%s12 + $0x160] sm:$0xff]
    %v1439 = vld [vmem:[%s12 + $0x168] sm:$0xff]
    %v1440 = vld [vmem:[%s12 + $0x170] sm:$0xff]
    %v1441 = vld [vmem:[%s12 + $0x178] sm:$0xff]
    %v1442 = vld [vmem:[%s12 + $0x180] sm:$0xff]
    %v1443 = vld [vmem:[%s12 + $0x188] sm:$0xff]
    %v1444 = vld [vmem:[%s12 + $0x190] sm:$0xff]
    %v1445 = vld [vmem:[%s12 + $0x198] sm:$0xff]
    %v1446 = vld [vmem:[%s12 + $0x1a0] sm:$0xff]
    %v1447 = vld [vmem:[%s12 + $0x1a8] sm:$0xff]
    %v1448 = vld [vmem:[%s12 + $0x1b0] sm:$0xff]
    %v1449 = vld [vmem:[%s12 + $0x1b8] sm:$0xff]
    %v1450 = vld [vmem:[%s12 + $0x1c0] sm:$0xff]
    %v1451 = vld [vmem:[%s12 + $0x1c8] sm:$0xff]
    %v1452 = vld [vmem:[%s12 + $0x1d0] sm:$0xff]
    %v1453 = vld [vmem:[%s12 + $0x1d8] sm:$0xff]
    %v1454 = vld [vmem:[%s12 + $0x1e0] sm:$0xff]
    %v1455 = vld [vmem:[%s12 + $0x1e8] sm:$0xff]
    %v1456 = vld [vmem:[%s12 + $0x1f0] sm:$0xff]
    %v1457 = vld [vmem:[%s12 + $0x1f8] sm:$0xff]
    %v1458 = vld [vmem:[%s12 + $0x200] sm:$0xff]
    %v1459 = vld [vmem:[%s12 + $0x208] sm:$0xff]
    %v1460 = vld [vmem:[%s12 + $0x210] sm:$0xff]
    %v1461 = vld [vmem:[%s12 + $0x218] sm:$0xff]
    %v1462 = vld [vmem:[%s12 + $0x220] sm:$0xff]
    %v1463 = vld [vmem:[%s12 + $0x228] sm:$0xff]
    %v1464 = vld [vmem:[%s12 + $0x230] sm:$0xff]
    %v1465 = vld [vmem:[%s12 + $0x238] sm:$0xff]
    %v1466 = vld [vmem:[%s12 + $0x240] sm:$0xff]
    %v1467 = vld [vmem:[%s12 + $0x248] sm:$0xff]
    %v1468 = vld [vmem:[%s12 + $0x250] sm:$0xff]
    %v1469 = vld [vmem:[%s12 + $0x258] sm:$0xff]
    %v1470 = vld [vmem:[%s12 + $0x260] sm:$0xff]
    %v1471 = vld [vmem:[%s12 + $0x268] sm:$0xff]
    %v1472 = vld [vmem:[%s12 + $0x270] sm:$0xff]
    %v1473 = vld [vmem:[%s12 + $0x278] sm:$0xff]
    %v1474 = vld [vmem:[%s12 + $0x280] sm:$0xff]
    %v1475 = vld [vmem:[%s12 + $0x288] sm:$0xff]
    %v1476 = vld [vmem:[%s12 + $0x290] sm:$0xff]
    %v1477 = vld [vmem:[%s12 + $0x298] sm:$0xff]
    %vm1478 = vcmask 326656
    %v1480 = vsel %vm1478, %v1393, 0
    %1482 = vmatpush.msra.mxu0 %v1454
    %1483 = vmatpush.msra.mxu0 %v1450
    %1484 = vmatpush.msra.mxu0 %v1446
    %1485 = vmatpush.msra.mxu0 %v1442
    %1486 = vmatpush.msra.mxu0 %v1438
    %1487 = vmatpush.msra.mxu0 %v1434
    %1488 = vmatpush.msra.mxu0 %v1430
    %1489 = vmatpush.msra.mxu0 %v1426
    %1490 = vmatpush.msra.mxu0 %v1422
    %1491 = vmatpush.msra.mxu0 %v1418
    %1492 = vmatpush.msra.mxu0 %v1414
    %1493 = vmatpush.msra.mxu0 %v1410
    %1494 = vmatpush.msra.mxu0 %v1406
    %1495 = vmatpush.msra.mxu0 %v1402
    %1496 = vmatpush.msra.mxu0 %v1398
    %1497 = vmatpush.msra.mxu0 %v1394
    %1498 = vmatmul.f32.gmra.mxu0 %v1315
    %v1499 = vpop.f32.mrf.mxu0
    %v1500 = vadd.f32 0.0, %v1499
    %1501 = vdwg.mxu0
    %1502 = vmatpush.msra.mxu0 0.0
    %1503 = vmatpush.msra.mxu0 0.0
    %1504 = vmatpush.msra.mxu0 0.0
    %1505 = vmatpush.msra.mxu0 0.0
    %1506 = vmatpush.msra.mxu0 0.0
    %1507 = vmatpush.msra.mxu0 0.0
    %1508 = vmatpush.msra.mxu0 0.0
    %1509 = vmatpush.msra.mxu0 0.0
    %1510 = vmatpush.msra.mxu0 0.0
    %1511 = vmatpush.msra.mxu0 0.0
    %1512 = vmatpush.msra.mxu0 0.0
    %1513 = vmatpush.msra.mxu0 %v1474
    %1514 = vmatpush.msra.mxu0 %v1470
    %1515 = vmatpush.msra.mxu0 %v1466
    %1516 = vmatpush.msra.mxu0 %v1462
    %1517 = vmatpush.msra.mxu0 %v1458
    %1518 = vmatmul.f32.gmra.mxu0 %v1480
    %v1519 = vpop.f32.mrf.mxu0
    %v1520 = vadd.f32 %v1500, %v1519
    %1521 = vdwg.mxu0
    %1522 = vmatpush.msra.mxu0 %v1455
    %1523 = vmatpush.msra.mxu0 %v1451
    %1524 = vmatpush.msra.mxu0 %v1447
    %1525 = vmatpush.msra.mxu0 %v1443
    %1526 = vmatpush.msra.mxu0 %v1439
    %1527 = vmatpush.msra.mxu0 %v1435
    %1528 = vmatpush.msra.mxu0 %v1431
    %1529 = vmatpush.msra.mxu0 %v1427
    %1530 = vmatpush.msra.mxu0 %v1423
    %1531 = vmatpush.msra.mxu0 %v1419
    %1532 = vmatpush.msra.mxu0 %v1415
    %1533 = vmatpush.msra.mxu0 %v1411
    %1534 = vmatpush.msra.mxu0 %v1407
    %1535 = vmatpush.msra.mxu0 %v1403
    %1536 = vmatpush.msra.mxu0 %v1399
    %1537 = vmatpush.msra.mxu0 %v1395
    %1538 = vmatmul.f32.gmra.mxu0 %v1315
    %v1539 = vpop.f32.mrf.mxu0
    %v1540 = vadd.f32 0.0, %v1539
    %1541 = vdwg.mxu0
    %1542 = vmatpush.msra.mxu0 0.0
    %1543 = vmatpush.msra.mxu0 0.0
    %1544 = vmatpush.msra.mxu0 0.0
    %1545 = vmatpush.msra.mxu0 0.0
    %1546 = vmatpush.msra.mxu0 0.0
    %1547 = vmatpush.msra.mxu0 0.0
    %1548 = vmatpush.msra.mxu0 0.0
    %1549 = vmatpush.msra.mxu0 0.0
    %1550 = vmatpush.msra.mxu0 0.0
    %1551 = vmatpush.msra.mxu0 0.0
    %1552 = vmatpush.msra.mxu0 0.0
    %1553 = vmatpush.msra.mxu0 %v1475
    %1554 = vmatpush.msra.mxu0 %v1471
    %1555 = vmatpush.msra.mxu0 %v1467
    %1556 = vmatpush.msra.mxu0 %v1463
    %1557 = vmatpush.msra.mxu0 %v1459
    %1558 = vmatmul.f32.gmra.mxu0 %v1480
    %v1559 = vpop.f32.mrf.mxu0
    %v1560 = vadd.f32 %v1540, %v1559
    %1561 = vdwg.mxu0
    %1562 = vmatpush.msra.mxu0 %v1456
    %1563 = vmatpush.msra.mxu0 %v1452
    %1564 = vmatpush.msra.mxu0 %v1448
    %1565 = vmatpush.msra.mxu0 %v1444
    %1566 = vmatpush.msra.mxu0 %v1440
    %1567 = vmatpush.msra.mxu0 %v1436
    %1568 = vmatpush.msra.mxu0 %v1432
    %1569 = vmatpush.msra.mxu0 %v1428
    %1570 = vmatpush.msra.mxu0 %v1424
    %1571 = vmatpush.msra.mxu0 %v1420
    %1572 = vmatpush.msra.mxu0 %v1416
    %1573 = vmatpush.msra.mxu0 %v1412
    %1574 = vmatpush.msra.mxu0 %v1408
    %1575 = vmatpush.msra.mxu0 %v1404
    %1576 = vmatpush.msra.mxu0 %v1400
    %1577 = vmatpush.msra.mxu0 %v1396
    %1578 = vmatmul.f32.gmra.mxu0 %v1315
    %v1579 = vpop.f32.mrf.mxu0
    %v1580 = vadd.f32 0.0, %v1579
    %1581 = vdwg.mxu0
    %1582 = vmatpush.msra.mxu0 0.0
    %1583 = vmatpush.msra.mxu0 0.0
    %1584 = vmatpush.msra.mxu0 0.0
    %1585 = vmatpush.msra.mxu0 0.0
    %1586 = vmatpush.msra.mxu0 0.0
    %1587 = vmatpush.msra.mxu0 0.0
    %1588 = vmatpush.msra.mxu0 0.0
    %1589 = vmatpush.msra.mxu0 0.0
    %1590 = vmatpush.msra.mxu0 0.0
    %1591 = vmatpush.msra.mxu0 0.0
    %1592 = vmatpush.msra.mxu0 0.0
    %1593 = vmatpush.msra.mxu0 %v1476
    %1594 = vmatpush.msra.mxu0 %v1472
    %1595 = vmatpush.msra.mxu0 %v1468
    %1596 = vmatpush.msra.mxu0 %v1464
    %1597 = vmatpush.msra.mxu0 %v1460
    %1598 = vmatmul.f32.gmra.mxu0 %v1480
    %v1599 = vpop.f32.mrf.mxu0
    %v1600 = vadd.f32 %v1580, %v1599
    %1601 = vdwg.mxu0
    %1602 = vmatpush.msra.mxu0 %v1457
    %1603 = vmatpush.msra.mxu0 %v1453
    %1604 = vmatpush.msra.mxu0 %v1449
    %1605 = vmatpush.msra.mxu0 %v1445
    %1606 = vmatpush.msra.mxu0 %v1441
    %1607 = vmatpush.msra.mxu0 %v1437
    %1608 = vmatpush.msra.mxu0 %v1433
    %1609 = vmatpush.msra.mxu0 %v1429
    %1610 = vmatpush.msra.mxu0 %v1425
    %1611 = vmatpush.msra.mxu0 %v1421
    %1612 = vmatpush.msra.mxu0 %v1417
    %1613 = vmatpush.msra.mxu0 %v1413
    %1614 = vmatpush.msra.mxu0 %v1409
    %1615 = vmatpush.msra.mxu0 %v1405
    %1616 = vmatpush.msra.mxu0 %v1401
    %1617 = vmatpush.msra.mxu0 %v1397
    %1618 = vmatmul.f32.gmra.mxu0 %v1315
    %v1619 = vpop.f32.mrf.mxu0
    %v1620 = vadd.f32 0.0, %v1619
    %1621 = vdwg.mxu0
    %1622 = vmatpush.msra.mxu0 0.0
    %1623 = vmatpush.msra.mxu0 0.0
    %1624 = vmatpush.msra.mxu0 0.0
    %1625 = vmatpush.msra.mxu0 0.0
    %1626 = vmatpush.msra.mxu0 0.0
    %1627 = vmatpush.msra.mxu0 0.0
    %1628 = vmatpush.msra.mxu0 0.0
    %1629 = vmatpush.msra.mxu0 0.0
    %1630 = vmatpush.msra.mxu0 0.0
    %1631 = vmatpush.msra.mxu0 0.0
    %1632 = vmatpush.msra.mxu0 0.0
    %1633 = vmatpush.msra.mxu0 %v1477
    %1634 = vmatpush.msra.mxu0 %v1473
    %1635 = vmatpush.msra.mxu0 %v1469
    %1636 = vmatpush.msra.mxu0 %v1465
    %1637 = vmatpush.msra.mxu0 %v1461
    %1638 = vmatmul.f32.gmra.mxu0 %v1480
    %v1639 = vpop.f32.mrf.mxu0
    %v1640 = vadd.f32 %v1620, %v1639
    %1641 = vdwg.mxu0
    %v1642 = vadd.f32 %v1279, %v1520
    %v1643 = vadd.f32 %v1280, %v1560
    %v1644 = vadd.f32 %v1281, %v1600
    %v1645 = vadd.f32 %v1282, %v1640
    %v1646 = vld [vmem:[%s3] sm:$0xff]
    %1651 = vrot.lane.b32.xlu0 %v1642, 127
    %v1652 = vpop.permute.xlu0 %1651
    %1653 = vrot.lane.b32.xlu0 %v1643, 127
    %v1654 = vpop.permute.xlu0 %1653
    %1655 = vrot.lane.b32.xlu0 %v1644, 127
    %v1656 = vpop.permute.xlu0 %1655
    %1657 = vrot.lane.b32.xlu0 %v1645, 127
    %v1658 = vpop.permute.xlu0 %1657
    %v1659 = vsel %vm80, %v1652, %v1654
    %v1660 = vsel %vm80, %v1654, %v1656
    %v1661 = vsel %vm80, %v1656, %v1658
    %v1667 = vsel %vm80, %v1658, %v1652
    %v1668 = vmax.f32 %v1642, %v1659
    %v1669 = vmax.f32 %v1643, %v1660
    %v1670 = vmax.f32 %v1644, %v1661
    %v1671 = vmax.f32 %v1645, %v1667
    %1676 = vrot.lane.b32.xlu0 %v1668, 112
    %v1677 = vpop.permute.xlu0 %1676
    %1678 = vrot.lane.b32.xlu0 %v1669, 112
    %v1679 = vpop.permute.xlu0 %1678
    %1680 = vrot.lane.b32.xlu0 %v1670, 112
    %v1681 = vpop.permute.xlu0 %1680
    %1682 = vrot.lane.b32.xlu0 %v1671, 112
    %v1683 = vpop.permute.xlu0 %1682
    %v1684 = vsel %vm121, %v1677, %v1679
    %v1685 = vsel %vm121, %v1679, %v1681
    %v1686 = vsel %vm121, %v1681, %v1683
    %v1692 = vsel %vm121, %v1683, %v1677
    %v1693 = vmax.f32 %v1668, %v1684
    %v1694 = vmax.f32 %v1669, %v1685
    %v1695 = vmax.f32 %v1670, %v1686
    %v1696 = vmax.f32 %v1671, %v1692
    %1697 = vmatpush.msra.mxu0 %v156
    %1698 = vmatpush.msra.mxu0 %v155
    %1699 = vmatpush.msra.mxu0 %v154
    %1700 = vmatpush.msra.mxu0 %v153
    %1701 = vmatpush.msra.mxu0 %v152
    %1702 = vmatpush.msra.mxu0 %v151
    %1703 = vmatpush.msra.mxu0 %v150
    %1704 = vmatpush.msra.mxu0 %v149
    %1705 = vmatpush.msra.mxu0 %v148
    %1706 = vmatpush.msra.mxu0 %v147
    %1707 = vmatpush.msra.mxu0 %v146
    %1708 = vmatpush.msra.mxu0 %v145
    %1709 = vmatpush.msra.mxu0 %v144
    %1710 = vmatpush.msra.mxu0 %v143
    %1711 = vmatpush.msra.mxu0 %v142
    %1712 = vmatpush.msra.mxu0 %v141
    %1713 = vmatmul.f32.gmra.mxu0 %v1693
    %v1714 = vpop.f32.mrf.mxu0
    %v1715 = vadd.f32 0.0, %v1714
    %1716 = vdwg.mxu0
    %1717 = vmatpush.msra.mxu0 %v172
    %1718 = vmatpush.msra.mxu0 %v171
    %1719 = vmatpush.msra.mxu0 %v170
    %1720 = vmatpush.msra.mxu0 %v169
    %1721 = vmatpush.msra.mxu0 %v168
    %1722 = vmatpush.msra.mxu0 %v167
    %1723 = vmatpush.msra.mxu0 %v166
    %1724 = vmatpush.msra.mxu0 %v165
    %1725 = vmatpush.msra.mxu0 %v164
    %1726 = vmatpush.msra.mxu0 %v163
    %1727 = vmatpush.msra.mxu0 %v162
    %1728 = vmatpush.msra.mxu0 %v161
    %1729 = vmatpush.msra.mxu0 %v160
    %1730 = vmatpush.msra.mxu0 %v159
    %1731 = vmatpush.msra.mxu0 %v158
    %1732 = vmatpush.msra.mxu0 %v157
    %1733 = vmatmul.f32.gmra.mxu0 %v1694
    %v1734 = vpop.f32.mrf.mxu0
    %v1735 = vadd.f32 %v1715, %v1734
    %1736 = vdwg.mxu0
    %1737 = vmatpush.msra.mxu0 %v188
    %1738 = vmatpush.msra.mxu0 %v187
    %1739 = vmatpush.msra.mxu0 %v186
    %1740 = vmatpush.msra.mxu0 %v185
    %1741 = vmatpush.msra.mxu0 %v184
    %1742 = vmatpush.msra.mxu0 %v183
    %1743 = vmatpush.msra.mxu0 %v182
    %1744 = vmatpush.msra.mxu0 %v181
    %1745 = vmatpush.msra.mxu0 %v180
    %1746 = vmatpush.msra.mxu0 %v179
    %1747 = vmatpush.msra.mxu0 %v178
    %1748 = vmatpush.msra.mxu0 %v177
    %1749 = vmatpush.msra.mxu0 %v176
    %1750 = vmatpush.msra.mxu0 %v175
    %1751 = vmatpush.msra.mxu0 %v174
    %1752 = vmatpush.msra.mxu0 %v173
    %1753 = vmatmul.f32.gmra.mxu0 %v1695
    %v1754 = vpop.f32.mrf.mxu0
    %v1755 = vadd.f32 %v1735, %v1754
    %1756 = vdwg.mxu0
    %1757 = vmatpush.msra.mxu0 %v204
    %1758 = vmatpush.msra.mxu0 %v203
    %1759 = vmatpush.msra.mxu0 %v202
    %1760 = vmatpush.msra.mxu0 %v201
    %1761 = vmatpush.msra.mxu0 %v200
    %1762 = vmatpush.msra.mxu0 %v199
    %1763 = vmatpush.msra.mxu0 %v198
    %1764 = vmatpush.msra.mxu0 %v197
    %1765 = vmatpush.msra.mxu0 %v196
    %1766 = vmatpush.msra.mxu0 %v195
    %1767 = vmatpush.msra.mxu0 %v194
    %1768 = vmatpush.msra.mxu0 %v193
    %1769 = vmatpush.msra.mxu0 %v192
    %1770 = vmatpush.msra.mxu0 %v191
    %1771 = vmatpush.msra.mxu0 %v190
    %1772 = vmatpush.msra.mxu0 %v189
    %1773 = vmatmul.f32.gmra.mxu0 %v1696
    %v1774 = vpop.f32.mrf.mxu0
    %v1775 = vadd.f32 %v1755, %v1774
    %1776 = vdwg.mxu0
    %1778 = vrot.lane.b32.xlu0 %v1775, 127
    %v1779 = vpop.permute.xlu0 %1778
    %v1781 = vmax.f32 %v1775, %v1779
    %1783 = vrot.lane.b32.xlu0 %v1781, 120
    %v1784 = vpop.permute.xlu0 %1783
    %v1786 = vmax.f32 %v1781, %v1784
    %1787 = vmatpush.msra.mxu0 %v323
    %1788 = vmatpush.msra.mxu0 %v322
    %1789 = vmatpush.msra.mxu0 %v321
    %1790 = vmatpush.msra.mxu0 %v320
    %1791 = vmatpush.msra.mxu0 %v319
    %1792 = vmatpush.msra.mxu0 %v318
    %1793 = vmatpush.msra.mxu0 %v317
    %1794 = vmatpush.msra.mxu0 %v316
    %1795 = vmatpush.msra.mxu0 %v315
    %1796 = vmatpush.msra.mxu0 %v314
    %1797 = vmatpush.msra.mxu0 %v313
    %1798 = vmatpush.msra.mxu0 %v312
    %1799 = vmatpush.msra.mxu0 %v311
    %1800 = vmatpush.msra.mxu0 %v310
    %1801 = vmatpush.msra.mxu0 %v309
    %1802 = vmatpush.msra.mxu0 %v308
    %1803 = vmatmul.f32.gmra.mxu0 %v1786
    %v1804 = vpop.f32.mrf.mxu0
    %v1805 = vadd.f32 0.0, %v1804
    %1806 = vdwg.mxu0
    %1808 = vrot.lane.b32.xlu0 %v1805, 127
    %v1809 = vpop.permute.xlu0 %1808
    %1811 = vrot.lane.b32.xlu0 %v1805, 31
    %v1812 = vpop.permute.xlu0 %1811
    %v1814 = vsel %vm351, %v1809, %v1812
    %v1815 = vmax.f32 %v1805, %v1814
    %1817 = vrot.lane.b32.xlu0 %v1815, 124
    %v1818 = vpop.permute.xlu0 %1817
    %1820 = vrot.lane.b32.xlu0 %v1815, 28
    %v1821 = vpop.permute.xlu0 %1820
    %v1823 = vsel %vm361, %v1818, %v1821
    %v1824 = vmax.f32 %v1815, %v1823
    %v1826 = vsel %vm368, %v1824, 0
    %1828 = vmatpush.msra.mxu0 0.0
    %1829 = vmatpush.msra.mxu0 0.0
    %1830 = vmatpush.msra.mxu0 0.0
    %1831 = vmatpush.msra.mxu0 0.0
    %1832 = vmatpush.msra.mxu0 0.0
    %1833 = vmatpush.msra.mxu0 0.0
    %1834 = vmatpush.msra.mxu0 0.0
    %1835 = vmatpush.msra.mxu0 0.0
    %1836 = vmatpush.msra.mxu0 0.0
    %1837 = vmatpush.msra.mxu0 0.0
    %1838 = vmatpush.msra.mxu0 0.0
    %1839 = vmatpush.msra.mxu0 0.0
    %1840 = vmatpush.msra.mxu0 %v367
    %1841 = vmatpush.msra.mxu0 %v366
    %1842 = vmatpush.msra.mxu0 %v365
    %1843 = vmatpush.msra.mxu0 %v364
    %1844 = vmatmul.f32.gmra.mxu0 %v1826
    %v1845 = vpop.f32.mrf.mxu0
    %v1846 = vadd.f32 0.0, %v1845
    %1847 = vdwg.mxu0
    %1848 = vrot.lane.b32.xlu0 %v1645, 17
    %v1849 = vpop.permute.xlu0 %1848
    %1851 = vrot.lane.b32.xlu0 %v1642, 17
    %v1852 = vpop.permute.xlu0 %1851
    %1853 = vrot.lane.b32.xlu0 %v1643, 17
    %v1854 = vpop.permute.xlu0 %1853
    %1855 = vrot.lane.b32.xlu0 %v1644, 17
    %v1856 = vpop.permute.xlu0 %1855
    %v1857 = vsel %vm420, %v1852, %v1854
    %v1858 = vsel %vm420, %v1854, %v1856
    %v1859 = vsel %vm420, %v1856, %v1849
    %v1864 = vsel %vm420, %v1849, %v1852
    %v1865 = vmul.f32 %v1864, %v429
    %v1866 = vmul.f32 %v1857, %v430
    %v1867 = vmul.f32 %v1858, %v431
    %v1868 = vmul.f32 %v1859, %v432
    %1869 = vrot.lane.b32.xlu0 %v1645, 16
    %v1870 = vpop.permute.xlu0 %1869
    %1872 = vrot.lane.b32.xlu0 %v1642, 16
    %v1873 = vpop.permute.xlu0 %1872
    %1874 = vrot.lane.b32.xlu0 %v1643, 16
    %v1875 = vpop.permute.xlu0 %1874
    %1876 = vrot.lane.b32.xlu0 %v1644, 16
    %v1877 = vpop.permute.xlu0 %1876
    %v1878 = vsel %vm457, %v1873, %v1875
    %v1879 = vsel %vm457, %v1875, %v1877
    %v1880 = vsel %vm457, %v1877, %v1870
    %v1885 = vsel %vm457, %v1870, %v1873
    %v1886 = vmul.f32 %v1885, %v466
    %v1887 = vmul.f32 %v1878, %v467
    %v1888 = vmul.f32 %v1879, %v468
    %v1889 = vmul.f32 %v1880, %v469
    %1890 = vrot.lane.b32.xlu0 %v1645, 15
    %v1891 = vpop.permute.xlu0 %1890
    %1893 = vrot.lane.b32.xlu0 %v1642, 15
    %v1894 = vpop.permute.xlu0 %1893
    %1895 = vrot.lane.b32.xlu0 %v1643, 15
    %v1896 = vpop.permute.xlu0 %1895
    %1897 = vrot.lane.b32.xlu0 %v1644, 15
    %v1898 = vpop.permute.xlu0 %1897
    %v1899 = vsel %vm494, %v1894, %v1896
    %v1900 = vsel %vm494, %v1896, %v1898
    %v1901 = vsel %vm494, %v1898, %v1891
    %v1906 = vsel %vm494, %v1891, %v1894
    %v1907 = vmul.f32 %v1906, %v503
    %v1908 = vmul.f32 %v1899, %v504
    %v1909 = vmul.f32 %v1900, %v505
    %v1910 = vmul.f32 %v1901, %v506
    %1911 = vrot.lane.b32.xlu0 %v1645, 1
    %v1912 = vpop.permute.xlu0 %1911
    %1914 = vrot.lane.b32.xlu0 %v1642, 1
    %v1915 = vpop.permute.xlu0 %1914
    %1916 = vrot.lane.b32.xlu0 %v1643, 1
    %v1917 = vpop.permute.xlu0 %1916
    %1918 = vrot.lane.b32.xlu0 %v1644, 1
    %v1919 = vpop.permute.xlu0 %1918
    %v1920 = vsel %vm531, %v1915, %v1917
    %v1921 = vsel %vm531, %v1917, %v1919
    %v1922 = vsel %vm531, %v1919, %v1912
    %v1927 = vsel %vm531, %v1912, %v1915
    %v1928 = vmul.f32 %v1927, %v540
    %v1929 = vmul.f32 %v1920, %v541
    %v1930 = vmul.f32 %v1921, %v542
    %v1931 = vmul.f32 %v1922, %v543
    %v1932 = vmul.f32 %v1642, %v548
    %v1933 = vmul.f32 %v1643, %v549
    %v1934 = vmul.f32 %v1644, %v550
    %v1935 = vmul.f32 %v1645, %v551
    %v1936 = vmul.f32 %v1659, %v564
    %v1937 = vmul.f32 %v1660, %v565
    %v1938 = vmul.f32 %v1661, %v566
    %v1939 = vmul.f32 %v1667, %v567
    %1940 = vrot.lane.b32.xlu0 %v1642, 113
    %v1941 = vpop.permute.xlu0 %1940
    %1942 = vrot.lane.b32.xlu0 %v1643, 113
    %v1943 = vpop.permute.xlu0 %1942
    %1944 = vrot.lane.b32.xlu0 %v1644, 113
    %v1945 = vpop.permute.xlu0 %1944
    %1946 = vrot.lane.b32.xlu0 %v1645, 113
    %v1947 = vpop.permute.xlu0 %1946
    %v1948 = vsel %vm587, %v1941, %v1943
    %v1949 = vsel %vm587, %v1943, %v1945
    %v1950 = vsel %vm587, %v1945, %v1947
    %v1956 = vsel %vm587, %v1947, %v1941
    %v1957 = vmul.f32 %v1948, %v601
    %v1958 = vmul.f32 %v1949, %v602
    %v1959 = vmul.f32 %v1950, %v603
    %v1960 = vmul.f32 %v1956, %v604
    %1961 = vrot.lane.b32.xlu0 %v1642, 112
    %v1962 = vpop.permute.xlu0 %1961
    %1963 = vrot.lane.b32.xlu0 %v1643, 112
    %v1964 = vpop.permute.xlu0 %1963
    %1965 = vrot.lane.b32.xlu0 %v1644, 112
    %v1966 = vpop.permute.xlu0 %1965
    %1967 = vrot.lane.b32.xlu0 %v1645, 112
    %v1968 = vpop.permute.xlu0 %1967
    %v1969 = vsel %vm121, %v1962, %v1964
    %v1970 = vsel %vm121, %v1964, %v1966
    %v1971 = vsel %vm121, %v1966, %v1968
    %v1977 = vsel %vm121, %v1968, %v1962
    %v1978 = vmul.f32 %v1969, %v637
    %v1979 = vmul.f32 %v1970, %v638
    %v1980 = vmul.f32 %v1971, %v639
    %v1981 = vmul.f32 %v1977, %v640
    %1982 = vrot.lane.b32.xlu0 %v1642, 111
    %v1983 = vpop.permute.xlu0 %1982
    %1984 = vrot.lane.b32.xlu0 %v1643, 111
    %v1985 = vpop.permute.xlu0 %1984
    %1986 = vrot.lane.b32.xlu0 %v1644, 111
    %v1987 = vpop.permute.xlu0 %1986
    %1988 = vrot.lane.b32.xlu0 %v1645, 111
    %v1989 = vpop.permute.xlu0 %1988
    %v1990 = vsel %vm660, %v1983, %v1985
    %v1991 = vsel %vm660, %v1985, %v1987
    %v1992 = vsel %vm660, %v1987, %v1989
    %v1998 = vsel %vm660, %v1989, %v1983
    %v1999 = vmul.f32 %v1990, %v674
    %v2000 = vmul.f32 %v1991, %v675
    %v2001 = vmul.f32 %v1992, %v676
    %v2002 = vmul.f32 %v1998, %v677
    %2003 = vrot.lane.b32.xlu0 %v1775, 9
    %v2004 = vpop.permute.xlu0 %2003
    %v2006 = vmul.f32 %v2004, %v807
    %2007 = vrot.lane.b32.xlu0 %v1775, 8
    %v2008 = vpop.permute.xlu0 %2007
    %v2010 = vmul.f32 %v2008, %v813
    %2011 = vrot.lane.b32.xlu0 %v1775, 7
    %v2012 = vpop.permute.xlu0 %2011
    %v2014 = vmul.f32 %v2012, %v819
    %2015 = vrot.lane.b32.xlu0 %v1775, 1
    %v2016 = vpop.permute.xlu0 %2015
    %v2018 = vmul.f32 %v2016, %v824
    %v2019 = vmul.f32 %v1775, %v826
    %v2020 = vmul.f32 %v1779, %v828
    %2021 = vrot.lane.b32.xlu0 %v1775, 121
    %v2022 = vpop.permute.xlu0 %2021
    %v2024 = vmul.f32 %v2022, %v833
    %2025 = vrot.lane.b32.xlu0 %v1775, 120
    %v2026 = vpop.permute.xlu0 %2025
    %v2028 = vmul.f32 %v2026, %v838
    %2029 = vrot.lane.b32.xlu0 %v1775, 119
    %v2030 = vpop.permute.xlu0 %2029
    %v2032 = vmul.f32 %v2030, %v843
    %2033 = vrot.lane.b32.xlu0 %v1805, 101
    %v2034 = vpop.permute.xlu0 %2033
    %2036 = vrot.lane.b32.xlu0 %v1805, 5
    %v2037 = vpop.permute.xlu0 %2036
    %v2039 = vsel %vm881, %v2034, %v2037
    %v2040 = vmul.f32 %v2039, %v883
    %2041 = vrot.lane.b32.xlu0 %v1805, 100
    %v2042 = vpop.permute.xlu0 %2041
    %2044 = vrot.lane.b32.xlu0 %v1805, 4
    %v2045 = vpop.permute.xlu0 %2044
    %v2047 = vsel %vm891, %v2042, %v2045
    %v2048 = vmul.f32 %v2047, %v893
    %2049 = vrot.lane.b32.xlu0 %v1805, 99
    %v2050 = vpop.permute.xlu0 %2049
    %2052 = vrot.lane.b32.xlu0 %v1805, 3
    %v2053 = vpop.permute.xlu0 %2052
    %v2055 = vsel %vm901, %v2050, %v2053
    %v2056 = vmul.f32 %v2055, %v903
    %2057 = vrot.lane.b32.xlu0 %v1805, 97
    %v2058 = vpop.permute.xlu0 %2057
    %2060 = vrot.lane.b32.xlu0 %v1805, 1
    %v2061 = vpop.permute.xlu0 %2060
    %v2063 = vsel %vm531, %v2058, %v2061
    %v2064 = vmul.f32 %v2063, %v912
    %v2065 = vmul.f32 %v1805, %v914
    %v2066 = vmul.f32 %v1814, %v916
    %2067 = vrot.lane.b32.xlu0 %v1805, 125
    %v2068 = vpop.permute.xlu0 %2067
    %2070 = vrot.lane.b32.xlu0 %v1805, 29
    %v2071 = vpop.permute.xlu0 %2070
    %v2073 = vsel %vm924, %v2068, %v2071
    %v2074 = vmul.f32 %v2073, %v926
    %2075 = vrot.lane.b32.xlu0 %v1805, 124
    %v2076 = vpop.permute.xlu0 %2075
    %2078 = vrot.lane.b32.xlu0 %v1805, 28
    %v2079 = vpop.permute.xlu0 %2078
    %v2081 = vsel %vm361, %v2076, %v2079
    %v2082 = vmul.f32 %v2081, %v935
    %2083 = vrot.lane.b32.xlu0 %v1805, 123
    %v2084 = vpop.permute.xlu0 %2083
    %2086 = vrot.lane.b32.xlu0 %v1805, 27
    %v2087 = vpop.permute.xlu0 %2086
    %v2089 = vsel %vm943, %v2084, %v2087
    %v2090 = vmul.f32 %v2089, %v945
    %2092 = vrot.lane.b32.xlu0 %v1846, 123
    %v2093 = vpop.permute.xlu0 %2092
    %2095 = vrot.lane.b32.xlu0 %v1846, 3
    %v2096 = vpop.permute.xlu0 %2095
    %v2098 = vsel %vm901, %v2093, %v2096
    %v2099 = vmul.f32 %v2098, %v985
    %2100 = vrot.lane.b32.xlu0 %v1846, 122
    %v2101 = vpop.permute.xlu0 %2100
    %2103 = vrot.lane.b32.xlu0 %v1846, 2
    %v2104 = vpop.permute.xlu0 %2103
    %v2106 = vsel %vm993, %v2101, %v2104
    %v2107 = vmul.f32 %v2106, %v995
    %2108 = vrot.lane.b32.xlu0 %v1846, 121
    %v2109 = vpop.permute.xlu0 %2108
    %2111 = vrot.lane.b32.xlu0 %v1846, 1
    %v2112 = vpop.permute.xlu0 %2111
    %v2114 = vsel %vm531, %v2109, %v2112
    %v2115 = vmul.f32 %v2114, %v1004
    %v2116 = vmul.f32 %v2114, %v1006
    %v2117 = vmul.f32 %v1846, %v1008
    %2118 = vrot.lane.b32.xlu0 %v1846, 127
    %v2119 = vpop.permute.xlu0 %2118
    %2121 = vrot.lane.b32.xlu0 %v1846, 7
    %v2122 = vpop.permute.xlu0 %2121
    %v2124 = vsel %vm818, %v2119, %v2122
    %v2125 = vmul.f32 %v2124, %v1017
    %v2126 = vmul.f32 %v2124, %v1019
    %2127 = vrot.lane.b32.xlu0 %v1846, 126
    %v2128 = vpop.permute.xlu0 %2127
    %2130 = vrot.lane.b32.xlu0 %v1846, 6
    %v2131 = vpop.permute.xlu0 %2130
    %v2133 = vsel %vm1027, %v2128, %v2131
    %v2134 = vmul.f32 %v2133, %v1029
    %2135 = vrot.lane.b32.xlu0 %v1846, 125
    %v2136 = vpop.permute.xlu0 %2135
    %2138 = vrot.lane.b32.xlu0 %v1846, 5
    %v2139 = vpop.permute.xlu0 %2138
    %v2141 = vsel %vm881, %v2136, %v2139
    %v2142 = vmul.f32 %v2141, %v1038
    %2152 = vrot.lane.b32.xlu0 %v2099, 32
    %v2153 = vpop.permute.xlu0 %2152
    %2154 = vrot.lane.b32.xlu0 %v2107, 32
    %v2155 = vpop.permute.xlu0 %2154
    %2156 = vrot.lane.b32.xlu0 %v2115, 32
    %v2157 = vpop.permute.xlu0 %2156
    %2158 = vrot.lane.b32.xlu0 %v2116, 32
    %v2159 = vpop.permute.xlu0 %2158
    %2160 = vrot.lane.b32.xlu0 %v2117, 32
    %v2161 = vpop.permute.xlu0 %2160
    %2162 = vrot.lane.b32.xlu0 %v2125, 32
    %v2163 = vpop.permute.xlu0 %2162
    %2164 = vrot.lane.b32.xlu0 %v2126, 32
    %v2165 = vpop.permute.xlu0 %2164
    %2166 = vrot.lane.b32.xlu0 %v2134, 32
    %v2167 = vpop.permute.xlu0 %2166
    %2168 = vrot.lane.b32.xlu0 %v2142, 32
    %v2169 = vpop.permute.xlu0 %2168
    %v2179 = vsel %vm368, %v2040, %v2153
    %v2180 = vsel %vm368, %v2048, %v2155
    %v2181 = vsel %vm368, %v2056, %v2157
    %v2182 = vsel %vm368, %v2064, %v2159
    %v2183 = vsel %vm368, %v2065, %v2161
    %v2184 = vsel %vm368, %v2066, %v2163
    %v2185 = vsel %vm368, %v2074, %v2165
    %v2186 = vsel %vm368, %v2082, %v2167
    %v2187 = vsel %vm368, %v2090, %v2169
    %vm2188 = vcmask 588800
    %v2190 = vsel %vm2188, %v1646, 0
    %2192 = vmatpush.msra.mxu0 0.0
    %2193 = vmatpush.msra.mxu0 0.0
    %2194 = vmatpush.msra.mxu0 0.0
    %2195 = vmatpush.msra.mxu0 0.0
    %2196 = vmatpush.msra.mxu0 0.0
    %2197 = vmatpush.msra.mxu0 0.0
    %2198 = vmatpush.msra.mxu0 0.0
    %2199 = vmatpush.msra.mxu0 %v1999
    %2200 = vmatpush.msra.mxu0 %v1978
    %2201 = vmatpush.msra.mxu0 %v1957
    %2202 = vmatpush.msra.mxu0 %v1936
    %2203 = vmatpush.msra.mxu0 %v1932
    %2204 = vmatpush.msra.mxu0 %v1928
    %2205 = vmatpush.msra.mxu0 %v1907
    %2206 = vmatpush.msra.mxu0 %v1886
    %2207 = vmatpush.msra.mxu0 %v1865
    %2208 = vmatmul.f32.gmra.mxu0 %v2190
    %v2209 = vpop.f32.mrf.mxu0
    %v2210 = vadd.f32 0.0, %v2209
    %2211 = vdwg.mxu0
    %2212 = vmatpush.msra.mxu0 0.0
    %2213 = vmatpush.msra.mxu0 0.0
    %2214 = vmatpush.msra.mxu0 0.0
    %2215 = vmatpush.msra.mxu0 0.0
    %2216 = vmatpush.msra.mxu0 0.0
    %2217 = vmatpush.msra.mxu0 0.0
    %2218 = vmatpush.msra.mxu0 0.0
    %2219 = vmatpush.msra.mxu0 %v2000
    %2220 = vmatpush.msra.mxu0 %v1979
    %2221 = vmatpush.msra.mxu0 %v1958
    %2222 = vmatpush.msra.mxu0 %v1937
    %2223 = vmatpush.msra.mxu0 %v1933
    %2224 = vmatpush.msra.mxu0 %v1929
    %2225 = vmatpush.msra.mxu0 %v1908
    %2226 = vmatpush.msra.mxu0 %v1887
    %2227 = vmatpush.msra.mxu0 %v1866
    %2228 = vmatmul.f32.gmra.mxu0 %v2190
    %v2229 = vpop.f32.mrf.mxu0
    %v2230 = vadd.f32 0.0, %v2229
    %2231 = vdwg.mxu0
    %2232 = vmatpush.msra.mxu0 0.0
    %2233 = vmatpush.msra.mxu0 0.0
    %2234 = vmatpush.msra.mxu0 0.0
    %2235 = vmatpush.msra.mxu0 0.0
    %2236 = vmatpush.msra.mxu0 0.0
    %2237 = vmatpush.msra.mxu0 0.0
    %2238 = vmatpush.msra.mxu0 0.0
    %2239 = vmatpush.msra.mxu0 %v2001
    %2240 = vmatpush.msra.mxu0 %v1980
    %2241 = vmatpush.msra.mxu0 %v1959
    %2242 = vmatpush.msra.mxu0 %v1938
    %2243 = vmatpush.msra.mxu0 %v1934
    %2244 = vmatpush.msra.mxu0 %v1930
    %2245 = vmatpush.msra.mxu0 %v1909
    %2246 = vmatpush.msra.mxu0 %v1888
    %2247 = vmatpush.msra.mxu0 %v1867
    %2248 = vmatmul.f32.gmra.mxu0 %v2190
    %v2249 = vpop.f32.mrf.mxu0
    %v2250 = vadd.f32 0.0, %v2249
    %2251 = vdwg.mxu0
    %2252 = vmatpush.msra.mxu0 0.0
    %2253 = vmatpush.msra.mxu0 0.0
    %2254 = vmatpush.msra.mxu0 0.0
    %2255 = vmatpush.msra.mxu0 0.0
    %2256 = vmatpush.msra.mxu0 0.0
    %2257 = vmatpush.msra.mxu0 0.0
    %2258 = vmatpush.msra.mxu0 0.0
    %2259 = vmatpush.msra.mxu0 %v2002
    %2260 = vmatpush.msra.mxu0 %v1981
    %2261 = vmatpush.msra.mxu0 %v1960
    %2262 = vmatpush.msra.mxu0 %v1939
    %2263 = vmatpush.msra.mxu0 %v1935
    %2264 = vmatpush.msra.mxu0 %v1931
    %2265 = vmatpush.msra.mxu0 %v1910
    %2266 = vmatpush.msra.mxu0 %v1889
    %2267 = vmatpush.msra.mxu0 %v1868
    %2268 = vmatmul.f32.gmra.mxu0 %v2190
    %v2269 = vpop.f32.mrf.mxu0
    %v2270 = vadd.f32 0.0, %v2269
    %2271 = vdwg.mxu0
    %2272 = vmatpush.msra.mxu0 0.0
    %2273 = vmatpush.msra.mxu0 0.0
    %2274 = vmatpush.msra.mxu0 0.0
    %2275 = vmatpush.msra.mxu0 0.0
    %2276 = vmatpush.msra.mxu0 0.0
    %2277 = vmatpush.msra.mxu0 0.0
    %2278 = vmatpush.msra.mxu0 0.0
    %2279 = vmatpush.msra.mxu0 %v2032
    %2280 = vmatpush.msra.mxu0 %v2028
    %2281 = vmatpush.msra.mxu0 %v2024
    %2282 = vmatpush.msra.mxu0 %v2020
    %2283 = vmatpush.msra.mxu0 %v2019
    %2284 = vmatpush.msra.mxu0 %v2018
    %2285 = vmatpush.msra.mxu0 %v2014
    %2286 = vmatpush.msra.mxu0 %v2010
    %2287 = vmatpush.msra.mxu0 %v2006
    %2288 = vmatmul.f32.gmra.mxu0 %v2190
    %v2289 = vpop.f32.mrf.mxu0
    %v2290 = vadd.f32 0.0, %v2289
    %2291 = vdwg.mxu0
    %2292 = vmatpush.msra.mxu0 0.0
    %2293 = vmatpush.msra.mxu0 0.0
    %2294 = vmatpush.msra.mxu0 0.0
    %2295 = vmatpush.msra.mxu0 0.0
    %2296 = vmatpush.msra.mxu0 0.0
    %2297 = vmatpush.msra.mxu0 0.0
    %2298 = vmatpush.msra.mxu0 0.0
    %2299 = vmatpush.msra.mxu0 %v2187
    %2300 = vmatpush.msra.mxu0 %v2186
    %2301 = vmatpush.msra.mxu0 %v2185
    %2302 = vmatpush.msra.mxu0 %v2184
    %2303 = vmatpush.msra.mxu0 %v2183
    %2304 = vmatpush.msra.mxu0 %v2182
    %2305 = vmatpush.msra.mxu0 %v2181
    %2306 = vmatpush.msra.mxu0 %v2180
    %2307 = vmatpush.msra.mxu0 %v2179
    %2308 = vmatmul.f32.gmra.mxu0 %v2190
    %v2309 = vpop.f32.mrf.mxu0
    %v2310 = vadd.f32 0.0, %v2309
    %2311 = vdwg.mxu0
    %v2312 = vmax.f32 %v2210, 0.0
    %v2313 = vmax.f32 %v2230, 0.0
    %v2314 = vmax.f32 %v2250, 0.0
    %v2315 = vmax.f32 %v2270, 0.0
    %v2316 = vmax.f32 %v2290, 0.0
    %v2317 = vmax.f32 %v2310, 0.0
    %v2318 = vadd.f32 %v2312, %v2313
    %v2319 = vadd.f32 %v2318, %v2314
    %v2320 = vadd.f32 %v2319, %v2315
    %2321 = vadd.xlane.f32.xlu0 %v2320
    %v2322 = vpop.xlane.xlu0 %2321
    %v2323 = vmul.f32 %v2322, %v1246
    %v2324 = vmul.f32 %v2312, %v2312
    %v2325 = vmul.f32 %v2313, %v2313
    %v2326 = vmul.f32 %v2314, %v2314
    %v2327 = vmul.f32 %v2315, %v2315
    %v2328 = vadd.f32 %v2324, %v2325
    %v2329 = vadd.f32 %v2328, %v2326
    %v2330 = vadd.f32 %v2329, %v2327
    %2331 = vadd.xlane.f32.xlu0 %v2330
    %v2332 = vpop.xlane.xlu0 %2331
    %v2333 = vmul.f32 %v2332, %v1246
    %v2334 = vmul.f32 %v2323, %v2323
    %v2335 = vsub.f32 %v2333, %v2334
    %s2336 = sld [smem:[#allocation2 + $0x4]]
    %v2337 = vadd.f32 %v2335, 1e-05
    %v2338 = vrsqrt.pop %v2337
    %v2339 = vmul.f32 %v2338, %v2337
    %v2340 = vmul.f32 %v2339, %v2338
    %v2341 = vmul.f32 0.5, %v2340
    %v2342 = vsub.f32 1.5, %v2341
    %v2343 = vmul.f32 %v2338, %v2342
    %vm2344 = vweird.f32 %v2337
    %vm2345 = vweird.f32 %v2338
    %vm2346 = vmor %vm2344, %vm2345
    %v2347 = vsel %vm2346, %v2338, %v2343
    %v2348 = vstv %s2336
    %v2349 = vmul.f32 %v2348, %v2347
    %v2350 = vmul.f32 %v2312, %v2349
    %v2351 = vmul.f32 %v2313, %v2349
    %v2352 = vmul.f32 %v2314, %v2349
    %v2353 = vmul.f32 %v2315, %v2349
    %v2354 = vmul.f32 %v2323, %v2349
    %v2355 = vsub.f32 %v2350, %v2354
    %v2356 = vsub.f32 %v2351, %v2354
    %v2357 = vsub.f32 %v2352, %v2354
    %v2358 = vsub.f32 %v2353, %v2354
    %2359 = vadd.xlane.f32.xlu0 %v2316
    %v2360 = vpop.xlane.xlu0 %2359
    %v2361 = vmul.f32 %v2360, %v1291
    %v2362 = vmul.f32 %v2316, %v2316
    %2363 = vadd.xlane.f32.xlu0 %v2362
    %v2364 = vpop.xlane.xlu0 %2363
    %v2365 = vmul.f32 %v2364, %v1291
    %v2366 = vmul.f32 %v2361, %v2361
    %v2367 = vsub.f32 %v2365, %v2366
    %s2368 = sld [smem:[#allocation2 + $0x5]]
    %v2369 = vadd.f32 %v2367, 1e-05
    %v2370 = vrsqrt.pop %v2369
    %v2371 = vmul.f32 %v2370, %v2369
    %v2372 = vmul.f32 %v2371, %v2370
    %v2373 = vmul.f32 0.5, %v2372
    %v2374 = vsub.f32 1.5, %v2373
    %v2375 = vmul.f32 %v2370, %v2374
    %vm2376 = vweird.f32 %v2369
    %vm2377 = vweird.f32 %v2370
    %vm2378 = vmor %vm2376, %vm2377
    %v2379 = vsel %vm2378, %v2370, %v2375
    %v2380 = vstv %s2368
    %v2381 = vmul.f32 %v2380, %v2379
    %v2382 = vmul.f32 %v2316, %v2381
    %v2383 = vmul.f32 %v2361, %v2381
    %v2384 = vsub.f32 %v2382, %v2383
    %v2385 = vsel %vm368, %v2317, 0.0
    %2386 = vadd.xlane.f32.xlu0 %v2385
    %v2387 = vpop.xlane.xlu0 %2386
    %v2388 = vmul.f32 %v2387, %v1325
    %v2389 = vmul.f32 %v2317, %v2317
    %v2390 = vsel %vm368, %v2389, 0.0
    %2391 = vadd.xlane.f32.xlu0 %v2390
    %v2392 = vpop.xlane.xlu0 %2391
    %v2393 = vmul.f32 %v2392, %v1325
    %v2394 = vmul.f32 %v2388, %v2388
    %v2395 = vsub.f32 %v2393, %v2394
    %s2396 = sld [smem:[#allocation2 + $0x6]]
    %v2397 = vadd.f32 %v2395, 1e-05
    %v2398 = vrsqrt.pop %v2397
    %v2399 = vmul.f32 %v2398, %v2397
    %v2400 = vmul.f32 %v2399, %v2398
    %v2401 = vmul.f32 0.5, %v2400
    %v2402 = vsub.f32 1.5, %v2401
    %v2403 = vmul.f32 %v2398, %v2402
    %vm2404 = vweird.f32 %v2397
    %vm2405 = vweird.f32 %v2398
    %vm2406 = vmor %vm2404, %vm2405
    %v2407 = vsel %vm2406, %v2398, %v2403
    %v2408 = vstv %s2396
    %v2409 = vmul.f32 %v2408, %v2407
    %v2410 = vmul.f32 %v2317, %v2409
    %v2411 = vmul.f32 %v2388, %v2409
    %v2412 = vsub.f32 %v2410, %v2411
    %2414 = vrot.lane.b32.xlu0 %v2317, 96
    %v2415 = vpop.permute.xlu0 %2414
    %v2417 = vsel %vm812, %v2415, 0.0
    %2418 = vadd.xlane.f32.xlu0 %v2417
    %v2419 = vpop.xlane.xlu0 %2418
    %v2420 = vmul.f32 %v2419, %v1364
    %2422 = vrot.lane.b32.xlu0 %v2389, 96
    %v2423 = vpop.permute.xlu0 %2422
    %v2425 = vsel %vm812, %v2423, 0.0
    %2426 = vadd.xlane.f32.xlu0 %v2425
    %v2427 = vpop.xlane.xlu0 %2426
    %v2428 = vmul.f32 %v2427, %v1364
    %v2429 = vmul.f32 %v2420, %v2420
    %v2430 = vsub.f32 %v2428, %v2429
    %s2431 = sld [smem:[#allocation2 + $0x7]]
    %v2432 = vadd.f32 %v2430, 1e-05
    %v2433 = vrsqrt.pop %v2432
    %v2434 = vmul.f32 %v2433, %v2432
    %v2435 = vmul.f32 %v2434, %v2433
    %v2436 = vmul.f32 0.5, %v2435
    %v2437 = vsub.f32 1.5, %v2436
    %v2438 = vmul.f32 %v2433, %v2437
    %vm2439 = vweird.f32 %v2432
    %vm2440 = vweird.f32 %v2433
    %vm2441 = vmor %vm2439, %vm2440
    %v2442 = vsel %vm2441, %v2433, %v2438
    %v2443 = vstv %s2431
    %v2444 = vmul.f32 %v2443, %v2442
    %v2445 = vmul.f32 %v2317, %v2444
    %v2446 = vmul.f32 %v2420, %v2444
    %v2447 = vsub.f32 %v2445, %v2446
    %v2448 = vsel %vm368, %v2412, %v2447
    %v2450 = vsel %vm1478, %v2448, 0
    %2452 = vmatpush.msra.mxu0 %v1454
    %2453 = vmatpush.msra.mxu0 %v1450
    %2454 = vmatpush.msra.mxu0 %v1446
    %2455 = vmatpush.msra.mxu0 %v1442
    %2456 = vmatpush.msra.mxu0 %v1438
    %2457 = vmatpush.msra.mxu0 %v1434
    %2458 = vmatpush.msra.mxu0 %v1430
    %2459 = vmatpush.msra.mxu0 %v1426
    %2460 = vmatpush.msra.mxu0 %v1422
    %2461 = vmatpush.msra.mxu0 %v1418
    %2462 = vmatpush.msra.mxu0 %v1414
    %2463 = vmatpush.msra.mxu0 %v1410
    %2464 = vmatpush.msra.mxu0 %v1406
    %2465 = vmatpush.msra.mxu0 %v1402
    %2466 = vmatpush.msra.mxu0 %v1398
    %2467 = vmatpush.msra.mxu0 %v1394
    %2468 = vmatmul.f32.gmra.mxu0 %v2384
    %v2469 = vpop.f32.mrf.mxu0
    %v2470 = vadd.f32 0.0, %v2469
    %2471 = vdwg.mxu0
    %2472 = vmatpush.msra.mxu0 0.0
    %2473 = vmatpush.msra.mxu0 0.0
    %2474 = vmatpush.msra.mxu0 0.0
    %2475 = vmatpush.msra.mxu0 0.0
    %2476 = vmatpush.msra.mxu0 0.0
    %2477 = vmatpush.msra.mxu0 0.0
    %2478 = vmatpush.msra.mxu0 0.0
    %2479 = vmatpush.msra.mxu0 0.0
    %2480 = vmatpush.msra.mxu0 0.0
    %2481 = vmatpush.msra.mxu0 0.0
    %2482 = vmatpush.msra.mxu0 0.0
    %2483 = vmatpush.msra.mxu0 %v1474
    %2484 = vmatpush.msra.mxu0 %v1470
    %2485 = vmatpush.msra.mxu0 %v1466
    %2486 = vmatpush.msra.mxu0 %v1462
    %2487 = vmatpush.msra.mxu0 %v1458
    %2488 = vmatmul.f32.gmra.mxu0 %v2450
    %v2489 = vpop.f32.mrf.mxu0
    %v2490 = vadd.f32 %v2470, %v2489
    %2491 = vdwg.mxu0
    %2492 = vmatpush.msra.mxu0 %v1455
    %2493 = vmatpush.msra.mxu0 %v1451
    %2494 = vmatpush.msra.mxu0 %v1447
    %2495 = vmatpush.msra.mxu0 %v1443
    %2496 = vmatpush.msra.mxu0 %v1439
    %2497 = vmatpush.msra.mxu0 %v1435
    %2498 = vmatpush.msra.mxu0 %v1431
    %2499 = vmatpush.msra.mxu0 %v1427
    %2500 = vmatpush.msra.mxu0 %v1423
    %2501 = vmatpush.msra.mxu0 %v1419
    %2502 = vmatpush.msra.mxu0 %v1415
    %2503 = vmatpush.msra.mxu0 %v1411
    %2504 = vmatpush.msra.mxu0 %v1407
    %2505 = vmatpush.msra.mxu0 %v1403
    %2506 = vmatpush.msra.mxu0 %v1399
    %2507 = vmatpush.msra.mxu0 %v1395
    %2508 = vmatmul.f32.gmra.mxu0 %v2384
    %v2509 = vpop.f32.mrf.mxu0
    %v2510 = vadd.f32 0.0, %v2509
    %2511 = vdwg.mxu0
    %2512 = vmatpush.msra.mxu0 0.0
    %2513 = vmatpush.msra.mxu0 0.0
    %2514 = vmatpush.msra.mxu0 0.0
    %2515 = vmatpush.msra.mxu0 0.0
    %2516 = vmatpush.msra.mxu0 0.0
    %2517 = vmatpush.msra.mxu0 0.0
    %2518 = vmatpush.msra.mxu0 0.0
    %2519 = vmatpush.msra.mxu0 0.0
    %2520 = vmatpush.msra.mxu0 0.0
    %2521 = vmatpush.msra.mxu0 0.0
    %2522 = vmatpush.msra.mxu0 0.0
    %2523 = vmatpush.msra.mxu0 %v1475
    %2524 = vmatpush.msra.mxu0 %v1471
    %2525 = vmatpush.msra.mxu0 %v1467
    %2526 = vmatpush.msra.mxu0 %v1463
    %2527 = vmatpush.msra.mxu0 %v1459
    %2528 = vmatmul.f32.gmra.mxu0 %v2450
    %v2529 = vpop.f32.mrf.mxu0
    %v2530 = vadd.f32 %v2510, %v2529
    %2531 = vdwg.mxu0
    %2532 = vmatpush.msra.mxu0 %v1456
    %2533 = vmatpush.msra.mxu0 %v1452
    %2534 = vmatpush.msra.mxu0 %v1448
    %2535 = vmatpush.msra.mxu0 %v1444
    %2536 = vmatpush.msra.mxu0 %v1440
    %2537 = vmatpush.msra.mxu0 %v1436
    %2538 = vmatpush.msra.mxu0 %v1432
    %2539 = vmatpush.msra.mxu0 %v1428
    %2540 = vmatpush.msra.mxu0 %v1424
    %2541 = vmatpush.msra.mxu0 %v1420
    %2542 = vmatpush.msra.mxu0 %v1416
    %2543 = vmatpush.msra.mxu0 %v1412
    %2544 = vmatpush.msra.mxu0 %v1408
    %2545 = vmatpush.msra.mxu0 %v1404
    %2546 = vmatpush.msra.mxu0 %v1400
    %2547 = vmatpush.msra.mxu0 %v1396
    %2548 = vmatmul.f32.gmra.mxu0 %v2384
    %v2549 = vpop.f32.mrf.mxu0
    %v2550 = vadd.f32 0.0, %v2549
    %2551 = vdwg.mxu0
    %2552 = vmatpush.msra.mxu0 0.0
    %2553 = vmatpush.msra.mxu0 0.0
    %2554 = vmatpush.msra.mxu0 0.0
    %2555 = vmatpush.msra.mxu0 0.0
    %2556 = vmatpush.msra.mxu0 0.0
    %2557 = vmatpush.msra.mxu0 0.0
    %2558 = vmatpush.msra.mxu0 0.0
    %2559 = vmatpush.msra.mxu0 0.0
    %2560 = vmatpush.msra.mxu0 0.0
    %2561 = vmatpush.msra.mxu0 0.0
    %2562 = vmatpush.msra.mxu0 0.0
    %2563 = vmatpush.msra.mxu0 %v1476
    %2564 = vmatpush.msra.mxu0 %v1472
    %2565 = vmatpush.msra.mxu0 %v1468
    %2566 = vmatpush.msra.mxu0 %v1464
    %2567 = vmatpush.msra.mxu0 %v1460
    %2568 = vmatmul.f32.gmra.mxu0 %v2450
    %v2569 = vpop.f32.mrf.mxu0
    %v2570 = vadd.f32 %v2550, %v2569
    %2571 = vdwg.mxu0
    %2572 = vmatpush.msra.mxu0 %v1457
    %2573 = vmatpush.msra.mxu0 %v1453
    %2574 = vmatpush.msra.mxu0 %v1449
    %2575 = vmatpush.msra.mxu0 %v1445
    %2576 = vmatpush.msra.mxu0 %v1441
    %2577 = vmatpush.msra.mxu0 %v1437
    %2578 = vmatpush.msra.mxu0 %v1433
    %2579 = vmatpush.msra.mxu0 %v1429
    %2580 = vmatpush.msra.mxu0 %v1425
    %2581 = vmatpush.msra.mxu0 %v1421
    %2582 = vmatpush.msra.mxu0 %v1417
    %2583 = vmatpush.msra.mxu0 %v1413
    %2584 = vmatpush.msra.mxu0 %v1409
    %2585 = vmatpush.msra.mxu0 %v1405
    %2586 = vmatpush.msra.mxu0 %v1401
    %2587 = vmatpush.msra.mxu0 %v1397
    %2588 = vmatmul.f32.gmra.mxu0 %v2384
    %v2589 = vpop.f32.mrf.mxu0
    %v2590 = vadd.f32 0.0, %v2589
    %2591 = vdwg.mxu0
    %2592 = vmatpush.msra.mxu0 0.0
    %2593 = vmatpush.msra.mxu0 0.0
    %2594 = vmatpush.msra.mxu0 0.0
    %2595 = vmatpush.msra.mxu0 0.0
    %2596 = vmatpush.msra.mxu0 0.0
    %2597 = vmatpush.msra.mxu0 0.0
    %2598 = vmatpush.msra.mxu0 0.0
    %2599 = vmatpush.msra.mxu0 0.0
    %2600 = vmatpush.msra.mxu0 0.0
    %2601 = vmatpush.msra.mxu0 0.0
    %2602 = vmatpush.msra.mxu0 0.0
    %2603 = vmatpush.msra.mxu0 %v1477
    %2604 = vmatpush.msra.mxu0 %v1473
    %2605 = vmatpush.msra.mxu0 %v1469
    %2606 = vmatpush.msra.mxu0 %v1465
    %2607 = vmatpush.msra.mxu0 %v1461
    %2608 = vmatmul.f32.gmra.mxu0 %v2450
    %v2609 = vpop.f32.mrf.mxu0
    %v2610 = vadd.f32 %v2590, %v2609
    %2611 = vdwg.mxu0
    %v2612 = vadd.f32 %v2355, %v2490
    %v2613 = vadd.f32 %v2356, %v2530
    %v2614 = vadd.f32 %v2357, %v2570
    %v2615 = vadd.f32 %v2358, %v2610
    %v2616 = vld [vmem:[%s4] sm:$0xff]
    %v2617 = vld [vmem:[%s4 + $0x8] sm:$0x3]
    %2622 = vrot.lane.b32.xlu0 %v2612, 127
    %v2623 = vpop.permute.xlu0 %2622
    %2624 = vrot.lane.b32.xlu0 %v2613, 127
    %v2625 = vpop.permute.xlu0 %2624
    %2626 = vrot.lane.b32.xlu0 %v2614, 127
    %v2627 = vpop.permute.xlu0 %2626
    %2628 = vrot.lane.b32.xlu0 %v2615, 127
    %v2629 = vpop.permute.xlu0 %2628
    %v2630 = vsel %vm80, %v2623, %v2625
    %v2631 = vsel %vm80, %v2625, %v2627
    %v2632 = vsel %vm80, %v2627, %v2629
    %v2638 = vsel %vm80, %v2629, %v2623
    %v2639 = vmax.f32 %v2612, %v2630
    %v2640 = vmax.f32 %v2613, %v2631
    %v2641 = vmax.f32 %v2614, %v2632
    %v2642 = vmax.f32 %v2615, %v2638
    %2647 = vrot.lane.b32.xlu0 %v2639, 112
    %v2648 = vpop.permute.xlu0 %2647
    %2649 = vrot.lane.b32.xlu0 %v2640, 112
    %v2650 = vpop.permute.xlu0 %2649
    %2651 = vrot.lane.b32.xlu0 %v2641, 112
    %v2652 = vpop.permute.xlu0 %2651
    %2653 = vrot.lane.b32.xlu0 %v2642, 112
    %v2654 = vpop.permute.xlu0 %2653
    %v2655 = vsel %vm121, %v2648, %v2650
    %v2656 = vsel %vm121, %v2650, %v2652
    %v2657 = vsel %vm121, %v2652, %v2654
    %v2663 = vsel %vm121, %v2654, %v2648
    %v2664 = vmax.f32 %v2639, %v2655
    %v2665 = vmax.f32 %v2640, %v2656
    %v2666 = vmax.f32 %v2641, %v2657
    %v2667 = vmax.f32 %v2642, %v2663
    %2668 = vmatpush.msra.mxu0 %v156
    %2669 = vmatpush.msra.mxu0 %v155
    %2670 = vmatpush.msra.mxu0 %v154
    %2671 = vmatpush.msra.mxu0 %v153
    %2672 = vmatpush.msra.mxu0 %v152
    %2673 = vmatpush.msra.mxu0 %v151
    %2674 = vmatpush.msra.mxu0 %v150
    %2675 = vmatpush.msra.mxu0 %v149
    %2676 = vmatpush.msra.mxu0 %v148
    %2677 = vmatpush.msra.mxu0 %v147
    %2678 = vmatpush.msra.mxu0 %v146
    %2679 = vmatpush.msra.mxu0 %v145
    %2680 = vmatpush.msra.mxu0 %v144
    %2681 = vmatpush.msra.mxu0 %v143
    %2682 = vmatpush.msra.mxu0 %v142
    %2683 = vmatpush.msra.mxu0 %v141
    %2684 = vmatmul.f32.gmra.mxu0 %v2664
    %v2685 = vpop.f32.mrf.mxu0
    %v2686 = vadd.f32 0.0, %v2685
    %2687 = vdwg.mxu0
    %2688 = vmatpush.msra.mxu0 %v172
    %2689 = vmatpush.msra.mxu0 %v171
    %2690 = vmatpush.msra.mxu0 %v170
    %2691 = vmatpush.msra.mxu0 %v169
    %2692 = vmatpush.msra.mxu0 %v168
    %2693 = vmatpush.msra.mxu0 %v167
    %2694 = vmatpush.msra.mxu0 %v166
    %2695 = vmatpush.msra.mxu0 %v165
    %2696 = vmatpush.msra.mxu0 %v164
    %2697 = vmatpush.msra.mxu0 %v163
    %2698 = vmatpush.msra.mxu0 %v162
    %2699 = vmatpush.msra.mxu0 %v161
    %2700 = vmatpush.msra.mxu0 %v160
    %2701 = vmatpush.msra.mxu0 %v159
    %2702 = vmatpush.msra.mxu0 %v158
    %2703 = vmatpush.msra.mxu0 %v157
    %2704 = vmatmul.f32.gmra.mxu0 %v2665
    %v2705 = vpop.f32.mrf.mxu0
    %v2706 = vadd.f32 %v2686, %v2705
    %2707 = vdwg.mxu0
    %2708 = vmatpush.msra.mxu0 %v188
    %2709 = vmatpush.msra.mxu0 %v187
    %2710 = vmatpush.msra.mxu0 %v186
    %2711 = vmatpush.msra.mxu0 %v185
    %2712 = vmatpush.msra.mxu0 %v184
    %2713 = vmatpush.msra.mxu0 %v183
    %2714 = vmatpush.msra.mxu0 %v182
    %2715 = vmatpush.msra.mxu0 %v181
    %2716 = vmatpush.msra.mxu0 %v180
    %2717 = vmatpush.msra.mxu0 %v179
    %2718 = vmatpush.msra.mxu0 %v178
    %2719 = vmatpush.msra.mxu0 %v177
    %2720 = vmatpush.msra.mxu0 %v176
    %2721 = vmatpush.msra.mxu0 %v175
    %2722 = vmatpush.msra.mxu0 %v174
    %2723 = vmatpush.msra.mxu0 %v173
    %2724 = vmatmul.f32.gmra.mxu0 %v2666
    %v2725 = vpop.f32.mrf.mxu0
    %v2726 = vadd.f32 %v2706, %v2725
    %2727 = vdwg.mxu0
    %2728 = vmatpush.msra.mxu0 %v204
    %2729 = vmatpush.msra.mxu0 %v203
    %2730 = vmatpush.msra.mxu0 %v202
    %2731 = vmatpush.msra.mxu0 %v201
    %2732 = vmatpush.msra.mxu0 %v200
    %2733 = vmatpush.msra.mxu0 %v199
    %2734 = vmatpush.msra.mxu0 %v198
    %2735 = vmatpush.msra.mxu0 %v197
    %2736 = vmatpush.msra.mxu0 %v196
    %2737 = vmatpush.msra.mxu0 %v195
    %2738 = vmatpush.msra.mxu0 %v194
    %2739 = vmatpush.msra.mxu0 %v193
    %2740 = vmatpush.msra.mxu0 %v192
    %2741 = vmatpush.msra.mxu0 %v191
    %2742 = vmatpush.msra.mxu0 %v190
    %2743 = vmatpush.msra.mxu0 %v189
    %2744 = vmatmul.f32.gmra.mxu0 %v2667
    %v2745 = vpop.f32.mrf.mxu0
    %v2746 = vadd.f32 %v2726, %v2745
    %2747 = vdwg.mxu0
    %2749 = vrot.lane.b32.xlu0 %v2746, 127
    %v2750 = vpop.permute.xlu0 %2749
    %v2752 = vmax.f32 %v2746, %v2750
    %2754 = vrot.lane.b32.xlu0 %v2752, 120
    %v2755 = vpop.permute.xlu0 %2754
    %v2757 = vmax.f32 %v2752, %v2755
    %2758 = vmatpush.msra.mxu0 %v323
    %2759 = vmatpush.msra.mxu0 %v322
    %2760 = vmatpush.msra.mxu0 %v321
    %2761 = vmatpush.msra.mxu0 %v320
    %2762 = vmatpush.msra.mxu0 %v319
    %2763 = vmatpush.msra.mxu0 %v318
    %2764 = vmatpush.msra.mxu0 %v317
    %2765 = vmatpush.msra.mxu0 %v316
    %2766 = vmatpush.msra.mxu0 %v315
    %2767 = vmatpush.msra.mxu0 %v314
    %2768 = vmatpush.msra.mxu0 %v313
    %2769 = vmatpush.msra.mxu0 %v312
    %2770 = vmatpush.msra.mxu0 %v311
    %2771 = vmatpush.msra.mxu0 %v310
    %2772 = vmatpush.msra.mxu0 %v309
    %2773 = vmatpush.msra.mxu0 %v308
    %2774 = vmatmul.f32.gmra.mxu0 %v2757
    %v2775 = vpop.f32.mrf.mxu0
    %v2776 = vadd.f32 0.0, %v2775
    %2777 = vdwg.mxu0
    %2779 = vrot.lane.b32.xlu0 %v2776, 127
    %v2780 = vpop.permute.xlu0 %2779
    %2782 = vrot.lane.b32.xlu0 %v2776, 31
    %v2783 = vpop.permute.xlu0 %2782
    %v2785 = vsel %vm351, %v2780, %v2783
    %v2786 = vmax.f32 %v2776, %v2785
    %2788 = vrot.lane.b32.xlu0 %v2786, 124
    %v2789 = vpop.permute.xlu0 %2788
    %2791 = vrot.lane.b32.xlu0 %v2786, 28
    %v2792 = vpop.permute.xlu0 %2791
    %v2794 = vsel %vm361, %v2789, %v2792
    %v2795 = vmax.f32 %v2786, %v2794
    %v2797 = vsel %vm368, %v2795, 0
    %2799 = vmatpush.msra.mxu0 0.0
    %2800 = vmatpush.msra.mxu0 0.0
    %2801 = vmatpush.msra.mxu0 0.0
    %2802 = vmatpush.msra.mxu0 0.0
    %2803 = vmatpush.msra.mxu0 0.0
    %2804 = vmatpush.msra.mxu0 0.0
    %2805 = vmatpush.msra.mxu0 0.0
    %2806 = vmatpush.msra.mxu0 0.0
    %2807 = vmatpush.msra.mxu0 0.0
    %2808 = vmatpush.msra.mxu0 0.0
    %2809 = vmatpush.msra.mxu0 0.0
    %2810 = vmatpush.msra.mxu0 0.0
    %2811 = vmatpush.msra.mxu0 %v367
    %2812 = vmatpush.msra.mxu0 %v366
    %2813 = vmatpush.msra.mxu0 %v365
    %2814 = vmatpush.msra.mxu0 %v364
    %2815 = vmatmul.f32.gmra.mxu0 %v2797
    %v2816 = vpop.f32.mrf.mxu0
    %v2817 = vadd.f32 0.0, %v2816
    %2818 = vdwg.mxu0
    %2819 = vrot.lane.b32.xlu0 %v2615, 17
    %v2820 = vpop.permute.xlu0 %2819
    %2822 = vrot.lane.b32.xlu0 %v2612, 17
    %v2823 = vpop.permute.xlu0 %2822
    %2824 = vrot.lane.b32.xlu0 %v2613, 17
    %v2825 = vpop.permute.xlu0 %2824
    %2826 = vrot.lane.b32.xlu0 %v2614, 17
    %v2827 = vpop.permute.xlu0 %2826
    %v2828 = vsel %vm420, %v2823, %v2825
    %v2829 = vsel %vm420, %v2825, %v2827
    %v2830 = vsel %vm420, %v2827, %v2820
    %v2835 = vsel %vm420, %v2820, %v2823
    %v2836 = vmul.f32 %v2835, %v429
    %v2837 = vmul.f32 %v2828, %v430
    %v2838 = vmul.f32 %v2829, %v431
    %v2839 = vmul.f32 %v2830, %v432
    %2840 = vrot.lane.b32.xlu0 %v2615, 16
    %v2841 = vpop.permute.xlu0 %2840
    %2843 = vrot.lane.b32.xlu0 %v2612, 16
    %v2844 = vpop.permute.xlu0 %2843
    %2845 = vrot.lane.b32.xlu0 %v2613, 16
    %v2846 = vpop.permute.xlu0 %2845
    %2847 = vrot.lane.b32.xlu0 %v2614, 16
    %v2848 = vpop.permute.xlu0 %2847
    %v2849 = vsel %vm457, %v2844, %v2846
    %v2850 = vsel %vm457, %v2846, %v2848
    %v2851 = vsel %vm457, %v2848, %v2841
    %v2856 = vsel %vm457, %v2841, %v2844
    %v2857 = vmul.f32 %v2856, %v466
    %v2858 = vmul.f32 %v2849, %v467
    %v2859 = vmul.f32 %v2850, %v468
    %v2860 = vmul.f32 %v2851, %v469
    %2861 = vrot.lane.b32.xlu0 %v2615, 15
    %v2862 = vpop.permute.xlu0 %2861
    %2864 = vrot.lane.b32.xlu0 %v2612, 15
    %v2865 = vpop.permute.xlu0 %2864
    %2866 = vrot.lane.b32.xlu0 %v2613, 15
    %v2867 = vpop.permute.xlu0 %2866
    %2868 = vrot.lane.b32.xlu0 %v2614, 15
    %v2869 = vpop.permute.xlu0 %2868
    %v2870 = vsel %vm494, %v2865, %v2867
    %v2871 = vsel %vm494, %v2867, %v2869
    %v2872 = vsel %vm494, %v2869, %v2862
    %v2877 = vsel %vm494, %v2862, %v2865
    %v2878 = vmul.f32 %v2877, %v503
    %v2879 = vmul.f32 %v2870, %v504
    %v2880 = vmul.f32 %v2871, %v505
    %v2881 = vmul.f32 %v2872, %v506
    %2882 = vrot.lane.b32.xlu0 %v2615, 1
    %v2883 = vpop.permute.xlu0 %2882
    %2885 = vrot.lane.b32.xlu0 %v2612, 1
    %v2886 = vpop.permute.xlu0 %2885
    %2887 = vrot.lane.b32.xlu0 %v2613, 1
    %v2888 = vpop.permute.xlu0 %2887
    %2889 = vrot.lane.b32.xlu0 %v2614, 1
    %v2890 = vpop.permute.xlu0 %2889
    %v2891 = vsel %vm531, %v2886, %v2888
    %v2892 = vsel %vm531, %v2888, %v2890
    %v2893 = vsel %vm531, %v2890, %v2883
    %v2898 = vsel %vm531, %v2883, %v2886
    %v2899 = vmul.f32 %v2898, %v540
    %v2900 = vmul.f32 %v2891, %v541
    %v2901 = vmul.f32 %v2892, %v542
    %v2902 = vmul.f32 %v2893, %v543
    %v2903 = vmul.f32 %v2612, %v548
    %v2904 = vmul.f32 %v2613, %v549
    %v2905 = vmul.f32 %v2614, %v550
    %v2906 = vmul.f32 %v2615, %v551
    %v2907 = vmul.f32 %v2630, %v564
    %v2908 = vmul.f32 %v2631, %v565
    %v2909 = vmul.f32 %v2632, %v566
    %v2910 = vmul.f32 %v2638, %v567
    %2911 = vrot.lane.b32.xlu0 %v2612, 113
    %v2912 = vpop.permute.xlu0 %2911
    %2913 = vrot.lane.b32.xlu0 %v2613, 113
    %v2914 = vpop.permute.xlu0 %2913
    %2915 = vrot.lane.b32.xlu0 %v2614, 113
    %v2916 = vpop.permute.xlu0 %2915
    %2917 = vrot.lane.b32.xlu0 %v2615, 113
    %v2918 = vpop.permute.xlu0 %2917
    %v2919 = vsel %vm587, %v2912, %v2914
    %v2920 = vsel %vm587, %v2914, %v2916
    %v2921 = vsel %vm587, %v2916, %v2918
    %v2927 = vsel %vm587, %v2918, %v2912
    %v2928 = vmul.f32 %v2919, %v601
    %v2929 = vmul.f32 %v2920, %v602
    %v2930 = vmul.f32 %v2921, %v603
    %v2931 = vmul.f32 %v2927, %v604
    %2932 = vrot.lane.b32.xlu0 %v2612, 112
    %v2933 = vpop.permute.xlu0 %2932
    %2934 = vrot.lane.b32.xlu0 %v2613, 112
    %v2935 = vpop.permute.xlu0 %2934
    %2936 = vrot.lane.b32.xlu0 %v2614, 112
    %v2937 = vpop.permute.xlu0 %2936
    %2938 = vrot.lane.b32.xlu0 %v2615, 112
    %v2939 = vpop.permute.xlu0 %2938
    %v2940 = vsel %vm121, %v2933, %v2935
    %v2941 = vsel %vm121, %v2935, %v2937
    %v2942 = vsel %vm121, %v2937, %v2939
    %v2948 = vsel %vm121, %v2939, %v2933
    %v2949 = vmul.f32 %v2940, %v637
    %v2950 = vmul.f32 %v2941, %v638
    %v2951 = vmul.f32 %v2942, %v639
    %v2952 = vmul.f32 %v2948, %v640
    %2953 = vrot.lane.b32.xlu0 %v2612, 111
    %v2954 = vpop.permute.xlu0 %2953
    %2955 = vrot.lane.b32.xlu0 %v2613, 111
    %v2956 = vpop.permute.xlu0 %2955
    %2957 = vrot.lane.b32.xlu0 %v2614, 111
    %v2958 = vpop.permute.xlu0 %2957
    %2959 = vrot.lane.b32.xlu0 %v2615, 111
    %v2960 = vpop.permute.xlu0 %2959
    %v2961 = vsel %vm660, %v2954, %v2956
    %v2962 = vsel %vm660, %v2956, %v2958
    %v2963 = vsel %vm660, %v2958, %v2960
    %v2969 = vsel %vm660, %v2960, %v2954
    %v2970 = vmul.f32 %v2961, %v674
    %v2971 = vmul.f32 %v2962, %v675
    %v2972 = vmul.f32 %v2963, %v676
    %v2973 = vmul.f32 %v2969, %v677
    %2974 = vrot.lane.b32.xlu0 %v2746, 9
    %v2975 = vpop.permute.xlu0 %2974
    %v2977 = vmul.f32 %v2975, %v807
    %2978 = vrot.lane.b32.xlu0 %v2746, 8
    %v2979 = vpop.permute.xlu0 %2978
    %v2981 = vmul.f32 %v2979, %v813
    %2982 = vrot.lane.b32.xlu0 %v2746, 7
    %v2983 = vpop.permute.xlu0 %2982
    %v2985 = vmul.f32 %v2983, %v819
    %2986 = vrot.lane.b32.xlu0 %v2746, 1
    %v2987 = vpop.permute.xlu0 %2986
    %v2989 = vmul.f32 %v2987, %v824
    %v2990 = vmul.f32 %v2746, %v826
    %v2991 = vmul.f32 %v2750, %v828
    %2992 = vrot.lane.b32.xlu0 %v2746, 121
    %v2993 = vpop.permute.xlu0 %2992
    %v2995 = vmul.f32 %v2993, %v833
    %2996 = vrot.lane.b32.xlu0 %v2746, 120
    %v2997 = vpop.permute.xlu0 %2996
    %v2999 = vmul.f32 %v2997, %v838
    %3000 = vrot.lane.b32.xlu0 %v2746, 119
    %v3001 = vpop.permute.xlu0 %3000
    %v3003 = vmul.f32 %v3001, %v843
    %3004 = vrot.lane.b32.xlu0 %v2776, 101
    %v3005 = vpop.permute.xlu0 %3004
    %3007 = vrot.lane.b32.xlu0 %v2776, 5
    %v3008 = vpop.permute.xlu0 %3007
    %v3010 = vsel %vm881, %v3005, %v3008
    %v3011 = vmul.f32 %v3010, %v883
    %3012 = vrot.lane.b32.xlu0 %v2776, 100
    %v3013 = vpop.permute.xlu0 %3012
    %3015 = vrot.lane.b32.xlu0 %v2776, 4
    %v3016 = vpop.permute.xlu0 %3015
    %v3018 = vsel %vm891, %v3013, %v3016
    %v3019 = vmul.f32 %v3018, %v893
    %3020 = vrot.lane.b32.xlu0 %v2776, 99
    %v3021 = vpop.permute.xlu0 %3020
    %3023 = vrot.lane.b32.xlu0 %v2776, 3
    %v3024 = vpop.permute.xlu0 %3023
    %v3026 = vsel %vm901, %v3021, %v3024
    %v3027 = vmul.f32 %v3026, %v903
    %3028 = vrot.lane.b32.xlu0 %v2776, 97
    %v3029 = vpop.permute.xlu0 %3028
    %3031 = vrot.lane.b32.xlu0 %v2776, 1
    %v3032 = vpop.permute.xlu0 %3031
    %v3034 = vsel %vm531, %v3029, %v3032
    %v3035 = vmul.f32 %v3034, %v912
    %v3036 = vmul.f32 %v2776, %v914
    %v3037 = vmul.f32 %v2785, %v916
    %3038 = vrot.lane.b32.xlu0 %v2776, 125
    %v3039 = vpop.permute.xlu0 %3038
    %3041 = vrot.lane.b32.xlu0 %v2776, 29
    %v3042 = vpop.permute.xlu0 %3041
    %v3044 = vsel %vm924, %v3039, %v3042
    %v3045 = vmul.f32 %v3044, %v926
    %3046 = vrot.lane.b32.xlu0 %v2776, 124
    %v3047 = vpop.permute.xlu0 %3046
    %3049 = vrot.lane.b32.xlu0 %v2776, 28
    %v3050 = vpop.permute.xlu0 %3049
    %v3052 = vsel %vm361, %v3047, %v3050
    %v3053 = vmul.f32 %v3052, %v935
    %3054 = vrot.lane.b32.xlu0 %v2776, 123
    %v3055 = vpop.permute.xlu0 %3054
    %3057 = vrot.lane.b32.xlu0 %v2776, 27
    %v3058 = vpop.permute.xlu0 %3057
    %v3060 = vsel %vm943, %v3055, %v3058
    %v3061 = vmul.f32 %v3060, %v945
    %3063 = vrot.lane.b32.xlu0 %v2817, 123
    %v3064 = vpop.permute.xlu0 %3063
    %3066 = vrot.lane.b32.xlu0 %v2817, 3
    %v3067 = vpop.permute.xlu0 %3066
    %v3069 = vsel %vm901, %v3064, %v3067
    %v3070 = vmul.f32 %v3069, %v985
    %3071 = vrot.lane.b32.xlu0 %v2817, 122
    %v3072 = vpop.permute.xlu0 %3071
    %3074 = vrot.lane.b32.xlu0 %v2817, 2
    %v3075 = vpop.permute.xlu0 %3074
    %v3077 = vsel %vm993, %v3072, %v3075
    %v3078 = vmul.f32 %v3077, %v995
    %3079 = vrot.lane.b32.xlu0 %v2817, 121
    %v3080 = vpop.permute.xlu0 %3079
    %3082 = vrot.lane.b32.xlu0 %v2817, 1
    %v3083 = vpop.permute.xlu0 %3082
    %v3085 = vsel %vm531, %v3080, %v3083
    %v3086 = vmul.f32 %v3085, %v1004
    %v3087 = vmul.f32 %v3085, %v1006
    %v3088 = vmul.f32 %v2817, %v1008
    %3089 = vrot.lane.b32.xlu0 %v2817, 127
    %v3090 = vpop.permute.xlu0 %3089
    %3092 = vrot.lane.b32.xlu0 %v2817, 7
    %v3093 = vpop.permute.xlu0 %3092
    %v3095 = vsel %vm818, %v3090, %v3093
    %v3096 = vmul.f32 %v3095, %v1017
    %v3097 = vmul.f32 %v3095, %v1019
    %3098 = vrot.lane.b32.xlu0 %v2817, 126
    %v3099 = vpop.permute.xlu0 %3098
    %3101 = vrot.lane.b32.xlu0 %v2817, 6
    %v3102 = vpop.permute.xlu0 %3101
    %v3104 = vsel %vm1027, %v3099, %v3102
    %v3105 = vmul.f32 %v3104, %v1029
    %3106 = vrot.lane.b32.xlu0 %v2817, 125
    %v3107 = vpop.permute.xlu0 %3106
    %3109 = vrot.lane.b32.xlu0 %v2817, 5
    %v3110 = vpop.permute.xlu0 %3109
    %v3112 = vsel %vm881, %v3107, %v3110
    %v3113 = vmul.f32 %v3112, %v1038
    %3123 = vrot.lane.b32.xlu0 %v3070, 32
    %v3124 = vpop.permute.xlu0 %3123
    %3125 = vrot.lane.b32.xlu0 %v3078, 32
    %v3126 = vpop.permute.xlu0 %3125
    %3127 = vrot.lane.b32.xlu0 %v3086, 32
    %v3128 = vpop.permute.xlu0 %3127
    %3129 = vrot.lane.b32.xlu0 %v3087, 32
    %v3130 = vpop.permute.xlu0 %3129
    %3131 = vrot.lane.b32.xlu0 %v3088, 32
    %v3132 = vpop.permute.xlu0 %3131
    %3133 = vrot.lane.b32.xlu0 %v3096, 32
    %v3134 = vpop.permute.xlu0 %3133
    %3135 = vrot.lane.b32.xlu0 %v3097, 32
    %v3136 = vpop.permute.xlu0 %3135
    %3137 = vrot.lane.b32.xlu0 %v3105, 32
    %v3138 = vpop.permute.xlu0 %3137
    %3139 = vrot.lane.b32.xlu0 %v3113, 32
    %v3140 = vpop.permute.xlu0 %3139
    %v3150 = vsel %vm368, %v3011, %v3124
    %v3151 = vsel %vm368, %v3019, %v3126
    %v3152 = vsel %vm368, %v3027, %v3128
    %v3153 = vsel %vm368, %v3035, %v3130
    %v3154 = vsel %vm368, %v3036, %v3132
    %v3155 = vsel %vm368, %v3037, %v3134
    %v3156 = vsel %vm368, %v3045, %v3136
    %v3157 = vsel %vm368, %v3053, %v3138
    %v3158 = vsel %vm368, %v3061, %v3140
    %v3160 = vsel %vm2188, %v2616, 0
    %v3163 = vsel %vm2188, %v2617, 0
    %3165 = vmatpush.msra.mxu0 0.0
    %3166 = vmatpush.msra.mxu0 0.0
    %3167 = vmatpush.msra.mxu0 0.0
    %3168 = vmatpush.msra.mxu0 0.0
    %3169 = vmatpush.msra.mxu0 0.0
    %3170 = vmatpush.msra.mxu0 0.0
    %3171 = vmatpush.msra.mxu0 0.0
    %3172 = vmatpush.msra.mxu0 %v2970
    %3173 = vmatpush.msra.mxu0 %v2949
    %3174 = vmatpush.msra.mxu0 %v2928
    %3175 = vmatpush.msra.mxu0 %v2907
    %3176 = vmatpush.msra.mxu0 %v2903
    %3177 = vmatpush.msra.mxu0 %v2899
    %3178 = vmatpush.msra.mxu0 %v2878
    %3179 = vmatpush.msra.mxu0 %v2857
    %3180 = vmatpush.msra.mxu0 %v2836
    %3181 = vmatmul.f32.gmra.mxu0 %v3160
    %v3182 = vpop.f32.mrf.mxu0
    %v3183 = vadd.f32 0.0, %v3182
    %3184 = vmatmul.f32.gmra.mxu0 %v3163
    %v3185 = vpop.f32.mrf.mxu0
    %v3186 = vadd.f32 0.0, %v3185
    %3187 = vdwg.mxu0
    %3188 = vmatpush.msra.mxu0 0.0
    %3189 = vmatpush.msra.mxu0 0.0
    %3190 = vmatpush.msra.mxu0 0.0
    %3191 = vmatpush.msra.mxu0 0.0
    %3192 = vmatpush.msra.mxu0 0.0
    %3193 = vmatpush.msra.mxu0 0.0
    %3194 = vmatpush.msra.mxu0 0.0
    %3195 = vmatpush.msra.mxu0 %v2971
    %3196 = vmatpush.msra.mxu0 %v2950
    %3197 = vmatpush.msra.mxu0 %v2929
    %3198 = vmatpush.msra.mxu0 %v2908
    %3199 = vmatpush.msra.mxu0 %v2904
    %3200 = vmatpush.msra.mxu0 %v2900
    %3201 = vmatpush.msra.mxu0 %v2879
    %3202 = vmatpush.msra.mxu0 %v2858
    %3203 = vmatpush.msra.mxu0 %v2837
    %3204 = vmatmul.f32.gmra.mxu0 %v3160
    %v3205 = vpop.f32.mrf.mxu0
    %v3206 = vadd.f32 0.0, %v3205
    %3207 = vmatmul.f32.gmra.mxu0 %v3163
    %v3208 = vpop.f32.mrf.mxu0
    %v3209 = vadd.f32 0.0, %v3208
    %3210 = vdwg.mxu0
    %3211 = vmatpush.msra.mxu0 0.0
    %3212 = vmatpush.msra.mxu0 0.0
    %3213 = vmatpush.msra.mxu0 0.0
    %3214 = vmatpush.msra.mxu0 0.0
    %3215 = vmatpush.msra.mxu0 0.0
    %3216 = vmatpush.msra.mxu0 0.0
    %3217 = vmatpush.msra.mxu0 0.0
    %3218 = vmatpush.msra.mxu0 %v2972
    %3219 = vmatpush.msra.mxu0 %v2951
    %3220 = vmatpush.msra.mxu0 %v2930
    %3221 = vmatpush.msra.mxu0 %v2909
    %3222 = vmatpush.msra.mxu0 %v2905
    %3223 = vmatpush.msra.mxu0 %v2901
    %3224 = vmatpush.msra.mxu0 %v2880
    %3225 = vmatpush.msra.mxu0 %v2859
    %3226 = vmatpush.msra.mxu0 %v2838
    %3227 = vmatmul.f32.gmra.mxu0 %v3160
    %v3228 = vpop.f32.mrf.mxu0
    %v3229 = vadd.f32 0.0, %v3228
    %3230 = vmatmul.f32.gmra.mxu0 %v3163
    %v3231 = vpop.f32.mrf.mxu0
    %v3232 = vadd.f32 0.0, %v3231
    %3233 = vdwg.mxu0
    %3234 = vmatpush.msra.mxu0 0.0
    %3235 = vmatpush.msra.mxu0 0.0
    %3236 = vmatpush.msra.mxu0 0.0
    %3237 = vmatpush.msra.mxu0 0.0
    %3238 = vmatpush.msra.mxu0 0.0
    %3239 = vmatpush.msra.mxu0 0.0
    %3240 = vmatpush.msra.mxu0 0.0
    %3241 = vmatpush.msra.mxu0 %v2973
    %3242 = vmatpush.msra.mxu0 %v2952
    %3243 = vmatpush.msra.mxu0 %v2931
    %3244 = vmatpush.msra.mxu0 %v2910
    %3245 = vmatpush.msra.mxu0 %v2906
    %3246 = vmatpush.msra.mxu0 %v2902
    %3247 = vmatpush.msra.mxu0 %v2881
    %3248 = vmatpush.msra.mxu0 %v2860
    %3249 = vmatpush.msra.mxu0 %v2839
    %3250 = vmatmul.f32.gmra.mxu0 %v3160
    %v3251 = vpop.f32.mrf.mxu0
    %v3252 = vadd.f32 0.0, %v3251
    %3253 = vmatmul.f32.gmra.mxu0 %v3163
    %v3254 = vpop.f32.mrf.mxu0
    %v3255 = vadd.f32 0.0, %v3254
    %3256 = vdwg.mxu0
    %3257 = vmatpush.msra.mxu0 0.0
    %3258 = vmatpush.msra.mxu0 0.0
    %3259 = vmatpush.msra.mxu0 0.0
    %3260 = vmatpush.msra.mxu0 0.0
    %3261 = vmatpush.msra.mxu0 0.0
    %3262 = vmatpush.msra.mxu0 0.0
    %3263 = vmatpush.msra.mxu0 0.0
    %3264 = vmatpush.msra.mxu0 %v3003
    %3265 = vmatpush.msra.mxu0 %v2999
    %3266 = vmatpush.msra.mxu0 %v2995
    %3267 = vmatpush.msra.mxu0 %v2991
    %3268 = vmatpush.msra.mxu0 %v2990
    %3269 = vmatpush.msra.mxu0 %v2989
    %3270 = vmatpush.msra.mxu0 %v2985
    %3271 = vmatpush.msra.mxu0 %v2981
    %3272 = vmatpush.msra.mxu0 %v2977
    %3273 = vmatmul.f32.gmra.mxu0 %v3160
    %v3274 = vpop.f32.mrf.mxu0
    %v3275 = vadd.f32 0.0, %v3274
    %3276 = vmatmul.f32.gmra.mxu0 %v3163
    %v3277 = vpop.f32.mrf.mxu0
    %v3278 = vadd.f32 0.0, %v3277
    %3279 = vdwg.mxu0
    %3280 = vmatpush.msra.mxu0 0.0
    %3281 = vmatpush.msra.mxu0 0.0
    %3282 = vmatpush.msra.mxu0 0.0
    %3283 = vmatpush.msra.mxu0 0.0
    %3284 = vmatpush.msra.mxu0 0.0
    %3285 = vmatpush.msra.mxu0 0.0
    %3286 = vmatpush.msra.mxu0 0.0
    %3287 = vmatpush.msra.mxu0 %v3158
    %3288 = vmatpush.msra.mxu0 %v3157
    %3289 = vmatpush.msra.mxu0 %v3156
    %3290 = vmatpush.msra.mxu0 %v3155
    %3291 = vmatpush.msra.mxu0 %v3154
    %3292 = vmatpush.msra.mxu0 %v3153
    %3293 = vmatpush.msra.mxu0 %v3152
    %3294 = vmatpush.msra.mxu0 %v3151
    %3295 = vmatpush.msra.mxu0 %v3150
    %3296 = vmatmul.f32.gmra.mxu0 %v3160
    %v3297 = vpop.f32.mrf.mxu0
    %v3298 = vadd.f32 0.0, %v3297
    %3299 = vmatmul.f32.gmra.mxu0 %v3163
    %v3300 = vpop.f32.mrf.mxu0
    %v3301 = vadd.f32 0.0, %v3300
    %3302 = vdwg.mxu0
    %v3303 = vmax.f32 %v3183, 0.0
    %v3304 = vmax.f32 %v3206, 0.0
    %v3305 = vmax.f32 %v3229, 0.0
    %v3306 = vmax.f32 %v3252, 0.0
    %v3307 = vmax.f32 %v3275, 0.0
    %v3308 = vmax.f32 %v3298, 0.0
    %v3309 = vmax.f32 %v3186, 0.0
    %v3310 = vmax.f32 %v3209, 0.0
    %v3311 = vmax.f32 %v3232, 0.0
    %v3312 = vmax.f32 %v3255, 0.0
    %v3313 = vmax.f32 %v3278, 0.0
    %v3314 = vmax.f32 %v3301, 0.0
    %v3315 = vadd.f32 %v3303, %v3304
    %v3316 = vadd.f32 %v3315, %v3305
    %v3317 = vadd.f32 %v3316, %v3306
    %3318 = vadd.xlane.f32.xlu0 %v3317
    %v3319 = vpop.xlane.xlu0 %3318
    %v3320 = vsel %vm792, %v3309, 0.0
    %v3321 = vsel %vm792, %v3310, 0.0
    %v3322 = vadd.f32 %v3320, %v3321
    %v3323 = vsel %vm792, %v3311, 0.0
    %v3324 = vadd.f32 %v3322, %v3323
    %v3325 = vsel %vm792, %v3312, 0.0
    %v3326 = vadd.f32 %v3324, %v3325
    %3327 = vadd.xlane.f32.xlu0 %v3326
    %v3328 = vpop.xlane.xlu0 %3327
    %v3329 = vmul.f32 %v3319, %v1246
    %v3330 = vmul.f32 %v3328, %v1246
    %v3331 = vmul.f32 %v3303, %v3303
    %v3332 = vmul.f32 %v3304, %v3304
    %v3333 = vmul.f32 %v3305, %v3305
    %v3334 = vmul.f32 %v3306, %v3306
    %v3335 = vmul.f32 %v3309, %v3309
    %v3336 = vmul.f32 %v3310, %v3310
    %v3337 = vmul.f32 %v3311, %v3311
    %v3338 = vmul.f32 %v3312, %v3312
    %v3339 = vadd.f32 %v3331, %v3332
    %v3340 = vadd.f32 %v3339, %v3333
    %v3341 = vadd.f32 %v3340, %v3334
    %3342 = vadd.xlane.f32.xlu0 %v3341
    %v3343 = vpop.xlane.xlu0 %3342
    %v3344 = vsel %vm792, %v3335, 0.0
    %v3345 = vsel %vm792, %v3336, 0.0
    %v3346 = vadd.f32 %v3344, %v3345
    %v3347 = vsel %vm792, %v3337, 0.0
    %v3348 = vadd.f32 %v3346, %v3347
    %v3349 = vsel %vm792, %v3338, 0.0
    %v3350 = vadd.f32 %v3348, %v3349
    %3351 = vadd.xlane.f32.xlu0 %v3350
    %v3352 = vpop.xlane.xlu0 %3351
    %v3353 = vmul.f32 %v3343, %v1246
    %v3354 = vmul.f32 %v3352, %v1246
    %v3355 = vmul.f32 %v3329, %v3329
    %v3356 = vmul.f32 %v3330, %v3330
    %v3357 = vsub.f32 %v3353, %v3355
    %v3358 = vsub.f32 %v3354, %v3356
    %s3359 = sld [smem:[#allocation2 + $0x8]]
    %v3360 = vadd.f32 %v3357, 1e-05
    %v3361 = vadd.f32 %v3358, 1e-05
    %v3362 = vrsqrt.pop %v3360
    %v3363 = vmul.f32 %v3362, %v3360
    %v3364 = vmul.f32 %v3363, %v3362
    %v3365 = vmul.f32 0.5, %v3364
    %v3366 = vsub.f32 1.5, %v3365
    %v3367 = vmul.f32 %v3362, %v3366
    %vm3368 = vweird.f32 %v3360
    %vm3369 = vweird.f32 %v3362
    %vm3370 = vmor %vm3368, %vm3369
    %v3371 = vsel %vm3370, %v3362, %v3367
    %v3372 = vrsqrt.pop %v3361
    %v3373 = vmul.f32 %v3372, %v3361
    %v3374 = vmul.f32 %v3373, %v3372
    %v3375 = vmul.f32 0.5, %v3374
    %v3376 = vsub.f32 1.5, %v3375
    %v3377 = vmul.f32 %v3372, %v3376
    %vm3378 = vweird.f32 %v3361
    %vm3379 = vweird.f32 %v3372
    %vm3380 = vmor %vm3378, %vm3379
    %v3381 = vsel %vm3380, %v3372, %v3377
    %v3382 = vstv %s3359
    %v3383 = vmul.f32 %v3382, %v3371
    %v3384 = vmul.f32 %v3382, %v3381
    %v3385 = vmul.f32 %v3303, %v3383
    %v3386 = vmul.f32 %v3304, %v3383
    %v3387 = vmul.f32 %v3305, %v3383
    %v3388 = vmul.f32 %v3306, %v3383
    %v3389 = vmul.f32 %v3309, %v3384
    %v3390 = vmul.f32 %v3310, %v3384
    %v3391 = vmul.f32 %v3311, %v3384
    %v3392 = vmul.f32 %v3312, %v3384
    %v3393 = vmul.f32 %v3329, %v3383
    %v3394 = vmul.f32 %v3330, %v3384
    %v3395 = vsub.f32 %v3385, %v3393
    %v3396 = vsub.f32 %v3386, %v3393
    %v3397 = vsub.f32 %v3387, %v3393
    %v3398 = vsub.f32 %v3388, %v3393
    %v3399 = vsub.f32 %v3389, %v3394
    %v3400 = vsub.f32 %v3390, %v3394
    %v3401 = vsub.f32 %v3391, %v3394
    %v3402 = vsub.f32 %v3392, %v3394
    %3403 = vadd.xlane.f32.xlu0 %v3307
    %v3404 = vpop.xlane.xlu0 %3403
    %v3405 = vsel %vm792, %v3313, 0.0
    %3406 = vadd.xlane.f32.xlu0 %v3405
    %v3407 = vpop.xlane.xlu0 %3406
    %v3408 = vmul.f32 %v3404, %v1291
    %v3409 = vmul.f32 %v3407, %v1291
    %v3410 = vmul.f32 %v3307, %v3307
    %v3411 = vmul.f32 %v3313, %v3313
    %3412 = vadd.xlane.f32.xlu0 %v3410
    %v3413 = vpop.xlane.xlu0 %3412
    %v3414 = vsel %vm792, %v3411, 0.0
    %3415 = vadd.xlane.f32.xlu0 %v3414
    %v3416 = vpop.xlane.xlu0 %3415
    %v3417 = vmul.f32 %v3413, %v1291
    %v3418 = vmul.f32 %v3416, %v1291
    %v3419 = vmul.f32 %v3408, %v3408
    %v3420 = vmul.f32 %v3409, %v3409
    %v3421 = vsub.f32 %v3417, %v3419
    %v3422 = vsub.f32 %v3418, %v3420
    %s3423 = sld [smem:[#allocation2 + $0x9]]
    %v3424 = vadd.f32 %v3421, 1e-05
    %v3425 = vadd.f32 %v3422, 1e-05
    %v3426 = vrsqrt.pop %v3424
    %v3427 = vmul.f32 %v3426, %v3424
    %v3428 = vmul.f32 %v3427, %v3426
    %v3429 = vmul.f32 0.5, %v3428
    %v3430 = vsub.f32 1.5, %v3429
    %v3431 = vmul.f32 %v3426, %v3430
    %vm3432 = vweird.f32 %v3424
    %vm3433 = vweird.f32 %v3426
    %vm3434 = vmor %vm3432, %vm3433
    %v3435 = vsel %vm3434, %v3426, %v3431
    %v3436 = vrsqrt.pop %v3425
    %v3437 = vmul.f32 %v3436, %v3425
    %v3438 = vmul.f32 %v3437, %v3436
    %v3439 = vmul.f32 0.5, %v3438
    %v3440 = vsub.f32 1.5, %v3439
    %v3441 = vmul.f32 %v3436, %v3440
    %vm3442 = vweird.f32 %v3425
    %vm3443 = vweird.f32 %v3436
    %vm3444 = vmor %vm3442, %vm3443
    %v3445 = vsel %vm3444, %v3436, %v3441
    %v3446 = vstv %s3423
    %v3447 = vmul.f32 %v3446, %v3435
    %v3448 = vmul.f32 %v3446, %v3445
    %v3449 = vmul.f32 %v3307, %v3447
    %v3450 = vmul.f32 %v3313, %v3448
    %v3451 = vmul.f32 %v3408, %v3447
    %v3452 = vmul.f32 %v3409, %v3448
    %v3453 = vsub.f32 %v3449, %v3451
    %v3454 = vsub.f32 %v3450, %v3452
    %v3455 = vsel %vm368, %v3308, 0.0
    %3456 = vadd.xlane.f32.xlu0 %v3455
    %v3457 = vpop.xlane.xlu0 %3456
    %vm3458 = vcmask 254976
    %v3459 = vsel %vm3458, %v3314, 0.0
    %3460 = vadd.xlane.f32.xlu0 %v3459
    %v3461 = vpop.xlane.xlu0 %3460
    %v3462 = vmul.f32 %v3457, %v1325
    %v3463 = vmul.f32 %v3461, %v1325
    %v3464 = vmul.f32 %v3308, %v3308
    %v3465 = vmul.f32 %v3314, %v3314
    %v3466 = vsel %vm368, %v3464, 0.0
    %3467 = vadd.xlane.f32.xlu0 %v3466
    %v3468 = vpop.xlane.xlu0 %3467
    %v3469 = vsel %vm3458, %v3465, 0.0
    %3470 = vadd.xlane.f32.xlu0 %v3469
    %v3471 = vpop.xlane.xlu0 %3470
    %v3472 = vmul.f32 %v3468, %v1325
    %v3473 = vmul.f32 %v3471, %v1325
    %v3474 = vmul.f32 %v3462, %v3462
    %v3475 = vmul.f32 %v3463, %v3463
    %v3476 = vsub.f32 %v3472, %v3474
    %v3477 = vsub.f32 %v3473, %v3475
    %s3478 = sld [smem:[#allocation2 + $0xa]]
    %v3479 = vadd.f32 %v3476, 1e-05
    %v3480 = vadd.f32 %v3477, 1e-05
    %v3481 = vrsqrt.pop %v3479
    %v3482 = vmul.f32 %v3481, %v3479
    %v3483 = vmul.f32 %v3482, %v3481
    %v3484 = vmul.f32 0.5, %v3483
    %v3485 = vsub.f32 1.5, %v3484
    %v3486 = vmul.f32 %v3481, %v3485
    %vm3487 = vweird.f32 %v3479
    %vm3488 = vweird.f32 %v3481
    %vm3489 = vmor %vm3487, %vm3488
    %v3490 = vsel %vm3489, %v3481, %v3486
    %v3491 = vrsqrt.pop %v3480
    %v3492 = vmul.f32 %v3491, %v3480
    %v3493 = vmul.f32 %v3492, %v3491
    %v3494 = vmul.f32 0.5, %v3493
    %v3495 = vsub.f32 1.5, %v3494
    %v3496 = vmul.f32 %v3491, %v3495
    %vm3497 = vweird.f32 %v3480
    %vm3498 = vweird.f32 %v3491
    %vm3499 = vmor %vm3497, %vm3498
    %v3500 = vsel %vm3499, %v3491, %v3496
    %v3501 = vstv %s3478
    %v3502 = vmul.f32 %v3501, %v3490
    %v3503 = vmul.f32 %v3501, %v3500
    %v3504 = vmul.f32 %v3308, %v3502
    %v3505 = vmul.f32 %v3314, %v3503
    %v3506 = vmul.f32 %v3462, %v3502
    %v3507 = vmul.f32 %v3463, %v3503
    %v3508 = vsub.f32 %v3504, %v3506
    %v3509 = vsub.f32 %v3505, %v3507
    %3512 = vrot.lane.b32.xlu0 %v3308, 96
    %v3513 = vpop.permute.xlu0 %3512
    %3514 = vrot.lane.b32.xlu0 %v3314, 96
    %v3515 = vpop.permute.xlu0 %3514
    %v3518 = vsel %vm812, %v3513, 0.0
    %3519 = vadd.xlane.f32.xlu0 %v3518
    %v3520 = vpop.xlane.xlu0 %3519
    %vm3521 = vcmask 58368
    %v3522 = vsel %vm3521, %v3515, 0.0
    %3523 = vadd.xlane.f32.xlu0 %v3522
    %v3524 = vpop.xlane.xlu0 %3523
    %v3525 = vmul.f32 %v3520, %v1364
    %v3526 = vmul.f32 %v3524, %v1364
    %3529 = vrot.lane.b32.xlu0 %v3464, 96
    %v3530 = vpop.permute.xlu0 %3529
    %3531 = vrot.lane.b32.xlu0 %v3465, 96
    %v3532 = vpop.permute.xlu0 %3531
    %v3535 = vsel %vm812, %v3530, 0.0
    %3536 = vadd.xlane.f32.xlu0 %v3535
    %v3537 = vpop.xlane.xlu0 %3536
    %v3538 = vsel %vm3521, %v3532, 0.0
    %3539 = vadd.xlane.f32.xlu0 %v3538
    %v3540 = vpop.xlane.xlu0 %3539
    %v3541 = vmul.f32 %v3537, %v1364
    %v3542 = vmul.f32 %v3540, %v1364
    %v3543 = vmul.f32 %v3525, %v3525
    %v3544 = vmul.f32 %v3526, %v3526
    %v3545 = vsub.f32 %v3541, %v3543
    %v3546 = vsub.f32 %v3542, %v3544
    %s3547 = sld [smem:[#allocation2 + $0xb]]
    %v3548 = vadd.f32 %v3545, 1e-05
    %v3549 = vadd.f32 %v3546, 1e-05
    %v3550 = vrsqrt.pop %v3548
    %v3551 = vmul.f32 %v3550, %v3548
    %v3552 = vmul.f32 %v3551, %v3550
    %v3553 = vmul.f32 0.5, %v3552
    %v3554 = vsub.f32 1.5, %v3553
    %v3555 = vmul.f32 %v3550, %v3554
    %vm3556 = vweird.f32 %v3548
    %vm3557 = vweird.f32 %v3550
    %vm3558 = vmor %vm3556, %vm3557
    %v3559 = vsel %vm3558, %v3550, %v3555
    %v3560 = vrsqrt.pop %v3549
    %v3561 = vmul.f32 %v3560, %v3549
    %v3562 = vmul.f32 %v3561, %v3560
    %v3563 = vmul.f32 0.5, %v3562
    %v3564 = vsub.f32 1.5, %v3563
    %v3565 = vmul.f32 %v3560, %v3564
    %vm3566 = vweird.f32 %v3549
    %vm3567 = vweird.f32 %v3560
    %vm3568 = vmor %vm3566, %vm3567
    %v3569 = vsel %vm3568, %v3560, %v3565
    %v3570 = vstv %s3547
    %v3571 = vmul.f32 %v3570, %v3559
    %v3572 = vmul.f32 %v3570, %v3569
    %v3573 = vmul.f32 %v3308, %v3571
    %v3574 = vmul.f32 %v3314, %v3572
    %v3575 = vmul.f32 %v3525, %v3571
    %v3576 = vmul.f32 %v3526, %v3572
    %v3577 = vsub.f32 %v3573, %v3575
    %v3578 = vsub.f32 %v3574, %v3576
    %v3579 = vsel %vm368, %v3508, %v3577
    %v3580 = vsel %vm368, %v3509, %v3578
    %v3582 = vsel %vm1478, %v3579, 0
    %v3585 = vsel %vm1478, %v3580, 0
    %3587 = vmatpush.msra.mxu0 %v1454
    %3588 = vmatpush.msra.mxu0 %v1450
    %3589 = vmatpush.msra.mxu0 %v1446
    %3590 = vmatpush.msra.mxu0 %v1442
    %3591 = vmatpush.msra.mxu0 %v1438
    %3592 = vmatpush.msra.mxu0 %v1434
    %3593 = vmatpush.msra.mxu0 %v1430
    %3594 = vmatpush.msra.mxu0 %v1426
    %3595 = vmatpush.msra.mxu0 %v1422
    %3596 = vmatpush.msra.mxu0 %v1418
    %3597 = vmatpush.msra.mxu0 %v1414
    %3598 = vmatpush.msra.mxu0 %v1410
    %3599 = vmatpush.msra.mxu0 %v1406
    %3600 = vmatpush.msra.mxu0 %v1402
    %3601 = vmatpush.msra.mxu0 %v1398
    %3602 = vmatpush.msra.mxu0 %v1394
    %3603 = vmatmul.f32.gmra.mxu0 %v3453
    %v3604 = vpop.f32.mrf.mxu0
    %v3605 = vadd.f32 0.0, %v3604
    %3606 = vmatmul.f32.gmra.mxu0 %v3454
    %v3607 = vpop.f32.mrf.mxu0
    %v3608 = vadd.f32 0.0, %v3607
    %3609 = vdwg.mxu0
    %3610 = vmatpush.msra.mxu0 0.0
    %3611 = vmatpush.msra.mxu0 0.0
    %3612 = vmatpush.msra.mxu0 0.0
    %3613 = vmatpush.msra.mxu0 0.0
    %3614 = vmatpush.msra.mxu0 0.0
    %3615 = vmatpush.msra.mxu0 0.0
    %3616 = vmatpush.msra.mxu0 0.0
    %3617 = vmatpush.msra.mxu0 0.0
    %3618 = vmatpush.msra.mxu0 0.0
    %3619 = vmatpush.msra.mxu0 0.0
    %3620 = vmatpush.msra.mxu0 0.0
    %3621 = vmatpush.msra.mxu0 %v1474
    %3622 = vmatpush.msra.mxu0 %v1470
    %3623 = vmatpush.msra.mxu0 %v1466
    %3624 = vmatpush.msra.mxu0 %v1462
    %3625 = vmatpush.msra.mxu0 %v1458
    %3626 = vmatmul.f32.gmra.mxu0 %v3582
    %v3627 = vpop.f32.mrf.mxu0
    %v3628 = vadd.f32 %v3605, %v3627
    %3629 = vmatmul.f32.gmra.mxu0 %v3585
    %v3630 = vpop.f32.mrf.mxu0
    %v3631 = vadd.f32 %v3608, %v3630
    %3632 = vdwg.mxu0
    %3633 = vmatpush.msra.mxu0 %v1455
    %3634 = vmatpush.msra.mxu0 %v1451
    %3635 = vmatpush.msra.mxu0 %v1447
    %3636 = vmatpush.msra.mxu0 %v1443
    %3637 = vmatpush.msra.mxu0 %v1439
    %3638 = vmatpush.msra.mxu0 %v1435
    %3639 = vmatpush.msra.mxu0 %v1431
    %3640 = vmatpush.msra.mxu0 %v1427
    %3641 = vmatpush.msra.mxu0 %v1423
    %3642 = vmatpush.msra.mxu0 %v1419
    %3643 = vmatpush.msra.mxu0 %v1415
    %3644 = vmatpush.msra.mxu0 %v1411
    %3645 = vmatpush.msra.mxu0 %v1407
    %3646 = vmatpush.msra.mxu0 %v1403
    %3647 = vmatpush.msra.mxu0 %v1399
    %3648 = vmatpush.msra.mxu0 %v1395
    %3649 = vmatmul.f32.gmra.mxu0 %v3453
    %v3650 = vpop.f32.mrf.mxu0
    %v3651 = vadd.f32 0.0, %v3650
    %3652 = vmatmul.f32.gmra.mxu0 %v3454
    %v3653 = vpop.f32.mrf.mxu0
    %v3654 = vadd.f32 0.0, %v3653
    %3655 = vdwg.mxu0
    %3656 = vmatpush.msra.mxu0 0.0
    %3657 = vmatpush.msra.mxu0 0.0
    %3658 = vmatpush.msra.mxu0 0.0
    %3659 = vmatpush.msra.mxu0 0.0
    %3660 = vmatpush.msra.mxu0 0.0
    %3661 = vmatpush.msra.mxu0 0.0
    %3662 = vmatpush.msra.mxu0 0.0
    %3663 = vmatpush.msra.mxu0 0.0
    %3664 = vmatpush.msra.mxu0 0.0
    %3665 = vmatpush.msra.mxu0 0.0
    %3666 = vmatpush.msra.mxu0 0.0
    %3667 = vmatpush.msra.mxu0 %v1475
    %3668 = vmatpush.msra.mxu0 %v1471
    %3669 = vmatpush.msra.mxu0 %v1467
    %3670 = vmatpush.msra.mxu0 %v1463
    %3671 = vmatpush.msra.mxu0 %v1459
    %3672 = vmatmul.f32.gmra.mxu0 %v3582
    %v3673 = vpop.f32.mrf.mxu0
    %v3674 = vadd.f32 %v3651, %v3673
    %3675 = vmatmul.f32.gmra.mxu0 %v3585
    %v3676 = vpop.f32.mrf.mxu0
    %v3677 = vadd.f32 %v3654, %v3676
    %3678 = vdwg.mxu0
    %3679 = vmatpush.msra.mxu0 %v1456
    %3680 = vmatpush.msra.mxu0 %v1452
    %3681 = vmatpush.msra.mxu0 %v1448
    %3682 = vmatpush.msra.mxu0 %v1444
    %3683 = vmatpush.msra.mxu0 %v1440
    %3684 = vmatpush.msra.mxu0 %v1436
    %3685 = vmatpush.msra.mxu0 %v1432
    %3686 = vmatpush.msra.mxu0 %v1428
    %3687 = vmatpush.msra.mxu0 %v1424
    %3688 = vmatpush.msra.mxu0 %v1420
    %3689 = vmatpush.msra.mxu0 %v1416
    %3690 = vmatpush.msra.mxu0 %v1412
    %3691 = vmatpush.msra.mxu0 %v1408
    %3692 = vmatpush.msra.mxu0 %v1404
    %3693 = vmatpush.msra.mxu0 %v1400
    %3694 = vmatpush.msra.mxu0 %v1396
    %3695 = vmatmul.f32.gmra.mxu0 %v3453
    %v3696 = vpop.f32.mrf.mxu0
    %v3697 = vadd.f32 0.0, %v3696
    %3698 = vmatmul.f32.gmra.mxu0 %v3454
    %v3699 = vpop.f32.mrf.mxu0
    %v3700 = vadd.f32 0.0, %v3699
    %3701 = vdwg.mxu0
    %3702 = vmatpush.msra.mxu0 0.0
    %3703 = vmatpush.msra.mxu0 0.0
    %3704 = vmatpush.msra.mxu0 0.0
    %3705 = vmatpush.msra.mxu0 0.0
    %3706 = vmatpush.msra.mxu0 0.0
    %3707 = vmatpush.msra.mxu0 0.0
    %3708 = vmatpush.msra.mxu0 0.0
    %3709 = vmatpush.msra.mxu0 0.0
    %3710 = vmatpush.msra.mxu0 0.0
    %3711 = vmatpush.msra.mxu0 0.0
    %3712 = vmatpush.msra.mxu0 0.0
    %3713 = vmatpush.msra.mxu0 %v1476
    %3714 = vmatpush.msra.mxu0 %v1472
    %3715 = vmatpush.msra.mxu0 %v1468
    %3716 = vmatpush.msra.mxu0 %v1464
    %3717 = vmatpush.msra.mxu0 %v1460
    %3718 = vmatmul.f32.gmra.mxu0 %v3582
    %v3719 = vpop.f32.mrf.mxu0
    %v3720 = vadd.f32 %v3697, %v3719
    %3721 = vmatmul.f32.gmra.mxu0 %v3585
    %v3722 = vpop.f32.mrf.mxu0
    %v3723 = vadd.f32 %v3700, %v3722
    %3724 = vdwg.mxu0
    %3725 = vmatpush.msra.mxu0 %v1457
    %3726 = vmatpush.msra.mxu0 %v1453
    %3727 = vmatpush.msra.mxu0 %v1449
    %3728 = vmatpush.msra.mxu0 %v1445
    %3729 = vmatpush.msra.mxu0 %v1441
    %3730 = vmatpush.msra.mxu0 %v1437
    %3731 = vmatpush.msra.mxu0 %v1433
    %3732 = vmatpush.msra.mxu0 %v1429
    %3733 = vmatpush.msra.mxu0 %v1425
    %3734 = vmatpush.msra.mxu0 %v1421
    %3735 = vmatpush.msra.mxu0 %v1417
    %3736 = vmatpush.msra.mxu0 %v1413
    %3737 = vmatpush.msra.mxu0 %v1409
    %3738 = vmatpush.msra.mxu0 %v1405
    %3739 = vmatpush.msra.mxu0 %v1401
    %3740 = vmatpush.msra.mxu0 %v1397
    %3741 = vmatmul.f32.gmra.mxu0 %v3453
    %v3742 = vpop.f32.mrf.mxu0
    %v3743 = vadd.f32 0.0, %v3742
    %3744 = vmatmul.f32.gmra.mxu0 %v3454
    %v3745 = vpop.f32.mrf.mxu0
    %v3746 = vadd.f32 0.0, %v3745
    %3747 = vdwg.mxu0
    %3748 = vmatpush.msra.mxu0 0.0
    %3749 = vmatpush.msra.mxu0 0.0
    %3750 = vmatpush.msra.mxu0 0.0
    %3751 = vmatpush.msra.mxu0 0.0
    %3752 = vmatpush.msra.mxu0 0.0
    %3753 = vmatpush.msra.mxu0 0.0
    %3754 = vmatpush.msra.mxu0 0.0
    %3755 = vmatpush.msra.mxu0 0.0
    %3756 = vmatpush.msra.mxu0 0.0
    %3757 = vmatpush.msra.mxu0 0.0
    %3758 = vmatpush.msra.mxu0 0.0
    %3759 = vmatpush.msra.mxu0 %v1477
    %3760 = vmatpush.msra.mxu0 %v1473
    %3761 = vmatpush.msra.mxu0 %v1469
    %3762 = vmatpush.msra.mxu0 %v1465
    %3763 = vmatpush.msra.mxu0 %v1461
    %3764 = vmatmul.f32.gmra.mxu0 %v3582
    %v3765 = vpop.f32.mrf.mxu0
    %v3766 = vadd.f32 %v3743, %v3765
    %3767 = vmatmul.f32.gmra.mxu0 %v3585
    %v3768 = vpop.f32.mrf.mxu0
    %v3769 = vadd.f32 %v3746, %v3768
    %3770 = vdwg.mxu0
    %v3771 = vadd.f32 %v3395, %v3628
    %v3772 = vadd.f32 %v3396, %v3674
    %v3773 = vadd.f32 %v3397, %v3720
    %v3774 = vadd.f32 %v3398, %v3766
    %v3775 = vadd.f32 %v3399, %v3631
    %v3776 = vadd.f32 %v3400, %v3677
    %v3777 = vadd.f32 %v3401, %v3723
    %v3778 = vadd.f32 %v3402, %v3769
    %v3779 = vld [vmem:[%s13] sm:$0xff]
    %v3780 = vld [vmem:[%s13 + $0x8] sm:$0xff]
    %v3781 = vld [vmem:[%s13 + $0x10] sm:$0xff]
    %v3782 = vld [vmem:[%s13 + $0x18] sm:$0xff]
    %v3783 = vld [vmem:[%s13 + $0x20] sm:$0xff]
    %v3784 = vld [vmem:[%s13 + $0x28] sm:$0xff]
    %v3785 = vld [vmem:[%s13 + $0x30] sm:$0xff]
    %v3786 = vld [vmem:[%s13 + $0x38] sm:$0xff]
    %v3787 = vld [vmem:[%s13 + $0x40] sm:$0xff]
    %v3788 = vld [vmem:[%s13 + $0x48] sm:$0xff]
    %v3789 = vld [vmem:[%s13 + $0x50] sm:$0xff]
    %v3790 = vld [vmem:[%s13 + $0x58] sm:$0xff]
    %v3791 = vld [vmem:[%s13 + $0x60] sm:$0xff]
    %v3792 = vld [vmem:[%s13 + $0x68] sm:$0xff]
    %v3793 = vld [vmem:[%s13 + $0x70] sm:$0xff]
    %v3794 = vld [vmem:[%s13 + $0x78] sm:$0xff]
    %v3795 = vld [vmem:[%s13 + $0x80] sm:$0xff]
    %v3796 = vld [vmem:[%s13 + $0x88] sm:$0xff]
    %v3797 = vld [vmem:[%s13 + $0x90] sm:$0xff]
    %v3798 = vld [vmem:[%s13 + $0x98] sm:$0xff]
    %v3799 = vld [vmem:[%s13 + $0xa0] sm:$0xff]
    %v3800 = vld [vmem:[%s13 + $0xa8] sm:$0xff]
    %v3801 = vld [vmem:[%s13 + $0xb0] sm:$0xff]
    %v3802 = vld [vmem:[%s13 + $0xb8] sm:$0xff]
    %v3803 = vld [vmem:[%s13 + $0xc0] sm:$0xff]
    %v3804 = vld [vmem:[%s13 + $0xc8] sm:$0xff]
    %v3805 = vld [vmem:[%s13 + $0xd0] sm:$0xff]
    %v3806 = vld [vmem:[%s13 + $0xd8] sm:$0xff]
    %v3807 = vld [vmem:[%s13 + $0xe0] sm:$0xff]
    %v3808 = vld [vmem:[%s13 + $0xe8] sm:$0xff]
    %v3809 = vld [vmem:[%s13 + $0xf0] sm:$0xff]
    %v3810 = vld [vmem:[%s13 + $0xf8] sm:$0xff]
    %v3811 = vld [vmem:[%s13 + $0x100] sm:$0xff]
    %v3812 = vld [vmem:[%s13 + $0x108] sm:$0xff]
    %v3813 = vld [vmem:[%s13 + $0x110] sm:$0xff]
    %v3814 = vld [vmem:[%s13 + $0x118] sm:$0xff]
    %v3815 = vld [vmem:[%s13 + $0x120] sm:$0xff]
    %v3816 = vld [vmem:[%s13 + $0x128] sm:$0xff]
    %v3817 = vld [vmem:[%s13 + $0x130] sm:$0xff]
    %v3818 = vld [vmem:[%s13 + $0x138] sm:$0xff]
    %v3819 = vld [vmem:[%s13 + $0x140] sm:$0xff]
    %v3820 = vld [vmem:[%s13 + $0x148] sm:$0xff]
    %v3821 = vld [vmem:[%s13 + $0x150] sm:$0xff]
    %v3822 = vld [vmem:[%s13 + $0x158] sm:$0xff]
    %v3823 = vld [vmem:[%s13 + $0x160] sm:$0xff]
    %v3824 = vld [vmem:[%s13 + $0x168] sm:$0xff]
    %v3825 = vld [vmem:[%s13 + $0x170] sm:$0xff]
    %v3826 = vld [vmem:[%s13 + $0x178] sm:$0xff]
    %v3827 = vld [vmem:[%s13 + $0x180] sm:$0xff]
    %v3828 = vld [vmem:[%s13 + $0x188] sm:$0xff]
    %v3829 = vld [vmem:[%s13 + $0x190] sm:$0xff]
    %v3830 = vld [vmem:[%s13 + $0x198] sm:$0xff]
    %v3831 = vld [vmem:[%s13 + $0x1a0] sm:$0xff]
    %v3832 = vld [vmem:[%s13 + $0x1a8] sm:$0xff]
    %v3833 = vld [vmem:[%s13 + $0x1b0] sm:$0xff]
    %v3834 = vld [vmem:[%s13 + $0x1b8] sm:$0xff]
    %v3835 = vld [vmem:[%s13 + $0x1c0] sm:$0xff]
    %v3836 = vld [vmem:[%s13 + $0x1c8] sm:$0xff]
    %v3837 = vld [vmem:[%s13 + $0x1d0] sm:$0xff]
    %v3838 = vld [vmem:[%s13 + $0x1d8] sm:$0xff]
    %v3839 = vld [vmem:[%s13 + $0x1e0] sm:$0xff]
    %v3840 = vld [vmem:[%s13 + $0x1e8] sm:$0xff]
    %v3841 = vld [vmem:[%s13 + $0x1f0] sm:$0xff]
    %v3842 = vld [vmem:[%s13 + $0x1f8] sm:$0xff]
    %3843 = vmatpush.msra.mxu0 %v3794
    %3844 = vmatpush.msra.mxu0 %v3793
    %3845 = vmatpush.msra.mxu0 %v3792
    %3846 = vmatpush.msra.mxu0 %v3791
    %3847 = vmatpush.msra.mxu0 %v3790
    %3848 = vmatpush.msra.mxu0 %v3789
    %3849 = vmatpush.msra.mxu0 %v3788
    %3850 = vmatpush.msra.mxu0 %v3787
    %3851 = vmatpush.msra.mxu0 %v3786
    %3852 = vmatpush.msra.mxu0 %v3785
    %3853 = vmatpush.msra.mxu0 %v3784
    %3854 = vmatpush.msra.mxu0 %v3783
    %3855 = vmatpush.msra.mxu0 %v3782
    %3856 = vmatpush.msra.mxu0 %v3781
    %3857 = vmatpush.msra.mxu0 %v3780
    %3858 = vmatpush.msra.mxu0 %v3779
    %3859 = vmatmul.f32.gmra.mxu0 %v3771
    %v3860 = vpop.f32.mrf.mxu0
    %v3861 = vadd.f32 0.0, %v3860
    %3862 = vmatmul.f32.gmra.mxu0 %v3775
    %v3863 = vpop.f32.mrf.mxu0
    %v3864 = vadd.f32 0.0, %v3863
    %3865 = vdwg.mxu0
    %3866 = vmatpush.msra.mxu0 %v3810
    %3867 = vmatpush.msra.mxu0 %v3809
    %3868 = vmatpush.msra.mxu0 %v3808
    %3869 = vmatpush.msra.mxu0 %v3807
    %3870 = vmatpush.msra.mxu0 %v3806
    %3871 = vmatpush.msra.mxu0 %v3805
    %3872 = vmatpush.msra.mxu0 %v3804
    %3873 = vmatpush.msra.mxu0 %v3803
    %3874 = vmatpush.msra.mxu0 %v3802
    %3875 = vmatpush.msra.mxu0 %v3801
    %3876 = vmatpush.msra.mxu0 %v3800
    %3877 = vmatpush.msra.mxu0 %v3799
    %3878 = vmatpush.msra.mxu0 %v3798
    %3879 = vmatpush.msra.mxu0 %v3797
    %3880 = vmatpush.msra.mxu0 %v3796
    %3881 = vmatpush.msra.mxu0 %v3795
    %3882 = vmatmul.f32.gmra.mxu0 %v3772
    %v3883 = vpop.f32.mrf.mxu0
    %v3884 = vadd.f32 %v3861, %v3883
    %3885 = vmatmul.f32.gmra.mxu0 %v3776
    %v3886 = vpop.f32.mrf.mxu0
    %v3887 = vadd.f32 %v3864, %v3886
    %3888 = vdwg.mxu0
    %3889 = vmatpush.msra.mxu0 %v3826
    %3890 = vmatpush.msra.mxu0 %v3825
    %3891 = vmatpush.msra.mxu0 %v3824
    %3892 = vmatpush.msra.mxu0 %v3823
    %3893 = vmatpush.msra.mxu0 %v3822
    %3894 = vmatpush.msra.mxu0 %v3821
    %3895 = vmatpush.msra.mxu0 %v3820
    %3896 = vmatpush.msra.mxu0 %v3819
    %3897 = vmatpush.msra.mxu0 %v3818
    %3898 = vmatpush.msra.mxu0 %v3817
    %3899 = vmatpush.msra.mxu0 %v3816
    %3900 = vmatpush.msra.mxu0 %v3815
    %3901 = vmatpush.msra.mxu0 %v3814
    %3902 = vmatpush.msra.mxu0 %v3813
    %3903 = vmatpush.msra.mxu0 %v3812
    %3904 = vmatpush.msra.mxu0 %v3811
    %3905 = vmatmul.f32.gmra.mxu0 %v3773
    %v3906 = vpop.f32.mrf.mxu0
    %v3907 = vadd.f32 %v3884, %v3906
    %3908 = vmatmul.f32.gmra.mxu0 %v3777
    %v3909 = vpop.f32.mrf.mxu0
    %v3910 = vadd.f32 %v3887, %v3909
    %3911 = vdwg.mxu0
    %3912 = vmatpush.msra.mxu0 %v3842
    %3913 = vmatpush.msra.mxu0 %v3841
    %3914 = vmatpush.msra.mxu0 %v3840
    %3915 = vmatpush.msra.mxu0 %v3839
    %3916 = vmatpush.msra.mxu0 %v3838
    %3917 = vmatpush.msra.mxu0 %v3837
    %3918 = vmatpush.msra.mxu0 %v3836
    %3919 = vmatpush.msra.mxu0 %v3835
    %3920 = vmatpush.msra.mxu0 %v3834
    %3921 = vmatpush.msra.mxu0 %v3833
    %3922 = vmatpush.msra.mxu0 %v3832
    %3923 = vmatpush.msra.mxu0 %v3831
    %3924 = vmatpush.msra.mxu0 %v3830
    %3925 = vmatpush.msra.mxu0 %v3829
    %3926 = vmatpush.msra.mxu0 %v3828
    %3927 = vmatpush.msra.mxu0 %v3827
    %3928 = vmatmul.f32.gmra.mxu0 %v3774
    %v3929 = vpop.f32.mrf.mxu0
    %v3930 = vadd.f32 %v3907, %v3929
    %3931 = vmatmul.f32.gmra.mxu0 %v3778
    %v3932 = vpop.f32.mrf.mxu0
    %v3933 = vadd.f32 %v3910, %v3932
    %3934 = vdwg.mxu0
    %3935 = vst.msk [vmem:[%s14] sm:$0xff] %vm993, %v3930
    %vm3936 = vcmask 9216
    %3937 = vst.msk [vmem:[%s14 + $0x8] sm:$0x3] %vm3936, %v3933
    // Predicated region
    $region62: #{multires_forward.1} parent=1 // pred_check
      _
    $region63: #{multires_forward.1} parent=1 // pred_check_branch
      %3939 = sbr.rel (0) target = $region65
    $region64: #{multires_forward.1} parent=1 // pred_region
      _
    $region65: #{multires_forward.1} parent=1 // pred_fallthru
      _
    // Predicated region
    $region66: #{multires_forward.1} parent=1 // pred_check
      _
    $region67: #{multires_forward.1} parent=1 // pred_check_branch
      %3941 = sbr.rel (0) target = $region69
    $region68: #{multires_forward.1} parent=1 // pred_region
      _
    $region69: #{multires_forward.1} parent=1 // pred_fallthru
      _
    %3942 = vsyncpa [#allocation3], 1

</llo_original>
